<compile_context>
chip_gen: v6e
topology: v6e:2x2x1
jax: 0.10.0
libtpu: 0.0.40
codegen_flags: <defaults>
</compile_context>

<pallas_src>
import math

import jax
import jax.numpy as jnp
from jax.experimental import pallas as pl
from jax.experimental.pallas import tpu as pltpu

VMEM = pl.BlockSpec(memory_space=pltpu.MemorySpace.VMEM)
NEG_INF = -1e30


# ----------------------------------------------------------------------------
# Fused forward kernel
# ----------------------------------------------------------------------------
def _fused_forward_kernel(
    x_ref, peb_ref, hsel_ref, bias_ref, onesblk_ref,
    wup_ref,
    wqkv_ref, bqkv_ref, wo_ref, bo_ref,
    w1_ref, b1_ref, w2_ref, b2_ref,
    g1_ref, be1_ref, g2_ref, be2_ref,
    wcat_ref, dnmask_ref, lanesum_ref, bdn_ref,
    o_ref,
):
    f32, bf16 = jnp.float32, jnp.bfloat16
    eps = 1e-5

    BS = x_ref.shape[0]            # BS = B * C, rows = (batch, channel)
    D = wup_ref.shape[1]
    L = wqkv_ref.shape[0]
    H = hsel_ref.shape[0]
    C = wcat_ref.shape[1] // D     # sequence length == num EEG channels
    B = BS // C

    def layer_norm(v, g, be):
        mu = jnp.mean(v, axis=-1, keepdims=True)
        var = jnp.mean((v - mu) ** 2, axis=-1, keepdims=True)
        return (v - mu) * jax.lax.rsqrt(var + eps) * g + be

    # ---- dim_up; (bias + positional encoding) pre-folded into peb host-side ----
    h = jnp.dot(x_ref[...].astype(bf16), wup_ref[...],
                preferred_element_type=f32) + peb_ref[...]          # (BS, D) f32

    hsel = hsel_ref[...]        # (H, D)     0/1: lane d belongs to head h
    attn_bias = bias_ref[...]   # (BS, H*BS) 0 / -1e30 block-diagonal batch mask
    onesblk = onesblk_ref[...]  # (H*BS, D)  bf16: onesblk[h*BS+m, d] = hsel[h, d]

    # ---- transformer encoder layers (post-norm, ReLU, eval mode) ----
    for l in range(L):          # L is tiny & static -> unrolled
        qkv = jnp.dot(h.astype(bf16), wqkv_ref[l],
                      preferred_element_type=f32) + bqkv_ref[l]     # (BS, 3D)
        q = qkv[:, :D]          # 1/sqrt(Dh) already folded into Wq / bq
        k = qkv[:, D:2 * D]
        v = qkv[:, 2 * D:]

        # block-diagonal K / V: row (h*BS + m) keeps only head-h lanes of k/v[m]
        kb = (hsel[:, None, :] * k[None, :, :]).reshape(H * BS, D).astype(bf16)
        vb = (hsel[:, None, :] * v[None, :, :]).reshape(H * BS, D).astype(bf16)

        # lane-dense per-head scores: ONE bf16 MXU push -> (BS, H*BS) = (16,128)
        sc = jax.lax.dot_general(
            q.astype(bf16), kb, (((1,), (1,)), ((), ())),
            preferred_element_type=f32) + attn_bias
        sc = sc - jnp.max(sc, axis=-1, keepdims=True)
        p = jnp.exp(sc).astype(bf16)            # unnormalised; cross-batch -> 0

        # context and per-head softmax denominator via two bf16 MXU matmuls
        ctx = jnp.dot(p, vb, preferred_element_type=f32)        # (BS, D)
        den = jnp.dot(p, onesblk, preferred_element_type=f32)   # (BS, D)
        ctx = ctx * pl.reciprocal(den, approx=True)

        attn = jnp.dot(ctx.astype(bf16), wo_ref[l],
                       preferred_element_type=f32) + bo_ref[l]

        h1 = layer_norm(h + attn, g1_ref[l], be1_ref[l])

        ff = jnp.dot(h1.astype(bf16), w1_ref[l],
                     preferred_element_type=f32) + b1_ref[l]
        ff = jnp.maximum(ff, 0.0)
        ff = jnp.dot(ff.astype(bf16), w2_ref[l],
                     preferred_element_type=f32) + b2_ref[l]

        h = layer_norm(h1 + ff, g2_ref[l], be2_ref[l])

    # ---- dim_down: one lane-dense (BS, C*D) matmul + diag-block mask + reduce ----
    g = jnp.dot(h.astype(bf16), wcat_ref[...],
                preferred_element_type=f32)                     # (BS, C*D)
    g = g * dnmask_ref[...]                                     # keep own channel block
    s = jnp.sum(g.reshape(B, C, C * D), axis=1)                 # (B, C*D)
    o_ref[...] = jnp.dot(s, lanesum_ref[...],
                         preferred_element_type=f32) + bdn_ref[...]


# ----------------------------------------------------------------------------
# Parameter / constant construction (deterministic, synthetic, host-side)
# ----------------------------------------------------------------------------
def make_sinusoidal_pe(max_len, d_model):
    position = jnp.arange(max_len, dtype=jnp.float32)[:, None]
    div_term = jnp.exp(
        jnp.arange(0, d_model, 2, dtype=jnp.float32) * -(math.log(10000.0) / d_model)
    )
    pe_sin = jnp.sin(position * div_term)
    pe_cos = jnp.cos(position * div_term)
    return jnp.stack([pe_sin, pe_cos], axis=-1).reshape(max_len, d_model)


def make_params(key, feat_dim, num_channel, hidden, num_layers, ff_dim, num_heads):
    f32, bf16 = jnp.float32, jnp.bfloat16

    def w_init(k, shape, fan_in):
        return jax.random.normal(k, shape, f32) / math.sqrt(fan_in)

    scale = 1.0 / math.sqrt(hidden // num_heads)
    keys = jax.random.split(key, 3 + num_layers)

    names = ("wqkv", "bqkv", "wo", "bo", "w1", "b1", "w2", "b2",
             "g1", "be1", "g2", "be2")
    layers = {n: [] for n in names}
    for li in range(num_layers):
        lk = jax.random.split(keys[3 + li], 4)
        wqkv = w_init(lk[0], (hidden, 3 * hidden), hidden)
        wqkv = wqkv.at[:, :hidden].multiply(scale)       # fold 1/sqrt(Dh) into Q
        bqkv = jnp.zeros((1, 3 * hidden), f32)
        bqkv = bqkv.at[:, :hidden].multiply(scale)
        layers["wqkv"].append(wqkv)
        layers["bqkv"].append(bqkv)
        layers["wo"].append(w_init(lk[1], (hidden, hidden), hidden))
        layers["bo"].append(jnp.zeros((1, hidden), f32))
        layers["w1"].append(w_init(lk[2], (hidden, ff_dim), hidden))
        layers["b1"].append(jnp.zeros((1, ff_dim), f32))
        layers["w2"].append(w_init(lk[3], (ff_dim, hidden), ff_dim))
        layers["b2"].append(jnp.zeros((1, hidden), f32))
        layers["g1"].append(jnp.ones((1, hidden), f32))
        layers["be1"].append(jnp.zeros((1, hidden), f32))
        layers["g2"].append(jnp.ones((1, hidden), f32))
        layers["be2"].append(jnp.zeros((1, hidden), f32))

    stacked = {n: jnp.stack(v, axis=0) for n, v in layers.items()}
    for n in ("wqkv", "wo", "w1", "w2"):
        stacked[n] = stacked[n].astype(bf16)

    # dim_down Linear(C*D -> D): W_t is (C*D, D); kernel consumes the lane-dense
    # recomposition Wcat[d, c*D + j] = W_t[c*D + d, j]  (shape (D, C*D)).
    wdn_t = w_init(keys[1], (num_channel * hidden, hidden), num_channel * hidden)
    wcat = wdn_t.reshape(num_channel, hidden, hidden).transpose(1, 0, 2)
    wcat = wcat.reshape(hidden, num_channel * hidden).astype(bf16)

    return {
        "wup": w_init(keys[0], (feat_dim, hidden), feat_dim).astype(bf16),
        "dim_up_b": jnp.zeros((1, hidden), f32),
        "pe": make_sinusoidal_pe(64, hidden),
        "wcat": wcat,
        "dim_down_b": jnp.zeros((1, hidden), f32),
        **stacked,
    }


def make_consts(batch, num_channel, hidden, num_heads, pe, dim_up_b):
    """Host-precomputed layout constants (head selector, masks, PE rows)."""
    f32, bf16 = jnp.float32, jnp.bfloat16
    B, C, D, H = batch, num_channel, hidden, num_heads
    BS = B * C
    dh = D // H
    d_idx = jnp.arange(D)
    hsel = (d_idx[None, :] // dh == jnp.arange(H)[:, None]).astype(f32)       # (H, D)
    onesblk = jnp.repeat(hsel, BS, axis=0).astype(bf16)                       # (H*BS, D)
    r = jnp.arange(BS)
    same = (r[:, None] // C) == (r[None, :] // C)
    attn_bias = jnp.tile(jnp.where(same, 0.0, NEG_INF).astype(f32), (1, H))   # (BS, H*BS)
    col_c = jnp.arange(C * D) // D
    dnmask = (col_c[None, :] == (r % C)[:, None]).astype(f32)                 # (BS, C*D)
    lanesum = jnp.tile(jnp.eye(D, dtype=f32), (C, 1))                         # (C*D, D)
    peb = jnp.tile(pe[:C], (B, 1)) + dim_up_b                                 # (BS, D)
    return {"peb": peb, "hsel": hsel, "attn_bias": attn_bias,
            "onesblk": onesblk, "dnmask": dnmask, "lanesum": lanesum}


# ----------------------------------------------------------------------------
# Full forward = dim_up -> PE -> TransformerEncoder(num_layer) -> dim_down
# (single fused, no-grid, fully-VMEM-resident pallas_call)
# ----------------------------------------------------------------------------
@jax.jit
def forward(x, params, consts):
    B, C, F = x.shape
    D = params["wup"].shape[1]
    x2d = x.reshape(B * C, F)
    # TODO(synk): on v7x, a grid=(B,) parallel split (one batch element per
    # TensorCore, which also removes the batch mask) becomes worthwhile for
    # larger B; at B=2 the per-step grid overhead outweighs the gain.
    return pl.pallas_call(
        _fused_forward_kernel,
        out_shape=jax.ShapeDtypeStruct((B, D), jnp.float32),
        in_specs=[VMEM] * 22,
        out_specs=VMEM,
    )(
        x2d, consts["peb"], consts["hsel"], consts["attn_bias"], consts["onesblk"],
        params["wup"],
        params["wqkv"], params["bqkv"], params["wo"], params["bo"],
        params["w1"], params["b1"], params["w2"], params["b2"],
        params["g1"], params["be1"], params["g2"], params["be2"],
        params["wcat"], consts["dnmask"], consts["lanesum"], params["dim_down_b"],
    )


# ----------------------------------------------------------------------------
# Pure-JAX reference (f32 activations, same bf16-rounded weights)
# ----------------------------------------------------------------------------
def reference_forward(x, params, consts):
    f32 = jnp.float32
    B, C, F = x.shape
    D = params["wup"].shape[1]
    H = consts["hsel"].shape[0]
    Dh = D // H
    L = params["wqkv"].shape[0]
    eps = 1e-5

    def ln(v, g, b):
        mu = jnp.mean(v, axis=-1, keepdims=True)
        var = jnp.mean((v - mu) ** 2, axis=-1, keepdims=True)
        return (v - mu) / jnp.sqrt(var + eps) * g + b

    h = x.reshape(B * C, F) @ params["wup"].astype(f32) + consts["peb"]
    for l in range(L):
        qkv = h @ params["wqkv"][l].astype(f32) + params["bqkv"][l]
        q, k, v = qkv[:, :D], qkv[:, D:2 * D], qkv[:, 2 * D:]
        q = q.reshape(B, C, H, Dh).transpose(0, 2, 1, 3)
        k = k.reshape(B, C, H, Dh).transpose(0, 2, 1, 3)
        v = v.reshape(B, C, H, Dh).transpose(0, 2, 1, 3)
        sc = jnp.einsum("bhqd,bhkd->bhqk", q, k)      # scale pre-folded into Wq
        p = jax.nn.softmax(sc, axis=-1)
        ctx = jnp.einsum("bhqk,bhkd->bhqd", p, v)
        ctx = ctx.transpose(0, 2, 1, 3).reshape(B * C, D)
        attn = ctx @ params["wo"][l].astype(f32) + params["bo"][l]
        h = ln(h + attn, params["g1"][l], params["be1"][l])
        ff = jnp.maximum(h @ params["w1"][l].astype(f32) + params["b1"][l], 0.0)
        ff = ff @ params["w2"][l].astype(f32) + params["b2"][l]
        h = ln(h + ff, params["g2"][l], params["be2"][l])
    wcat3 = params["wcat"].astype(f32).reshape(D, C, D)
    h3 = h.reshape(B, C, D)
    return jnp.einsum("bcd,dcj->bj", h3, wcat3) + params["dim_down_b"]


# ----------------------------------------------------------------------------
if __name__ == "__main__":
    # args: EEG_channel=8, eeg_stat_channel_feat_dim=16, backbone_hidden=32,
    #       num_layer=2, positional_encoding=True, fusion_mothod='ATTEN'
    B, C, F, HID = 2, 8, 16, 32
    NUM_LAYERS, FF_DIM, NUM_HEADS = 2, 1024, 8

    x = jax.random.normal(jax.random.PRNGKey(0), (B, C, F), dtype=jnp.float32)
    params = make_params(jax.random.PRNGKey(42), F, C, HID,
                         NUM_LAYERS, FF_DIM, NUM_HEADS)
    consts = make_consts(B, C, HID, NUM_HEADS, params["pe"], params["dim_up_b"])

    out = forward(x, params, consts)
    out = jax.block_until_ready(out)
    assert out.shape == (B, HID)
    assert bool(jnp.all(jnp.isfinite(out)))

    ref = reference_forward(x, params, consts)
    assert float(jnp.max(jnp.abs(out - ref))) < 2e-1   # bf16-matmul tolerance

    print("KERNEL_OK")
</pallas_src>

<mosaic_0001>
module attributes {stable_mosaic.version = 11 : i64} {
  func.func @_fused_forward_kernel(%arg0: memref<16x16xf32, #tpu.memory_space<vmem>>, %arg1: memref<16x32xf32, #tpu.memory_space<vmem>>, %arg2: memref<8x32xf32, #tpu.memory_space<vmem>>, %arg3: memref<16x128xf32, #tpu.memory_space<vmem>>, %arg4: memref<128x32xbf16, #tpu.memory_space<vmem>>, %arg5: memref<16x32xbf16, #tpu.memory_space<vmem>>, %arg6: memref<2x32x96xbf16, #tpu.memory_space<vmem>>, %arg7: memref<2x1x96xf32, #tpu.memory_space<vmem>>, %arg8: memref<2x32x32xbf16, #tpu.memory_space<vmem>>, %arg9: memref<2x1x32xf32, #tpu.memory_space<vmem>>, %arg10: memref<2x32x1024xbf16, #tpu.memory_space<vmem>>, %arg11: memref<2x1x1024xf32, #tpu.memory_space<vmem>>, %arg12: memref<2x1024x32xbf16, #tpu.memory_space<vmem>>, %arg13: memref<2x1x32xf32, #tpu.memory_space<vmem>>, %arg14: memref<2x1x32xf32, #tpu.memory_space<vmem>>, %arg15: memref<2x1x32xf32, #tpu.memory_space<vmem>>, %arg16: memref<2x1x32xf32, #tpu.memory_space<vmem>>, %arg17: memref<2x1x32xf32, #tpu.memory_space<vmem>>, %arg18: memref<32x256xbf16, #tpu.memory_space<vmem>>, %arg19: memref<16x256xf32, #tpu.memory_space<vmem>>, %arg20: memref<256x32xf32, #tpu.memory_space<vmem>>, %arg21: memref<1x32xf32, #tpu.memory_space<vmem>>, %arg22: memref<2x32xf32, #tpu.memory_space<vmem>>) attributes {dimension_semantics = [], scalar_prefetch = 0 : i64, scratch_operands = 0 : i64, tpu.core_type = #tpu.core_type<tc>} {
    %c0 = arith.constant 0 : index
    %c0_0 = arith.constant 0 : index
    %0 = vector.load %arg0[%c0, %c0_0] : memref<16x16xf32, #tpu.memory_space<vmem>>, vector<16x16xf32>
    %1 = arith.truncf %0 : vector<16x16xf32> to vector<16x16xbf16>
    %c0_1 = arith.constant 0 : index
    %c0_2 = arith.constant 0 : index
    %2 = vector.load %arg5[%c0_1, %c0_2] : memref<16x32xbf16, #tpu.memory_space<vmem>>, vector<16x32xbf16>
    %cst = arith.constant dense<0.000000e+00> : vector<16x32xf32>
    %3 = tpu.matmul %1, %2, %cst {dimension_numbers = #tpu.dot_dimension_numbers<[1], [0], [0], [1], [0, 0, 1, 1], [], []>} : vector<16x16xbf16>, vector<16x32xbf16>, vector<16x32xf32> -> vector<16x32xf32>
    %c0_3 = arith.constant 0 : index
    %c0_4 = arith.constant 0 : index
    %4 = vector.load %arg1[%c0_3, %c0_4] : memref<16x32xf32, #tpu.memory_space<vmem>>, vector<16x32xf32>
    %5 = arith.addf %3, %4 : vector<16x32xf32>
    %c0_5 = arith.constant 0 : index
    %c0_6 = arith.constant 0 : index
    %6 = vector.load %arg2[%c0_5, %c0_6] : memref<8x32xf32, #tpu.memory_space<vmem>>, vector<8x32xf32>
    %c0_7 = arith.constant 0 : index
    %c0_8 = arith.constant 0 : index
    %7 = vector.load %arg3[%c0_7, %c0_8] : memref<16x128xf32, #tpu.memory_space<vmem>>, vector<16x128xf32>
    %c0_9 = arith.constant 0 : index
    %c0_10 = arith.constant 0 : index
    %8 = vector.load %arg4[%c0_9, %c0_10] : memref<128x32xbf16, #tpu.memory_space<vmem>>, vector<128x32xbf16>
    %9 = arith.truncf %5 : vector<16x32xf32> to vector<16x32xbf16>
    %c0_11 = arith.constant 0 : index
    %c0_12 = arith.constant 0 : index
    %c0_13 = arith.constant 0 : index
    %10 = vector.load %arg6[%c0_11, %c0_12, %c0_13] : memref<2x32x96xbf16, #tpu.memory_space<vmem>>, vector<1x32x96xbf16>
    %11 = vector.shape_cast %10 : vector<1x32x96xbf16> to vector<32x96xbf16>
    %cst_14 = arith.constant dense<0.000000e+00> : vector<16x96xf32>
    %12 = tpu.matmul %9, %11, %cst_14 {dimension_numbers = #tpu.dot_dimension_numbers<[1], [0], [0], [1], [0, 0, 1, 1], [], []>} : vector<16x32xbf16>, vector<32x96xbf16>, vector<16x96xf32> -> vector<16x96xf32>
    %c0_15 = arith.constant 0 : index
    %c0_16 = arith.constant 0 : index
    %c0_17 = arith.constant 0 : index
    %13 = vector.load %arg7[%c0_15, %c0_16, %c0_17] : memref<2x1x96xf32, #tpu.memory_space<vmem>>, vector<1x1x96xf32>
    %14 = vector.shape_cast %13 : vector<1x1x96xf32> to vector<1x96xf32>
    %15 = vector.broadcast %14 : vector<1x96xf32> to vector<16x96xf32>
    %16 = arith.addf %12, %15 : vector<16x96xf32>
    %17 = vector.extract_strided_slice %16 {offsets = [0, 0], sizes = [16, 32], strides = [1, 1]} : vector<16x96xf32> to vector<16x32xf32>
    %18 = vector.extract_strided_slice %16 {offsets = [0, 32], sizes = [16, 32], strides = [1, 1]} : vector<16x96xf32> to vector<16x32xf32>
    %19 = vector.extract_strided_slice %16 {offsets = [0, 64], sizes = [16, 32], strides = [1, 1]} : vector<16x96xf32> to vector<16x32xf32>
    %20 = vector.shape_cast %6 : vector<8x32xf32> to vector<8x1x32xf32>
    %21 = vector.shape_cast %18 : vector<16x32xf32> to vector<1x16x32xf32>
    %22 = vector.broadcast %20 : vector<8x1x32xf32> to vector<8x16x32xf32>
    %23 = vector.broadcast %21 : vector<1x16x32xf32> to vector<8x16x32xf32>
    %24 = arith.mulf %22, %23 : vector<8x16x32xf32>
    %25 = vector.shape_cast %24 : vector<8x16x32xf32> to vector<128x32xf32>
    %26 = arith.truncf %25 : vector<128x32xf32> to vector<128x32xbf16>
    %27 = vector.shape_cast %6 : vector<8x32xf32> to vector<8x1x32xf32>
    %28 = vector.shape_cast %19 : vector<16x32xf32> to vector<1x16x32xf32>
    %29 = vector.broadcast %27 : vector<8x1x32xf32> to vector<8x16x32xf32>
    %30 = vector.broadcast %28 : vector<1x16x32xf32> to vector<8x16x32xf32>
    %31 = arith.mulf %29, %30 : vector<8x16x32xf32>
    %32 = vector.shape_cast %31 : vector<8x16x32xf32> to vector<128x32xf32>
    %33 = arith.truncf %32 : vector<128x32xf32> to vector<128x32xbf16>
    %34 = arith.truncf %17 : vector<16x32xf32> to vector<16x32xbf16>
    %cst_18 = arith.constant dense<0.000000e+00> : vector<16x128xf32>
    %35 = tpu.matmul %34, %26, %cst_18 {dimension_numbers = #tpu.dot_dimension_numbers<[1], [1], [0], [0], [0, 0, 1, 0], [], []>} : vector<16x32xbf16>, vector<128x32xbf16>, vector<16x128xf32> -> vector<16x128xf32>
    %36 = arith.addf %35, %7 : vector<16x128xf32>
    %cst_19 = arith.constant dense<0xFF800000> : vector<16xf32>
    %37 = vector.multi_reduction <maximumf>, %36, %cst_19 [1] : vector<16x128xf32> to vector<16xf32>
    %38 = vector.shape_cast %37 : vector<16xf32> to vector<16x1xf32>
    %39 = vector.broadcast %38 : vector<16x1xf32> to vector<16x128xf32>
    %40 = arith.subf %36, %39 : vector<16x128xf32>
    %41 = math.exp %40 : vector<16x128xf32>
    %42 = arith.truncf %41 : vector<16x128xf32> to vector<16x128xbf16>
    %cst_20 = arith.constant dense<0.000000e+00> : vector<16x32xf32>
    %43 = tpu.matmul %42, %33, %cst_20 {dimension_numbers = #tpu.dot_dimension_numbers<[1], [0], [0], [1], [0, 0, 1, 1], [], []>} : vector<16x128xbf16>, vector<128x32xbf16>, vector<16x32xf32> -> vector<16x32xf32>
    %cst_21 = arith.constant dense<0.000000e+00> : vector<16x32xf32>
    %44 = tpu.matmul %42, %8, %cst_21 {dimension_numbers = #tpu.dot_dimension_numbers<[1], [0], [0], [1], [0, 0, 1, 1], [], []>} : vector<16x128xbf16>, vector<128x32xbf16>, vector<16x32xf32> -> vector<16x32xf32>
    %45 = tpu.reciprocal %44 {approx = true} : vector<16x32xf32> -> vector<16x32xf32>
    %46 = arith.mulf %43, %45 : vector<16x32xf32>
    %47 = arith.truncf %46 : vector<16x32xf32> to vector<16x32xbf16>
    %c0_22 = arith.constant 0 : index
    %c0_23 = arith.constant 0 : index
    %c0_24 = arith.constant 0 : index
    %48 = vector.load %arg8[%c0_22, %c0_23, %c0_24] : memref<2x32x32xbf16, #tpu.memory_space<vmem>>, vector<1x32x32xbf16>
    %49 = vector.shape_cast %48 : vector<1x32x32xbf16> to vector<32x32xbf16>
    %cst_25 = arith.constant dense<0.000000e+00> : vector<16x32xf32>
    %50 = tpu.matmul %47, %49, %cst_25 {dimension_numbers = #tpu.dot_dimension_numbers<[1], [0], [0], [1], [0, 0, 1, 1], [], []>} : vector<16x32xbf16>, vector<32x32xbf16>, vector<16x32xf32> -> vector<16x32xf32>
    %c0_26 = arith.constant 0 : index
    %c0_27 = arith.constant 0 : index
    %c0_28 = arith.constant 0 : index
    %51 = vector.load %arg9[%c0_26, %c0_27, %c0_28] : memref<2x1x32xf32, #tpu.memory_space<vmem>>, vector<1x1x32xf32>
    %52 = vector.shape_cast %51 : vector<1x1x32xf32> to vector<1x32xf32>
    %53 = vector.broadcast %52 : vector<1x32xf32> to vector<16x32xf32>
    %54 = arith.addf %50, %53 : vector<16x32xf32>
    %55 = arith.addf %5, %54 : vector<16x32xf32>
    %c0_29 = arith.constant 0 : index
    %c0_30 = arith.constant 0 : index
    %c0_31 = arith.constant 0 : index
    %56 = vector.load %arg14[%c0_29, %c0_30, %c0_31] : memref<2x1x32xf32, #tpu.memory_space<vmem>>, vector<1x1x32xf32>
    %57 = vector.shape_cast %56 : vector<1x1x32xf32> to vector<1x32xf32>
    %c0_32 = arith.constant 0 : index
    %c0_33 = arith.constant 0 : index
    %c0_34 = arith.constant 0 : index
    %58 = vector.load %arg15[%c0_32, %c0_33, %c0_34] : memref<2x1x32xf32, #tpu.memory_space<vmem>>, vector<1x1x32xf32>
    %59 = vector.shape_cast %58 : vector<1x1x32xf32> to vector<1x32xf32>
    %cst_35 = arith.constant dense<0.000000e+00> : vector<16xf32>
    %60 = vector.multi_reduction <add>, %55, %cst_35 [1] : vector<16x32xf32> to vector<16xf32>
    %61 = vector.shape_cast %60 : vector<16xf32> to vector<16x1xf32>
    %cst_36 = arith.constant 3.200000e+01 : f32
    %62 = vector.broadcast %cst_36 : f32 to vector<16x1xf32>
    %63 = arith.divf %61, %62 : vector<16x1xf32>
    %64 = vector.broadcast %63 : vector<16x1xf32> to vector<16x32xf32>
    %65 = arith.subf %55, %64 : vector<16x32xf32>
    %66 = arith.mulf %65, %65 : vector<16x32xf32>
    %cst_37 = arith.constant dense<0.000000e+00> : vector<16xf32>
    %67 = vector.multi_reduction <add>, %66, %cst_37 [1] : vector<16x32xf32> to vector<16xf32>
    %68 = vector.shape_cast %67 : vector<16xf32> to vector<16x1xf32>
    %cst_38 = arith.constant 3.200000e+01 : f32
    %69 = vector.broadcast %cst_38 : f32 to vector<16x1xf32>
    %70 = arith.divf %68, %69 : vector<16x1xf32>
    %71 = vector.broadcast %63 : vector<16x1xf32> to vector<16x32xf32>
    %72 = arith.subf %55, %71 : vector<16x32xf32>
    %cst_39 = arith.constant 9.99999974E-6 : f32
    %73 = vector.broadcast %cst_39 : f32 to vector<16x1xf32>
    %74 = arith.addf %70, %73 : vector<16x1xf32>
    %75 = math.rsqrt %74 : vector<16x1xf32>
    %76 = vector.broadcast %75 : vector<16x1xf32> to vector<16x32xf32>
    %77 = arith.mulf %72, %76 : vector<16x32xf32>
    %78 = vector.broadcast %57 : vector<1x32xf32> to vector<16x32xf32>
    %79 = arith.mulf %77, %78 : vector<16x32xf32>
    %80 = vector.broadcast %59 : vector<1x32xf32> to vector<16x32xf32>
    %81 = arith.addf %79, %80 : vector<16x32xf32>
    %82 = arith.truncf %81 : vector<16x32xf32> to vector<16x32xbf16>
    %c0_40 = arith.constant 0 : index
    %c0_41 = arith.constant 0 : index
    %c0_42 = arith.constant 0 : index
    %83 = vector.load %arg10[%c0_40, %c0_41, %c0_42] : memref<2x32x1024xbf16, #tpu.memory_space<vmem>>, vector<1x32x1024xbf16>
    %84 = vector.shape_cast %83 : vector<1x32x1024xbf16> to vector<32x1024xbf16>
    %cst_43 = arith.constant dense<0.000000e+00> : vector<16x1024xf32>
    %85 = tpu.matmul %82, %84, %cst_43 {dimension_numbers = #tpu.dot_dimension_numbers<[1], [0], [0], [1], [0, 0, 1, 1], [], []>} : vector<16x32xbf16>, vector<32x1024xbf16>, vector<16x1024xf32> -> vector<16x1024xf32>
    %c0_44 = arith.constant 0 : index
    %c0_45 = arith.constant 0 : index
    %c0_46 = arith.constant 0 : index
    %86 = vector.load %arg11[%c0_44, %c0_45, %c0_46] : memref<2x1x1024xf32, #tpu.memory_space<vmem>>, vector<1x1x1024xf32>
    %87 = vector.shape_cast %86 : vector<1x1x1024xf32> to vector<1x1024xf32>
    %88 = vector.broadcast %87 : vector<1x1024xf32> to vector<16x1024xf32>
    %89 = arith.addf %85, %88 : vector<16x1024xf32>
    %cst_47 = arith.constant 0.000000e+00 : f32
    %90 = vector.broadcast %cst_47 : f32 to vector<16x1024xf32>
    %91 = arith.maximumf %89, %90 : vector<16x1024xf32>
    %92 = arith.truncf %91 : vector<16x1024xf32> to vector<16x1024xbf16>
    %c0_48 = arith.constant 0 : index
    %c0_49 = arith.constant 0 : index
    %c0_50 = arith.constant 0 : index
    %93 = vector.load %arg12[%c0_48, %c0_49, %c0_50] : memref<2x1024x32xbf16, #tpu.memory_space<vmem>>, vector<1x1024x32xbf16>
    %94 = vector.shape_cast %93 : vector<1x1024x32xbf16> to vector<1024x32xbf16>
    %cst_51 = arith.constant dense<0.000000e+00> : vector<16x32xf32>
    %95 = tpu.matmul %92, %94, %cst_51 {dimension_numbers = #tpu.dot_dimension_numbers<[1], [0], [0], [1], [0, 0, 1, 1], [], []>} : vector<16x1024xbf16>, vector<1024x32xbf16>, vector<16x32xf32> -> vector<16x32xf32>
    %c0_52 = arith.constant 0 : index
    %c0_53 = arith.constant 0 : index
    %c0_54 = arith.constant 0 : index
    %96 = vector.load %arg13[%c0_52, %c0_53, %c0_54] : memref<2x1x32xf32, #tpu.memory_space<vmem>>, vector<1x1x32xf32>
    %97 = vector.shape_cast %96 : vector<1x1x32xf32> to vector<1x32xf32>
    %98 = vector.broadcast %97 : vector<1x32xf32> to vector<16x32xf32>
    %99 = arith.addf %95, %98 : vector<16x32xf32>
    %100 = arith.addf %81, %99 : vector<16x32xf32>
    %c0_55 = arith.constant 0 : index
    %c0_56 = arith.constant 0 : index
    %c0_57 = arith.constant 0 : index
    %101 = vector.load %arg16[%c0_55, %c0_56, %c0_57] : memref<2x1x32xf32, #tpu.memory_space<vmem>>, vector<1x1x32xf32>
    %102 = vector.shape_cast %101 : vector<1x1x32xf32> to vector<1x32xf32>
    %c0_58 = arith.constant 0 : index
    %c0_59 = arith.constant 0 : index
    %c0_60 = arith.constant 0 : index
    %103 = vector.load %arg17[%c0_58, %c0_59, %c0_60] : memref<2x1x32xf32, #tpu.memory_space<vmem>>, vector<1x1x32xf32>
    %104 = vector.shape_cast %103 : vector<1x1x32xf32> to vector<1x32xf32>
    %cst_61 = arith.constant dense<0.000000e+00> : vector<16xf32>
    %105 = vector.multi_reduction <add>, %100, %cst_61 [1] : vector<16x32xf32> to vector<16xf32>
    %106 = vector.shape_cast %105 : vector<16xf32> to vector<16x1xf32>
    %cst_62 = arith.constant 3.200000e+01 : f32
    %107 = vector.broadcast %cst_62 : f32 to vector<16x1xf32>
    %108 = arith.divf %106, %107 : vector<16x1xf32>
    %109 = vector.broadcast %108 : vector<16x1xf32> to vector<16x32xf32>
    %110 = arith.subf %100, %109 : vector<16x32xf32>
    %111 = arith.mulf %110, %110 : vector<16x32xf32>
    %cst_63 = arith.constant dense<0.000000e+00> : vector<16xf32>
    %112 = vector.multi_reduction <add>, %111, %cst_63 [1] : vector<16x32xf32> to vector<16xf32>
    %113 = vector.shape_cast %112 : vector<16xf32> to vector<16x1xf32>
    %cst_64 = arith.constant 3.200000e+01 : f32
    %114 = vector.broadcast %cst_64 : f32 to vector<16x1xf32>
    %115 = arith.divf %113, %114 : vector<16x1xf32>
    %116 = vector.broadcast %108 : vector<16x1xf32> to vector<16x32xf32>
    %117 = arith.subf %100, %116 : vector<16x32xf32>
    %cst_65 = arith.constant 9.99999974E-6 : f32
    %118 = vector.broadcast %cst_65 : f32 to vector<16x1xf32>
    %119 = arith.addf %115, %118 : vector<16x1xf32>
    %120 = math.rsqrt %119 : vector<16x1xf32>
    %121 = vector.broadcast %120 : vector<16x1xf32> to vector<16x32xf32>
    %122 = arith.mulf %117, %121 : vector<16x32xf32>
    %123 = vector.broadcast %102 : vector<1x32xf32> to vector<16x32xf32>
    %124 = arith.mulf %122, %123 : vector<16x32xf32>
    %125 = vector.broadcast %104 : vector<1x32xf32> to vector<16x32xf32>
    %126 = arith.addf %124, %125 : vector<16x32xf32>
    %127 = arith.truncf %126 : vector<16x32xf32> to vector<16x32xbf16>
    %c1 = arith.constant 1 : index
    %c0_66 = arith.constant 0 : index
    %c0_67 = arith.constant 0 : index
    %128 = vector.load %arg6[%c1, %c0_66, %c0_67] : memref<2x32x96xbf16, #tpu.memory_space<vmem>>, vector<1x32x96xbf16>
    %129 = vector.shape_cast %128 : vector<1x32x96xbf16> to vector<32x96xbf16>
    %cst_68 = arith.constant dense<0.000000e+00> : vector<16x96xf32>
    %130 = tpu.matmul %127, %129, %cst_68 {dimension_numbers = #tpu.dot_dimension_numbers<[1], [0], [0], [1], [0, 0, 1, 1], [], []>} : vector<16x32xbf16>, vector<32x96xbf16>, vector<16x96xf32> -> vector<16x96xf32>
    %c1_69 = arith.constant 1 : index
    %c0_70 = arith.constant 0 : index
    %c0_71 = arith.constant 0 : index
    %131 = vector.load %arg7[%c1_69, %c0_70, %c0_71] : memref<2x1x96xf32, #tpu.memory_space<vmem>>, vector<1x1x96xf32>
    %132 = vector.shape_cast %131 : vector<1x1x96xf32> to vector<1x96xf32>
    %133 = vector.broadcast %132 : vector<1x96xf32> to vector<16x96xf32>
    %134 = arith.addf %130, %133 : vector<16x96xf32>
    %135 = vector.extract_strided_slice %134 {offsets = [0, 0], sizes = [16, 32], strides = [1, 1]} : vector<16x96xf32> to vector<16x32xf32>
    %136 = vector.extract_strided_slice %134 {offsets = [0, 32], sizes = [16, 32], strides = [1, 1]} : vector<16x96xf32> to vector<16x32xf32>
    %137 = vector.extract_strided_slice %134 {offsets = [0, 64], sizes = [16, 32], strides = [1, 1]} : vector<16x96xf32> to vector<16x32xf32>
    %138 = vector.shape_cast %6 : vector<8x32xf32> to vector<8x1x32xf32>
    %139 = vector.shape_cast %136 : vector<16x32xf32> to vector<1x16x32xf32>
    %140 = vector.broadcast %138 : vector<8x1x32xf32> to vector<8x16x32xf32>
    %141 = vector.broadcast %139 : vector<1x16x32xf32> to vector<8x16x32xf32>
    %142 = arith.mulf %140, %141 : vector<8x16x32xf32>
    %143 = vector.shape_cast %142 : vector<8x16x32xf32> to vector<128x32xf32>
    %144 = arith.truncf %143 : vector<128x32xf32> to vector<128x32xbf16>
    %145 = vector.shape_cast %6 : vector<8x32xf32> to vector<8x1x32xf32>
    %146 = vector.shape_cast %137 : vector<16x32xf32> to vector<1x16x32xf32>
    %147 = vector.broadcast %145 : vector<8x1x32xf32> to vector<8x16x32xf32>
    %148 = vector.broadcast %146 : vector<1x16x32xf32> to vector<8x16x32xf32>
    %149 = arith.mulf %147, %148 : vector<8x16x32xf32>
    %150 = vector.shape_cast %149 : vector<8x16x32xf32> to vector<128x32xf32>
    %151 = arith.truncf %150 : vector<128x32xf32> to vector<128x32xbf16>
    %152 = arith.truncf %135 : vector<16x32xf32> to vector<16x32xbf16>
    %cst_72 = arith.constant dense<0.000000e+00> : vector<16x128xf32>
    %153 = tpu.matmul %152, %144, %cst_72 {dimension_numbers = #tpu.dot_dimension_numbers<[1], [1], [0], [0], [0, 0, 1, 0], [], []>} : vector<16x32xbf16>, vector<128x32xbf16>, vector<16x128xf32> -> vector<16x128xf32>
    %154 = arith.addf %153, %7 : vector<16x128xf32>
    %cst_73 = arith.constant dense<0xFF800000> : vector<16xf32>
    %155 = vector.multi_reduction <maximumf>, %154, %cst_73 [1] : vector<16x128xf32> to vector<16xf32>
    %156 = vector.shape_cast %155 : vector<16xf32> to vector<16x1xf32>
    %157 = vector.broadcast %156 : vector<16x1xf32> to vector<16x128xf32>
    %158 = arith.subf %154, %157 : vector<16x128xf32>
    %159 = math.exp %158 : vector<16x128xf32>
    %160 = arith.truncf %159 : vector<16x128xf32> to vector<16x128xbf16>
    %cst_74 = arith.constant dense<0.000000e+00> : vector<16x32xf32>
    %161 = tpu.matmul %160, %151, %cst_74 {dimension_numbers = #tpu.dot_dimension_numbers<[1], [0], [0], [1], [0, 0, 1, 1], [], []>} : vector<16x128xbf16>, vector<128x32xbf16>, vector<16x32xf32> -> vector<16x32xf32>
    %cst_75 = arith.constant dense<0.000000e+00> : vector<16x32xf32>
    %162 = tpu.matmul %160, %8, %cst_75 {dimension_numbers = #tpu.dot_dimension_numbers<[1], [0], [0], [1], [0, 0, 1, 1], [], []>} : vector<16x128xbf16>, vector<128x32xbf16>, vector<16x32xf32> -> vector<16x32xf32>
    %163 = tpu.reciprocal %162 {approx = true} : vector<16x32xf32> -> vector<16x32xf32>
    %164 = arith.mulf %161, %163 : vector<16x32xf32>
    %165 = arith.truncf %164 : vector<16x32xf32> to vector<16x32xbf16>
    %c1_76 = arith.constant 1 : index
    %c0_77 = arith.constant 0 : index
    %c0_78 = arith.constant 0 : index
    %166 = vector.load %arg8[%c1_76, %c0_77, %c0_78] : memref<2x32x32xbf16, #tpu.memory_space<vmem>>, vector<1x32x32xbf16>
    %167 = vector.shape_cast %166 : vector<1x32x32xbf16> to vector<32x32xbf16>
    %cst_79 = arith.constant dense<0.000000e+00> : vector<16x32xf32>
    %168 = tpu.matmul %165, %167, %cst_79 {dimension_numbers = #tpu.dot_dimension_numbers<[1], [0], [0], [1], [0, 0, 1, 1], [], []>} : vector<16x32xbf16>, vector<32x32xbf16>, vector<16x32xf32> -> vector<16x32xf32>
    %c1_80 = arith.constant 1 : index
    %c0_81 = arith.constant 0 : index
    %c0_82 = arith.constant 0 : index
    %169 = vector.load %arg9[%c1_80, %c0_81, %c0_82] : memref<2x1x32xf32, #tpu.memory_space<vmem>>, vector<1x1x32xf32>
    %170 = vector.shape_cast %169 : vector<1x1x32xf32> to vector<1x32xf32>
    %171 = vector.broadcast %170 : vector<1x32xf32> to vector<16x32xf32>
    %172 = arith.addf %168, %171 : vector<16x32xf32>
    %173 = arith.addf %126, %172 : vector<16x32xf32>
    %c1_83 = arith.constant 1 : index
    %c0_84 = arith.constant 0 : index
    %c0_85 = arith.constant 0 : index
    %174 = vector.load %arg14[%c1_83, %c0_84, %c0_85] : memref<2x1x32xf32, #tpu.memory_space<vmem>>, vector<1x1x32xf32>
    %175 = vector.shape_cast %174 : vector<1x1x32xf32> to vector<1x32xf32>
    %c1_86 = arith.constant 1 : index
    %c0_87 = arith.constant 0 : index
    %c0_88 = arith.constant 0 : index
    %176 = vector.load %arg15[%c1_86, %c0_87, %c0_88] : memref<2x1x32xf32, #tpu.memory_space<vmem>>, vector<1x1x32xf32>
    %177 = vector.shape_cast %176 : vector<1x1x32xf32> to vector<1x32xf32>
    %cst_89 = arith.constant dense<0.000000e+00> : vector<16xf32>
    %178 = vector.multi_reduction <add>, %173, %cst_89 [1] : vector<16x32xf32> to vector<16xf32>
    %179 = vector.shape_cast %178 : vector<16xf32> to vector<16x1xf32>
    %cst_90 = arith.constant 3.200000e+01 : f32
    %180 = vector.broadcast %cst_90 : f32 to vector<16x1xf32>
    %181 = arith.divf %179, %180 : vector<16x1xf32>
    %182 = vector.broadcast %181 : vector<16x1xf32> to vector<16x32xf32>
    %183 = arith.subf %173, %182 : vector<16x32xf32>
    %184 = arith.mulf %183, %183 : vector<16x32xf32>
    %cst_91 = arith.constant dense<0.000000e+00> : vector<16xf32>
    %185 = vector.multi_reduction <add>, %184, %cst_91 [1] : vector<16x32xf32> to vector<16xf32>
    %186 = vector.shape_cast %185 : vector<16xf32> to vector<16x1xf32>
    %cst_92 = arith.constant 3.200000e+01 : f32
    %187 = vector.broadcast %cst_92 : f32 to vector<16x1xf32>
    %188 = arith.divf %186, %187 : vector<16x1xf32>
    %189 = vector.broadcast %181 : vector<16x1xf32> to vector<16x32xf32>
    %190 = arith.subf %173, %189 : vector<16x32xf32>
    %cst_93 = arith.constant 9.99999974E-6 : f32
    %191 = vector.broadcast %cst_93 : f32 to vector<16x1xf32>
    %192 = arith.addf %188, %191 : vector<16x1xf32>
    %193 = math.rsqrt %192 : vector<16x1xf32>
    %194 = vector.broadcast %193 : vector<16x1xf32> to vector<16x32xf32>
    %195 = arith.mulf %190, %194 : vector<16x32xf32>
    %196 = vector.broadcast %175 : vector<1x32xf32> to vector<16x32xf32>
    %197 = arith.mulf %195, %196 : vector<16x32xf32>
    %198 = vector.broadcast %177 : vector<1x32xf32> to vector<16x32xf32>
    %199 = arith.addf %197, %198 : vector<16x32xf32>
    %200 = arith.truncf %199 : vector<16x32xf32> to vector<16x32xbf16>
    %c1_94 = arith.constant 1 : index
    %c0_95 = arith.constant 0 : index
    %c0_96 = arith.constant 0 : index
    %201 = vector.load %arg10[%c1_94, %c0_95, %c0_96] : memref<2x32x1024xbf16, #tpu.memory_space<vmem>>, vector<1x32x1024xbf16>
    %202 = vector.shape_cast %201 : vector<1x32x1024xbf16> to vector<32x1024xbf16>
    %cst_97 = arith.constant dense<0.000000e+00> : vector<16x1024xf32>
    %203 = tpu.matmul %200, %202, %cst_97 {dimension_numbers = #tpu.dot_dimension_numbers<[1], [0], [0], [1], [0, 0, 1, 1], [], []>} : vector<16x32xbf16>, vector<32x1024xbf16>, vector<16x1024xf32> -> vector<16x1024xf32>
    %c1_98 = arith.constant 1 : index
    %c0_99 = arith.constant 0 : index
    %c0_100 = arith.constant 0 : index
    %204 = vector.load %arg11[%c1_98, %c0_99, %c0_100] : memref<2x1x1024xf32, #tpu.memory_space<vmem>>, vector<1x1x1024xf32>
    %205 = vector.shape_cast %204 : vector<1x1x1024xf32> to vector<1x1024xf32>
    %206 = vector.broadcast %205 : vector<1x1024xf32> to vector<16x1024xf32>
    %207 = arith.addf %203, %206 : vector<16x1024xf32>
    %cst_101 = arith.constant 0.000000e+00 : f32
    %208 = vector.broadcast %cst_101 : f32 to vector<16x1024xf32>
    %209 = arith.maximumf %207, %208 : vector<16x1024xf32>
    %210 = arith.truncf %209 : vector<16x1024xf32> to vector<16x1024xbf16>
    %c1_102 = arith.constant 1 : index
    %c0_103 = arith.constant 0 : index
    %c0_104 = arith.constant 0 : index
    %211 = vector.load %arg12[%c1_102, %c0_103, %c0_104] : memref<2x1024x32xbf16, #tpu.memory_space<vmem>>, vector<1x1024x32xbf16>
    %212 = vector.shape_cast %211 : vector<1x1024x32xbf16> to vector<1024x32xbf16>
    %cst_105 = arith.constant dense<0.000000e+00> : vector<16x32xf32>
    %213 = tpu.matmul %210, %212, %cst_105 {dimension_numbers = #tpu.dot_dimension_numbers<[1], [0], [0], [1], [0, 0, 1, 1], [], []>} : vector<16x1024xbf16>, vector<1024x32xbf16>, vector<16x32xf32> -> vector<16x32xf32>
    %c1_106 = arith.constant 1 : index
    %c0_107 = arith.constant 0 : index
    %c0_108 = arith.constant 0 : index
    %214 = vector.load %arg13[%c1_106, %c0_107, %c0_108] : memref<2x1x32xf32, #tpu.memory_space<vmem>>, vector<1x1x32xf32>
    %215 = vector.shape_cast %214 : vector<1x1x32xf32> to vector<1x32xf32>
    %216 = vector.broadcast %215 : vector<1x32xf32> to vector<16x32xf32>
    %217 = arith.addf %213, %216 : vector<16x32xf32>
    %218 = arith.addf %199, %217 : vector<16x32xf32>
    %c1_109 = arith.constant 1 : index
    %c0_110 = arith.constant 0 : index
    %c0_111 = arith.constant 0 : index
    %219 = vector.load %arg16[%c1_109, %c0_110, %c0_111] : memref<2x1x32xf32, #tpu.memory_space<vmem>>, vector<1x1x32xf32>
    %220 = vector.shape_cast %219 : vector<1x1x32xf32> to vector<1x32xf32>
    %c1_112 = arith.constant 1 : index
    %c0_113 = arith.constant 0 : index
    %c0_114 = arith.constant 0 : index
    %221 = vector.load %arg17[%c1_112, %c0_113, %c0_114] : memref<2x1x32xf32, #tpu.memory_space<vmem>>, vector<1x1x32xf32>
    %222 = vector.shape_cast %221 : vector<1x1x32xf32> to vector<1x32xf32>
    %cst_115 = arith.constant dense<0.000000e+00> : vector<16xf32>
    %223 = vector.multi_reduction <add>, %218, %cst_115 [1] : vector<16x32xf32> to vector<16xf32>
    %224 = vector.shape_cast %223 : vector<16xf32> to vector<16x1xf32>
    %cst_116 = arith.constant 3.200000e+01 : f32
    %225 = vector.broadcast %cst_116 : f32 to vector<16x1xf32>
    %226 = arith.divf %224, %225 : vector<16x1xf32>
    %227 = vector.broadcast %226 : vector<16x1xf32> to vector<16x32xf32>
    %228 = arith.subf %218, %227 : vector<16x32xf32>
    %229 = arith.mulf %228, %228 : vector<16x32xf32>
    %cst_117 = arith.constant dense<0.000000e+00> : vector<16xf32>
    %230 = vector.multi_reduction <add>, %229, %cst_117 [1] : vector<16x32xf32> to vector<16xf32>
    %231 = vector.shape_cast %230 : vector<16xf32> to vector<16x1xf32>
    %cst_118 = arith.constant 3.200000e+01 : f32
    %232 = vector.broadcast %cst_118 : f32 to vector<16x1xf32>
    %233 = arith.divf %231, %232 : vector<16x1xf32>
    %234 = vector.broadcast %226 : vector<16x1xf32> to vector<16x32xf32>
    %235 = arith.subf %218, %234 : vector<16x32xf32>
    %cst_119 = arith.constant 9.99999974E-6 : f32
    %236 = vector.broadcast %cst_119 : f32 to vector<16x1xf32>
    %237 = arith.addf %233, %236 : vector<16x1xf32>
    %238 = math.rsqrt %237 : vector<16x1xf32>
    %239 = vector.broadcast %238 : vector<16x1xf32> to vector<16x32xf32>
    %240 = arith.mulf %235, %239 : vector<16x32xf32>
    %241 = vector.broadcast %220 : vector<1x32xf32> to vector<16x32xf32>
    %242 = arith.mulf %240, %241 : vector<16x32xf32>
    %243 = vector.broadcast %222 : vector<1x32xf32> to vector<16x32xf32>
    %244 = arith.addf %242, %243 : vector<16x32xf32>
    %245 = arith.truncf %244 : vector<16x32xf32> to vector<16x32xbf16>
    %c0_120 = arith.constant 0 : index
    %c0_121 = arith.constant 0 : index
    %246 = vector.load %arg18[%c0_120, %c0_121] : memref<32x256xbf16, #tpu.memory_space<vmem>>, vector<32x256xbf16>
    %cst_122 = arith.constant dense<0.000000e+00> : vector<16x256xf32>
    %247 = tpu.matmul %245, %246, %cst_122 {dimension_numbers = #tpu.dot_dimension_numbers<[1], [0], [0], [1], [0, 0, 1, 1], [], []>} : vector<16x32xbf16>, vector<32x256xbf16>, vector<16x256xf32> -> vector<16x256xf32>
    %c0_123 = arith.constant 0 : index
    %c0_124 = arith.constant 0 : index
    %248 = vector.load %arg19[%c0_123, %c0_124] : memref<16x256xf32, #tpu.memory_space<vmem>>, vector<16x256xf32>
    %249 = arith.mulf %247, %248 : vector<16x256xf32>
    %250 = vector.shape_cast %249 : vector<16x256xf32> to vector<2x8x256xf32>
    %cst_125 = arith.constant dense<0.000000e+00> : vector<2x256xf32>
    %251 = vector.multi_reduction <add>, %250, %cst_125 [1] : vector<2x8x256xf32> to vector<2x256xf32>
    %c0_126 = arith.constant 0 : index
    %c0_127 = arith.constant 0 : index
    %252 = vector.load %arg20[%c0_126, %c0_127] : memref<256x32xf32, #tpu.memory_space<vmem>>, vector<256x32xf32>
    %cst_128 = arith.constant dense<0.000000e+00> : vector<2x32xf32>
    %253 = tpu.matmul %251, %252, %cst_128 {dimension_numbers = #tpu.dot_dimension_numbers<[1], [0], [0], [1], [0, 0, 1, 1], [], []>} : vector<2x256xf32>, vector<256x32xf32>, vector<2x32xf32> -> vector<2x32xf32>
    %c0_129 = arith.constant 0 : index
    %c0_130 = arith.constant 0 : index
    %254 = vector.load %arg21[%c0_129, %c0_130] : memref<1x32xf32, #tpu.memory_space<vmem>>, vector<1x32xf32>
    %255 = vector.broadcast %254 : vector<1x32xf32> to vector<2x32xf32>
    %256 = arith.addf %253, %255 : vector<2x32xf32>
    %c0_131 = arith.constant 0 : index
    %c0_132 = arith.constant 0 : index
    %257 = vector.load %arg22[%c0_131, %c0_132] : memref<2x32xf32, #tpu.memory_space<vmem>>, vector<2x32xf32>
    tpu.vector_store %arg22[%c0_131, %c0_132], %256 {strides = array<i32>} : memref<2x32xf32, #tpu.memory_space<vmem>>, vector<2x32xf32>,
    return
  }
}

</mosaic_0001>

<llo_original>
// kernel: forward.1
$region0: #{forward.1}
  #allocation0 [shape = 'u32[]', space=smem, size = 0x4, offset = 0x4, fixed_abs, tag = 'smem constant byte address 0x4 - core index']
  #allocation1 [shape = 'u32[144,128]{1,0:T(1,128)}', space=vmem, size = 0x12000, scoped, tag = 'internal scratch']
  %s0 = inlined_call_operand.vmem [shape: f32[16,16], index: 0, kind: input, shape index: {}]
  %s1 = inlined_call_operand.vmem [shape: f32[16,32], index: 1, kind: input, shape index: {}]
  %s2 = inlined_call_operand.vmem [shape: f32[8,32], index: 2, kind: input, shape index: {}]
  %s3 = inlined_call_operand.vmem [shape: f32[16,128], index: 3, kind: input, shape index: {}]
  %s4 = inlined_call_operand.vmem [shape: bf16[128,32], index: 4, kind: input, shape index: {}]
  %s5 = inlined_call_operand.vmem [shape: bf16[16,32], index: 5, kind: input, shape index: {}]
  %s6 = inlined_call_operand.vmem [shape: bf16[2,32,96], index: 6, kind: input, shape index: {}]
  %s7 = inlined_call_operand.vmem [shape: f32[2,1,96], index: 7, kind: input, shape index: {}]
  %s8 = inlined_call_operand.vmem [shape: bf16[2,32,32], index: 8, kind: input, shape index: {}]
  %s9 = inlined_call_operand.vmem [shape: f32[2,1,32], index: 9, kind: input, shape index: {}]
  %s10 = inlined_call_operand.vmem [shape: bf16[2,32,1024], index: 10, kind: input, shape index: {}]
  %s11 = inlined_call_operand.vmem [shape: f32[2,1,1024], index: 11, kind: input, shape index: {}]
  %s12 = inlined_call_operand.vmem [shape: bf16[2,1024,32], index: 12, kind: input, shape index: {}]
  %s13 = inlined_call_operand.vmem [shape: f32[2,1,32], index: 13, kind: input, shape index: {}]
  %s14 = inlined_call_operand.vmem [shape: f32[2,1,32], index: 14, kind: input, shape index: {}]
  %s15 = inlined_call_operand.vmem [shape: f32[2,1,32], index: 15, kind: input, shape index: {}]
  %s16 = inlined_call_operand.vmem [shape: f32[2,1,32], index: 16, kind: input, shape index: {}]
  %s17 = inlined_call_operand.vmem [shape: f32[2,1,32], index: 17, kind: input, shape index: {}]
  %s18 = inlined_call_operand.vmem [shape: bf16[32,256], index: 18, kind: input, shape index: {}]
  %s19 = inlined_call_operand.vmem [shape: f32[16,256], index: 19, kind: input, shape index: {}]
  %s20 = inlined_call_operand.vmem [shape: f32[256,32], index: 20, kind: input, shape index: {}]
  %s21 = inlined_call_operand.vmem [shape: f32[1,32], index: 21, kind: input, shape index: {}]
  %s22 = inlined_call_operand.hbm [shape: f32[2,32], index: 22, kind: output, shape index: {}]
  %s23 = sld [smem:[#allocation0]]
  $region98: #{forward.1} parent=0
    _
  %s25 = ssub.s32 1, %s23
  %s26 = scalar_select 0, %s25, %s23
  $region1: #{forward.1} parent=0
    #allocation2 [shape = 'u8[1024]{0}', space=vmem, size = 0x400, scoped, tag = 'output window, operand 0, single buffered']
    #allocation3 [shape = 's32[1]{0}', space=sflag, size = 0x4, scoped, tag = 'scoped memory for forward.1']
    %27 = vsyncpa [#allocation3], 0
    // Predicated region
    $region2: #{forward.1} parent=1 // pred_check
      _
    $region3: #{forward.1} parent=1 // pred_check_branch
      %29 = sbr.rel (0) target = $region5
    $region4: #{forward.1} parent=1 // pred_region
      _
    $region5: #{forward.1} parent=1 // pred_fallthru
      _
    // Predicated region
    $region6: #{forward.1} parent=1 // pred_check
      _
    $region7: #{forward.1} parent=1 // pred_check_branch
      %31 = sbr.rel (0) target = $region9
    $region8: #{forward.1} parent=1 // pred_region
      _
    $region9: #{forward.1} parent=1 // pred_fallthru
      _
    // Predicated region
    $region10: #{forward.1} parent=1 // pred_check
      _
    $region11: #{forward.1} parent=1 // pred_check_branch
      %33 = sbr.rel (0) target = $region13
    $region12: #{forward.1} parent=1 // pred_region
      _
    $region13: #{forward.1} parent=1 // pred_fallthru
      _
    // Predicated region
    $region14: #{forward.1} parent=1 // pred_check
      _
    $region15: #{forward.1} parent=1 // pred_check_branch
      %35 = sbr.rel (0) target = $region17
    $region16: #{forward.1} parent=1 // pred_region
      _
    $region17: #{forward.1} parent=1 // pred_fallthru
      _
    // Predicated region
    $region18: #{forward.1} parent=1 // pred_check
      _
    $region19: #{forward.1} parent=1 // pred_check_branch
      %37 = sbr.rel (0) target = $region21
    $region20: #{forward.1} parent=1 // pred_region
      _
    $region21: #{forward.1} parent=1 // pred_fallthru
      _
    // Predicated region
    $region22: #{forward.1} parent=1 // pred_check
      _
    $region23: #{forward.1} parent=1 // pred_check_branch
      %39 = sbr.rel (0) target = $region25
    $region24: #{forward.1} parent=1 // pred_region
      _
    $region25: #{forward.1} parent=1 // pred_fallthru
      _
    // Predicated region
    $region26: #{forward.1} parent=1 // pred_check
      _
    $region27: #{forward.1} parent=1 // pred_check_branch
      %41 = sbr.rel (0) target = $region29
    $region28: #{forward.1} parent=1 // pred_region
      _
    $region29: #{forward.1} parent=1 // pred_fallthru
      _
    // Predicated region
    $region30: #{forward.1} parent=1 // pred_check
      _
    $region31: #{forward.1} parent=1 // pred_check_branch
      %43 = sbr.rel (0) target = $region33
    $region32: #{forward.1} parent=1 // pred_region
      _
    $region33: #{forward.1} parent=1 // pred_fallthru
      _
    // Predicated region
    $region34: #{forward.1} parent=1 // pred_check
      _
    $region35: #{forward.1} parent=1 // pred_check_branch
      %45 = sbr.rel (0) target = $region37
    $region36: #{forward.1} parent=1 // pred_region
      _
    $region37: #{forward.1} parent=1 // pred_fallthru
      _
    // Predicated region
    $region38: #{forward.1} parent=1 // pred_check
      _
    $region39: #{forward.1} parent=1 // pred_check_branch
      %47 = sbr.rel (0) target = $region41
    $region40: #{forward.1} parent=1 // pred_region
      _
    $region41: #{forward.1} parent=1 // pred_fallthru
      _
    // Predicated region
    $region42: #{forward.1} parent=1 // pred_check
      _
    $region43: #{forward.1} parent=1 // pred_check_branch
      %49 = sbr.rel (0) target = $region45
    $region44: #{forward.1} parent=1 // pred_region
      _
    $region45: #{forward.1} parent=1 // pred_fallthru
      _
    // Predicated region
    $region46: #{forward.1} parent=1 // pred_check
      _
    $region47: #{forward.1} parent=1 // pred_check_branch
      %51 = sbr.rel (0) target = $region49
    $region48: #{forward.1} parent=1 // pred_region
      _
    $region49: #{forward.1} parent=1 // pred_fallthru
      _
    // Predicated region
    $region50: #{forward.1} parent=1 // pred_check
      _
    $region51: #{forward.1} parent=1 // pred_check_branch
      %53 = sbr.rel (0) target = $region53
    $region52: #{forward.1} parent=1 // pred_region
      _
    $region53: #{forward.1} parent=1 // pred_fallthru
      _
    // Predicated region
    $region54: #{forward.1} parent=1 // pred_check
      _
    $region55: #{forward.1} parent=1 // pred_check_branch
      %55 = sbr.rel (0) target = $region57
    $region56: #{forward.1} parent=1 // pred_region
      _
    $region57: #{forward.1} parent=1 // pred_fallthru
      _
    // Predicated region
    $region58: #{forward.1} parent=1 // pred_check
      _
    $region59: #{forward.1} parent=1 // pred_check_branch
      %57 = sbr.rel (0) target = $region61
    $region60: #{forward.1} parent=1 // pred_region
      _
    $region61: #{forward.1} parent=1 // pred_fallthru
      _
    // Predicated region
    $region62: #{forward.1} parent=1 // pred_check
      _
    $region63: #{forward.1} parent=1 // pred_check_branch
      %59 = sbr.rel (0) target = $region65
    $region64: #{forward.1} parent=1 // pred_region
      _
    $region65: #{forward.1} parent=1 // pred_fallthru
      _
    // Predicated region
    $region66: #{forward.1} parent=1 // pred_check
      _
    $region67: #{forward.1} parent=1 // pred_check_branch
      %61 = sbr.rel (0) target = $region69
    $region68: #{forward.1} parent=1 // pred_region
      _
    $region69: #{forward.1} parent=1 // pred_fallthru
      _
    // Predicated region
    $region70: #{forward.1} parent=1 // pred_check
      _
    $region71: #{forward.1} parent=1 // pred_check_branch
      %63 = sbr.rel (0) target = $region73
    $region72: #{forward.1} parent=1 // pred_region
      _
    $region73: #{forward.1} parent=1 // pred_fallthru
      _
    // Predicated region
    $region74: #{forward.1} parent=1 // pred_check
      _
    $region75: #{forward.1} parent=1 // pred_check_branch
      %65 = sbr.rel (0) target = $region77
    $region76: #{forward.1} parent=1 // pred_region
      _
    $region77: #{forward.1} parent=1 // pred_fallthru
      _
    // Predicated region
    $region78: #{forward.1} parent=1 // pred_check
      _
    $region79: #{forward.1} parent=1 // pred_check_branch
      %67 = sbr.rel (0) target = $region81
    $region80: #{forward.1} parent=1 // pred_region
      _
    $region81: #{forward.1} parent=1 // pred_fallthru
      _
    // Predicated region
    $region82: #{forward.1} parent=1 // pred_check
      _
    $region83: #{forward.1} parent=1 // pred_check_branch
      %69 = sbr.rel (0) target = $region85
    $region84: #{forward.1} parent=1 // pred_region
      _
    $region85: #{forward.1} parent=1 // pred_fallthru
      _
    // Predicated region
    $region86: #{forward.1} parent=1 // pred_check
      _
    $region87: #{forward.1} parent=1 // pred_check_branch
      %71 = sbr.rel (0) target = $region89
    $region88: #{forward.1} parent=1 // pred_region
      _
    $region89: #{forward.1} parent=1 // pred_fallthru
      _
    %v73 = vld [vmem:[%s0] sm:$0xff]
    %v74 = vld [vmem:[%s0 + $0x8] sm:$0xff]
    %v75 = vpack.c.bf16 %v74, %v73
    %v76 = vld [vmem:[%s5] sm:$0xf]
    %v77 = vld [vmem:[%s5 + $0x4] sm:$0xf]
    %v78 = vld [vmem:[%s1] sm:$0xff]
    %v79 = vld [vmem:[%s1 + $0x8] sm:$0xff]
    %v82 = vunpack.c.l.b16 %v76
    %v83 = vunpack.c.l.b16 %v77
    %v84 = vpack.c.b16 %v83, %v82
    %vm86 = vcmask 130048
    %v88 = vsel %vm86, %v75, 0
    %90 = vmatprep.subr.bf16.mxu0 0
    %91 = vmatpush1.bf16.msra.mxu0 0
    %92 = vmatprep.subr.bf16.mxu0 0
    %93 = vmatpush1.bf16.msra.mxu0 0
    %94 = vmatprep.subr.bf16.mxu0 0
    %95 = vmatpush1.bf16.msra.mxu0 0
    %96 = vmatprep.subr.bf16.mxu0 0
    %97 = vmatpush1.bf16.msra.mxu0 0
    %98 = vmatprep.subr.bf16.mxu0 0
    %99 = vmatpush1.bf16.msra.mxu0 0
    %100 = vmatprep.subr.bf16.mxu0 0
    %101 = vmatpush1.bf16.msra.mxu0 0
    %102 = vmatprep.subr.bf16.mxu0 0
    %103 = vmatpush1.bf16.msra.mxu0 0
    %104 = vmatprep.subr.bf16.mxu0 0
    %105 = vmatpush1.bf16.msra.mxu0 %v84
    %106 = vmatprep.subr.bf16.mxu0 0
    %107 = vmatpush2.bf16.msra.mxu0 0
    %108 = vmatprep.subr.bf16.mxu0 0
    %109 = vmatpush2.bf16.msra.mxu0 0
    %110 = vmatprep.subr.bf16.mxu0 0
    %111 = vmatpush2.bf16.msra.mxu0 0
    %112 = vmatprep.subr.bf16.mxu0 0
    %113 = vmatpush2.bf16.msra.mxu0 0
    %114 = vmatprep.subr.bf16.mxu0 0
    %115 = vmatpush2.bf16.msra.mxu0 0
    %116 = vmatprep.subr.bf16.mxu0 0
    %117 = vmatpush2.bf16.msra.mxu0 0
    %118 = vmatprep.subr.bf16.mxu0 0
    %119 = vmatpush2.bf16.msra.mxu0 0
    %120 = vmatprep.subr.bf16.mxu0 0
    %121 = vmatpush2.bf16.msra.mxu0 0
    %122 = vmatprep.mubr.bf16.mxu0 0
    %123 = vmatmul.mubr.bf16.gmra.mxu0 %v88
    %v124 = vpop.f32.mrf.mxu0
    %v125 = vadd.f32 %v78, %v124
    %v126 = vpop.f32.mrf.mxu0
    %v127 = vpop.f32.mrf.mxu0
    %v128 = vadd.f32 %v79, %v127
    %v129 = vpop.f32.mrf.mxu0
    %130 = vdwg.mxu0
    %v131 = vld [vmem:[%s2] sm:$0xff]
    %v132 = vld [vmem:[%s3] sm:$0xff]
    %v133 = vld [vmem:[%s3 + $0x8] sm:$0xff]
    %v134 = vld [vmem:[%s4] sm:$0xf]
    %v135 = vld [vmem:[%s4 + $0x4] sm:$0xf]
    %v136 = vld [vmem:[%s4 + $0x8] sm:$0xf]
    %v137 = vld [vmem:[%s4 + $0xc] sm:$0xf]
    %v138 = vld [vmem:[%s4 + $0x10] sm:$0xf]
    %v139 = vld [vmem:[%s4 + $0x14] sm:$0xf]
    %v140 = vld [vmem:[%s4 + $0x18] sm:$0xf]
    %v141 = vld [vmem:[%s4 + $0x1c] sm:$0xf]
    %v142 = vld [vmem:[%s4 + $0x20] sm:$0xf]
    %v143 = vld [vmem:[%s4 + $0x24] sm:$0xf]
    %v144 = vld [vmem:[%s4 + $0x28] sm:$0xf]
    %v145 = vld [vmem:[%s4 + $0x2c] sm:$0xf]
    %v146 = vld [vmem:[%s4 + $0x30] sm:$0xf]
    %v147 = vld [vmem:[%s4 + $0x34] sm:$0xf]
    %v148 = vld [vmem:[%s4 + $0x38] sm:$0xf]
    %v149 = vld [vmem:[%s4 + $0x3c] sm:$0xf]
    %v150 = vpack.c.bf16 %v128, %v125
    %v151 = vld [vmem:[%s6] sm:$0xf]
    %v152 = vld [vmem:[%s6 + $0x4] sm:$0xf]
    %v153 = vld [vmem:[%s6 + $0x8] sm:$0xf]
    %v154 = vld [vmem:[%s6 + $0xc] sm:$0xf]
    %v155 = vld [vmem:[%s7] sm:$0x1]
    %v157 = vlaneseq
    %v158 = vshrl.u32 %v157, 7
    %v159 = vsub.s32 0, %v158
    %v160 = vrot.slane %v155, %v159
    %v166 = vunpack.c.l.b16 %v151
    %v167 = vunpack.c.l.b16 %v152
    %v168 = vunpack.c.l.b16 %v153
    %v169 = vunpack.c.l.b16 %v154
    %v170 = vpack.c.b16 %v167, %v166
    %v171 = vpack.c.b16 %v169, %v168
    %vm174 = vcmask 261120
    %v176 = vsel %vm174, %v150, 0
    %178 = vmatprep.subr.bf16.mxu0 0
    %179 = vmatpush1.bf16.msra.mxu0 0
    %180 = vmatprep.subr.bf16.mxu0 0
    %181 = vmatpush1.bf16.msra.mxu0 0
    %182 = vmatprep.subr.bf16.mxu0 0
    %183 = vmatpush1.bf16.msra.mxu0 0
    %184 = vmatprep.subr.bf16.mxu0 0
    %185 = vmatpush1.bf16.msra.mxu0 0
    %186 = vmatprep.subr.bf16.mxu0 0
    %187 = vmatpush1.bf16.msra.mxu0 0
    %188 = vmatprep.subr.bf16.mxu0 0
    %189 = vmatpush1.bf16.msra.mxu0 0
    %190 = vmatprep.subr.bf16.mxu0 0
    %191 = vmatpush1.bf16.msra.mxu0 %v171
    %192 = vmatprep.subr.bf16.mxu0 0
    %193 = vmatpush1.bf16.msra.mxu0 %v170
    %194 = vmatprep.subr.bf16.mxu0 0
    %195 = vmatpush2.bf16.msra.mxu0 0
    %196 = vmatprep.subr.bf16.mxu0 0
    %197 = vmatpush2.bf16.msra.mxu0 0
    %198 = vmatprep.subr.bf16.mxu0 0
    %199 = vmatpush2.bf16.msra.mxu0 0
    %200 = vmatprep.subr.bf16.mxu0 0
    %201 = vmatpush2.bf16.msra.mxu0 0
    %202 = vmatprep.subr.bf16.mxu0 0
    %203 = vmatpush2.bf16.msra.mxu0 0
    %204 = vmatprep.subr.bf16.mxu0 0
    %205 = vmatpush2.bf16.msra.mxu0 0
    %206 = vmatprep.subr.bf16.mxu0 0
    %207 = vmatpush2.bf16.msra.mxu0 0
    %208 = vmatprep.subr.bf16.mxu0 0
    %209 = vmatpush2.bf16.msra.mxu0 0
    %210 = vmatprep.mubr.bf16.mxu0 0
    %211 = vmatmul.mubr.bf16.gmra.mxu0 %v176
    %v212 = vpop.f32.mrf.mxu0
    %v213 = vadd.f32 %v160, %v212
    %v214 = vpop.f32.mrf.mxu0
    %v215 = vpop.f32.mrf.mxu0
    %v216 = vadd.f32 %v160, %v215
    %v217 = vpop.f32.mrf.mxu0
    %218 = vdwg.mxu0
    %v220 = vcombine.high %v131, %v131
    %v222 = vunpack.c.l.s4 1966171168
    %v223 = vunpack.c.0.s8 %v222
    %v224 = vlaneseq
    %v225 = vshrl.u32 %v224, 7
    %v226 = vsub.s32 %v223, %v225
    %v227 = vrot.slane %v131, %v226
    %v229 = vunpack.c.l.s4 1966171168
    %v230 = vunpack.c.0.s8 %v229
    %v231 = vlaneseq
    %v232 = vshrl.u32 %v231, 7
    %v233 = vsub.s32 %v230, %v232
    %v234 = vrot.slane %v220, %v233
    %v235 = vcombine.high %v227, %v227
    %v236 = vcombine.high %v234, %v234
    %v238 = vunpack.c.l.s4 1966171168
    %v239 = vunpack.c.0.s8 %v238
    %v240 = vlaneseq
    %v241 = vshrl.u32 %v240, 7
    %v242 = vsub.s32 %v239, %v241
    %v243 = vrot.slane %v227, %v242
    %v245 = vunpack.c.l.s4 1966171168
    %v246 = vunpack.c.0.s8 %v245
    %v247 = vlaneseq
    %v248 = vshrl.u32 %v247, 7
    %v249 = vsub.s32 %v246, %v248
    %v250 = vrot.slane %v234, %v249
    %v252 = vunpack.c.l.s4 1966171168
    %v253 = vunpack.c.0.s8 %v252
    %v254 = vlaneseq
    %v255 = vshrl.u32 %v254, 7
    %v256 = vsub.s32 %v253, %v255
    %v257 = vrot.slane %v235, %v256
    %v259 = vunpack.c.l.s4 1966171168
    %v260 = vunpack.c.0.s8 %v259
    %v261 = vlaneseq
    %v262 = vshrl.u32 %v261, 7
    %v263 = vsub.s32 %v260, %v262
    %v264 = vrot.slane %v236, %v263
    %v265 = vcombine.high %v243, %v243
    %v266 = vcombine.high %v250, %v250
    %v267 = vcombine.high %v257, %v257
    %v268 = vcombine.high %v264, %v264
    %v269 = vlaneseq
    %v270 = vshrl.u32 %v269, 7
    %v271 = vsub.s32 0, %v270
    %v272 = vrot.slane %v243, %v271
    %v273 = vlaneseq
    %v274 = vshrl.u32 %v273, 7
    %v275 = vsub.s32 0, %v274
    %v276 = vrot.slane %v257, %v275
    %v277 = vlaneseq
    %v278 = vshrl.u32 %v277, 7
    %v279 = vsub.s32 0, %v278
    %v280 = vrot.slane %v265, %v279
    %v281 = vlaneseq
    %v282 = vshrl.u32 %v281, 7
    %v283 = vsub.s32 0, %v282
    %v284 = vrot.slane %v267, %v283
    %v285 = vlaneseq
    %v286 = vshrl.u32 %v285, 7
    %v287 = vsub.s32 0, %v286
    %v288 = vrot.slane %v250, %v287
    %v289 = vlaneseq
    %v290 = vshrl.u32 %v289, 7
    %v291 = vsub.s32 0, %v290
    %v292 = vrot.slane %v264, %v291
    %v293 = vlaneseq
    %v294 = vshrl.u32 %v293, 7
    %v295 = vsub.s32 0, %v294
    %v296 = vrot.slane %v266, %v295
    %v297 = vlaneseq
    %v298 = vshrl.u32 %v297, 7
    %v299 = vsub.s32 0, %v298
    %v300 = vrot.slane %v268, %v299
    %311 = vrot.lane.b32.xlu0 %v213, 96
    %v312 = vpop.permute.xlu0 %311
    %313 = vrot.lane.b32.xlu0 %v216, 96
    %v314 = vpop.permute.xlu0 %313
    %v317 = vmul.f32 %v272, %v312
    %v318 = vmul.f32 %v272, %v314
    %v319 = vmul.f32 %v276, %v312
    %v320 = vmul.f32 %v276, %v314
    %v321 = vmul.f32 %v280, %v312
    %v322 = vmul.f32 %v280, %v314
    %v323 = vmul.f32 %v284, %v312
    %v324 = vmul.f32 %v284, %v314
    %v325 = vmul.f32 %v288, %v312
    %v326 = vmul.f32 %v288, %v314
    %v327 = vmul.f32 %v292, %v312
    %v328 = vmul.f32 %v292, %v314
    %v329 = vmul.f32 %v296, %v312
    %v330 = vmul.f32 %v296, %v314
    %v331 = vmul.f32 %v300, %v312
    %v332 = vmul.f32 %v300, %v314
    %v333 = vpack.c.bf16 %v318, %v317
    %v334 = vpack.c.bf16 %v320, %v319
    %v335 = vpack.c.bf16 %v322, %v321
    %v336 = vpack.c.bf16 %v324, %v323
    %v337 = vpack.c.bf16 %v326, %v325
    %v338 = vpack.c.bf16 %v328, %v327
    %v339 = vpack.c.bf16 %v330, %v329
    %v340 = vpack.c.bf16 %v332, %v331
    %341 = vrot.lane.b32.xlu0 %v213, 64
    %v342 = vpop.permute.xlu0 %341
    %343 = vrot.lane.b32.xlu0 %v216, 64
    %v344 = vpop.permute.xlu0 %343
    %v347 = vmul.f32 %v272, %v342
    %v348 = vmul.f32 %v272, %v344
    %v349 = vmul.f32 %v276, %v342
    %v350 = vmul.f32 %v276, %v344
    %v351 = vmul.f32 %v280, %v342
    %v352 = vmul.f32 %v280, %v344
    %v353 = vmul.f32 %v284, %v342
    %v354 = vmul.f32 %v284, %v344
    %v355 = vmul.f32 %v288, %v342
    %v356 = vmul.f32 %v288, %v344
    %v357 = vmul.f32 %v292, %v342
    %v358 = vmul.f32 %v292, %v344
    %v359 = vmul.f32 %v296, %v342
    %v360 = vmul.f32 %v296, %v344
    %v361 = vmul.f32 %v300, %v342
    %v362 = vmul.f32 %v300, %v344
    %v363 = vpack.c.bf16 %v348, %v347
    %v364 = vpack.c.bf16 %v350, %v349
    %v365 = vpack.c.bf16 %v352, %v351
    %v366 = vpack.c.bf16 %v354, %v353
    %v367 = vpack.c.bf16 %v356, %v355
    %v368 = vpack.c.bf16 %v358, %v357
    %v369 = vpack.c.bf16 %v360, %v359
    %v370 = vpack.c.bf16 %v362, %v361
    %v371 = vpack.c.bf16 %v216, %v213
    %v373 = vsel %vm174, %v371, 0
    %v376 = vsel %vm174, %v333, 0
    %v379 = vsel %vm174, %v334, 0
    %v382 = vsel %vm174, %v335, 0
    %v385 = vsel %vm174, %v336, 0
    %v388 = vsel %vm174, %v337, 0
    %v391 = vsel %vm174, %v338, 0
    %v394 = vsel %vm174, %v339, 0
    %v397 = vsel %vm174, %v340, 0
    %399 = vmatprep.subr.bf16.mxu0 0
    %400 = vmatpush1.bf16.xpose.msra.mxu0 %v397
    %401 = vmatprep.subr.bf16.mxu0 0
    %402 = vmatpush1.bf16.xpose.msra.mxu0 %v394
    %403 = vmatprep.subr.bf16.mxu0 0
    %404 = vmatpush1.bf16.xpose.msra.mxu0 %v391
    %405 = vmatprep.subr.bf16.mxu0 0
    %406 = vmatpush1.bf16.xpose.msra.mxu0 %v388
    %407 = vmatprep.subr.bf16.mxu0 0
    %408 = vmatpush1.bf16.xpose.msra.mxu0 %v385
    %409 = vmatprep.subr.bf16.mxu0 0
    %410 = vmatpush1.bf16.xpose.msra.mxu0 %v382
    %411 = vmatprep.subr.bf16.mxu0 0
    %412 = vmatpush1.bf16.xpose.msra.mxu0 %v379
    %413 = vmatprep.subr.bf16.mxu0 0
    %414 = vmatpush1.bf16.xpose.msra.mxu0 %v376
    %415 = vmatprep.subr.bf16.mxu0 0
    %416 = vmatpush2.bf16.xpose.msra.mxu0 0
    %417 = vmatprep.subr.bf16.mxu0 0
    %418 = vmatpush2.bf16.xpose.msra.mxu0 0
    %419 = vmatprep.subr.bf16.mxu0 0
    %420 = vmatpush2.bf16.xpose.msra.mxu0 0
    %421 = vmatprep.subr.bf16.mxu0 0
    %422 = vmatpush2.bf16.xpose.msra.mxu0 0
    %423 = vmatprep.subr.bf16.mxu0 0
    %424 = vmatpush2.bf16.xpose.msra.mxu0 0
    %425 = vmatprep.subr.bf16.mxu0 0
    %426 = vmatpush2.bf16.xpose.msra.mxu0 0
    %427 = vmatprep.subr.bf16.mxu0 0
    %428 = vmatpush2.bf16.xpose.msra.mxu0 0
    %429 = vmatprep.subr.bf16.mxu0 0
    %430 = vmatpush2.bf16.xpose.msra.mxu0 0
    %431 = vmatprep.mubr.bf16.mxu0 0
    %432 = vmatmul.mubr.bf16.gmra.mxu0 %v373
    %v433 = vpop.f32.mrf.mxu0
    %v434 = vadd.f32 %v132, %v433
    %v435 = vpop.f32.mrf.mxu0
    %v436 = vpop.f32.mrf.mxu0
    %v437 = vadd.f32 %v133, %v436
    %v438 = vpop.f32.mrf.mxu0
    %439 = vdwg.mxu0
    %440 = vmax.xlane.f32.xlu0 %v434
    %v441 = vpop.xlane.xlu0 %440
    %442 = vmax.xlane.f32.xlu0 %v437
    %v443 = vpop.xlane.xlu0 %442
    %v444 = vsub.f32 %v434, %v441
    %v445 = vsub.f32 %v437, %v443
    %v446 = vmul.f32 %v444, 1.442695
    %v447 = vpow.pop %v446
    %v448 = vmul.f32 %v445, 1.442695
    %v449 = vpow.pop %v448
    %v450 = vpack.c.bf16 %v449, %v447
    %451 = vmatprep.subr.bf16.mxu0 0
    %452 = vmatpush1.bf16.msra.mxu0 %v370
    %453 = vmatprep.subr.bf16.mxu0 0
    %454 = vmatpush1.bf16.msra.mxu0 %v369
    %455 = vmatprep.subr.bf16.mxu0 0
    %456 = vmatpush1.bf16.msra.mxu0 %v368
    %457 = vmatprep.subr.bf16.mxu0 0
    %458 = vmatpush1.bf16.msra.mxu0 %v367
    %459 = vmatprep.subr.bf16.mxu0 0
    %460 = vmatpush1.bf16.msra.mxu0 %v366
    %461 = vmatprep.subr.bf16.mxu0 0
    %462 = vmatpush1.bf16.msra.mxu0 %v365
    %463 = vmatprep.subr.bf16.mxu0 0
    %464 = vmatpush1.bf16.msra.mxu0 %v364
    %465 = vmatprep.subr.bf16.mxu0 0
    %466 = vmatpush1.bf16.msra.mxu0 %v363
    %467 = vmatprep.subr.bf16.mxu0 0
    %468 = vmatpush2.bf16.msra.mxu0 0
    %469 = vmatprep.subr.bf16.mxu0 0
    %470 = vmatpush2.bf16.msra.mxu0 0
    %471 = vmatprep.subr.bf16.mxu0 0
    %472 = vmatpush2.bf16.msra.mxu0 0
    %473 = vmatprep.subr.bf16.mxu0 0
    %474 = vmatpush2.bf16.msra.mxu0 0
    %475 = vmatprep.subr.bf16.mxu0 0
    %476 = vmatpush2.bf16.msra.mxu0 0
    %477 = vmatprep.subr.bf16.mxu0 0
    %478 = vmatpush2.bf16.msra.mxu0 0
    %479 = vmatprep.subr.bf16.mxu0 0
    %480 = vmatpush2.bf16.msra.mxu0 0
    %481 = vmatprep.subr.bf16.mxu0 0
    %482 = vmatpush2.bf16.msra.mxu0 0
    %483 = vmatprep.mubr.bf16.mxu0 0
    %484 = vmatmul.mubr.bf16.gmra.mxu0 %v450
    %v485 = vpop.f32.mrf.mxu0
    %v486 = vadd.f32 0.0, %v485
    %v487 = vpop.f32.mrf.mxu0
    %v488 = vpop.f32.mrf.mxu0
    %v489 = vadd.f32 0.0, %v488
    %v490 = vpop.f32.mrf.mxu0
    %491 = vdwg.mxu0
    %v508 = vunpack.c.l.b16 %v134
    %v509 = vunpack.c.l.b16 %v135
    %v510 = vunpack.c.l.b16 %v136
    %v511 = vunpack.c.l.b16 %v137
    %v512 = vunpack.c.l.b16 %v138
    %v513 = vunpack.c.l.b16 %v139
    %v514 = vunpack.c.l.b16 %v140
    %v515 = vunpack.c.l.b16 %v141
    %v516 = vunpack.c.l.b16 %v142
    %v517 = vunpack.c.l.b16 %v143
    %v518 = vunpack.c.l.b16 %v144
    %v519 = vunpack.c.l.b16 %v145
    %v520 = vunpack.c.l.b16 %v146
    %v521 = vunpack.c.l.b16 %v147
    %v522 = vunpack.c.l.b16 %v148
    %v523 = vunpack.c.l.b16 %v149
    %v524 = vpack.c.b16 %v509, %v508
    %v525 = vpack.c.b16 %v511, %v510
    %v526 = vpack.c.b16 %v513, %v512
    %v527 = vpack.c.b16 %v515, %v514
    %v528 = vpack.c.b16 %v517, %v516
    %v529 = vpack.c.b16 %v519, %v518
    %v530 = vpack.c.b16 %v521, %v520
    %v531 = vpack.c.b16 %v523, %v522
    %540 = vmatprep.subr.bf16.mxu0 0
    %541 = vmatpush1.bf16.msra.mxu0 %v531
    %542 = vmatprep.subr.bf16.mxu0 0
    %543 = vmatpush1.bf16.msra.mxu0 %v530
    %544 = vmatprep.subr.bf16.mxu0 0
    %545 = vmatpush1.bf16.msra.mxu0 %v529
    %546 = vmatprep.subr.bf16.mxu0 0
    %547 = vmatpush1.bf16.msra.mxu0 %v528
    %548 = vmatprep.subr.bf16.mxu0 0
    %549 = vmatpush1.bf16.msra.mxu0 %v527
    %550 = vmatprep.subr.bf16.mxu0 0
    %551 = vmatpush1.bf16.msra.mxu0 %v526
    %552 = vmatprep.subr.bf16.mxu0 0
    %553 = vmatpush1.bf16.msra.mxu0 %v525
    %554 = vmatprep.subr.bf16.mxu0 0
    %555 = vmatpush1.bf16.msra.mxu0 %v524
    %556 = vmatprep.subr.bf16.mxu0 0
    %557 = vmatpush2.bf16.msra.mxu0 0
    %558 = vmatprep.subr.bf16.mxu0 0
    %559 = vmatpush2.bf16.msra.mxu0 0
    %560 = vmatprep.subr.bf16.mxu0 0
    %561 = vmatpush2.bf16.msra.mxu0 0
    %562 = vmatprep.subr.bf16.mxu0 0
    %563 = vmatpush2.bf16.msra.mxu0 0
    %564 = vmatprep.subr.bf16.mxu0 0
    %565 = vmatpush2.bf16.msra.mxu0 0
    %566 = vmatprep.subr.bf16.mxu0 0
    %567 = vmatpush2.bf16.msra.mxu0 0
    %568 = vmatprep.subr.bf16.mxu0 0
    %569 = vmatpush2.bf16.msra.mxu0 0
    %570 = vmatprep.subr.bf16.mxu0 0
    %571 = vmatpush2.bf16.msra.mxu0 0
    %572 = vmatprep.mubr.bf16.mxu0 0
    %573 = vmatmul.mubr.bf16.gmra.mxu0 %v450
    %v574 = vpop.f32.mrf.mxu0
    %v575 = vadd.f32 0.0, %v574
    %v576 = vpop.f32.mrf.mxu0
    %v577 = vpop.f32.mrf.mxu0
    %v578 = vadd.f32 0.0, %v577
    %v579 = vpop.f32.mrf.mxu0
    %580 = vdwg.mxu0
    %v581 = vrcp.pop %v575
    %v582 = vrcp.pop %v578
    %v583 = vmul.f32 %v486, %v581
    %v584 = vmul.f32 %v489, %v582
    %v585 = vpack.c.bf16 %v584, %v583
    %v586 = vld [vmem:[%s8] sm:$0xf]
    %v587 = vld [vmem:[%s8 + $0x4] sm:$0xf]
    %v588 = vld [vmem:[%s8 + $0x8] sm:$0xf]
    %v589 = vld [vmem:[%s8 + $0xc] sm:$0xf]
    %v590 = vld [vmem:[%s9] sm:$0x1]
    %v592 = vlaneseq
    %v593 = vshrl.u32 %v592, 7
    %v594 = vsub.s32 0, %v593
    %v595 = vrot.slane %v590, %v594
    %v601 = vunpack.c.l.b16 %v586
    %v602 = vunpack.c.l.b16 %v587
    %v603 = vunpack.c.l.b16 %v588
    %v604 = vunpack.c.l.b16 %v589
    %v605 = vpack.c.b16 %v602, %v601
    %v606 = vpack.c.b16 %v604, %v603
    %v610 = vsel %vm174, %v585, 0
    %612 = vmatprep.subr.bf16.mxu0 0
    %613 = vmatpush1.bf16.msra.mxu0 0
    %614 = vmatprep.subr.bf16.mxu0 0
    %615 = vmatpush1.bf16.msra.mxu0 0
    %616 = vmatprep.subr.bf16.mxu0 0
    %617 = vmatpush1.bf16.msra.mxu0 0
    %618 = vmatprep.subr.bf16.mxu0 0
    %619 = vmatpush1.bf16.msra.mxu0 0
    %620 = vmatprep.subr.bf16.mxu0 0
    %621 = vmatpush1.bf16.msra.mxu0 0
    %622 = vmatprep.subr.bf16.mxu0 0
    %623 = vmatpush1.bf16.msra.mxu0 0
    %624 = vmatprep.subr.bf16.mxu0 0
    %625 = vmatpush1.bf16.msra.mxu0 %v606
    %626 = vmatprep.subr.bf16.mxu0 0
    %627 = vmatpush1.bf16.msra.mxu0 %v605
    %628 = vmatprep.subr.bf16.mxu0 0
    %629 = vmatpush2.bf16.msra.mxu0 0
    %630 = vmatprep.subr.bf16.mxu0 0
    %631 = vmatpush2.bf16.msra.mxu0 0
    %632 = vmatprep.subr.bf16.mxu0 0
    %633 = vmatpush2.bf16.msra.mxu0 0
    %634 = vmatprep.subr.bf16.mxu0 0
    %635 = vmatpush2.bf16.msra.mxu0 0
    %636 = vmatprep.subr.bf16.mxu0 0
    %637 = vmatpush2.bf16.msra.mxu0 0
    %638 = vmatprep.subr.bf16.mxu0 0
    %639 = vmatpush2.bf16.msra.mxu0 0
    %640 = vmatprep.subr.bf16.mxu0 0
    %641 = vmatpush2.bf16.msra.mxu0 0
    %642 = vmatprep.subr.bf16.mxu0 0
    %643 = vmatpush2.bf16.msra.mxu0 0
    %644 = vmatprep.mubr.bf16.mxu0 0
    %645 = vmatmul.mubr.bf16.gmra.mxu0 %v610
    %v646 = vpop.f32.mrf.mxu0
    %v647 = vadd.f32 %v595, %v646
    %v648 = vpop.f32.mrf.mxu0
    %v649 = vpop.f32.mrf.mxu0
    %v650 = vadd.f32 %v595, %v649
    %v651 = vpop.f32.mrf.mxu0
    %652 = vdwg.mxu0
    %v653 = vadd.f32 %v125, %v647
    %v654 = vadd.f32 %v128, %v650
    %v655 = vld [vmem:[%s14] sm:$0x1]
    %v656 = vld [vmem:[%s15] sm:$0x1]
    %v657 = vsel %vm174, %v653, 0.0
    %658 = vadd.xlane.f32.xlu0 %v657
    %v659 = vpop.xlane.xlu0 %658
    %v660 = vsel %vm174, %v654, 0.0
    %661 = vadd.xlane.f32.xlu0 %v660
    %v662 = vpop.xlane.xlu0 %661
    %v663 = vrcp.pop 32.0
    %v664 = vmul.f32 %v659, %v663
    %v665 = vmul.f32 %v662, %v663
    %v666 = vsub.f32 %v653, %v664
    %v667 = vsub.f32 %v654, %v665
    %v668 = vmul.f32 %v666, %v666
    %v669 = vmul.f32 %v667, %v667
    %v670 = vsel %vm174, %v668, 0.0
    %671 = vadd.xlane.f32.xlu0 %v670
    %v672 = vpop.xlane.xlu0 %671
    %v673 = vsel %vm174, %v669, 0.0
    %674 = vadd.xlane.f32.xlu0 %v673
    %v675 = vpop.xlane.xlu0 %674
    %v676 = vmul.f32 %v672, %v663
    %v677 = vmul.f32 %v675, %v663
    %v678 = vadd.f32 %v676, 1e-05
    %v679 = vadd.f32 %v677, 1e-05
    %v680 = vrsqrt.pop %v678
    %v681 = vrsqrt.pop %v679
    %v682 = vmul.f32 %v666, %v680
    %v683 = vmul.f32 %v667, %v681
    %v685 = vlaneseq
    %v686 = vshrl.u32 %v685, 7
    %v687 = vsub.s32 0, %v686
    %v688 = vrot.slane %v655, %v687
    %v690 = vmul.f32 %v682, %v688
    %v691 = vmul.f32 %v683, %v688
    %v693 = vlaneseq
    %v694 = vshrl.u32 %v693, 7
    %v695 = vsub.s32 0, %v694
    %v696 = vrot.slane %v656, %v695
    %v698 = vadd.f32 %v690, %v696
    %v699 = vadd.f32 %v691, %v696
    %v700 = vpack.c.bf16 %v699, %v698
    %v701 = vld [vmem:[%s10] sm:$0xff]
    %v702 = vld [vmem:[%s10 + $0x8] sm:$0xff]
    %v703 = vld [vmem:[%s10 + $0x10] sm:$0xff]
    %v704 = vld [vmem:[%s10 + $0x18] sm:$0xff]
    %v705 = vld [vmem:[%s10 + $0x20] sm:$0xff]
    %v706 = vld [vmem:[%s10 + $0x28] sm:$0xff]
    %v707 = vld [vmem:[%s10 + $0x30] sm:$0xff]
    %v708 = vld [vmem:[%s10 + $0x38] sm:$0xff]
    %v709 = vld [vmem:[%s10 + $0x40] sm:$0xff]
    %v710 = vld [vmem:[%s10 + $0x48] sm:$0xff]
    %v711 = vld [vmem:[%s10 + $0x50] sm:$0xff]
    %v712 = vld [vmem:[%s10 + $0x58] sm:$0xff]
    %v713 = vld [vmem:[%s10 + $0x60] sm:$0xff]
    %v714 = vld [vmem:[%s10 + $0x68] sm:$0xff]
    %v715 = vld [vmem:[%s10 + $0x70] sm:$0xff]
    %v716 = vld [vmem:[%s10 + $0x78] sm:$0xff]
    %v717 = vld [vmem:[%s11] sm:$0xff]
    %v719 = vlaneseq
    %v720 = vshrl.u32 %v719, 7
    %v721 = vsub.s32 0, %v720
    %v722 = vrot.slane %v717, %v721
    %v723 = vlaneseq
    %v724 = vshrl.u32 %v723, 7
    %v725 = vsub.s32 1, %v724
    %v726 = vrot.slane %v717, %v725
    %v727 = vlaneseq
    %v728 = vshrl.u32 %v727, 7
    %v729 = vsub.s32 2, %v728
    %v730 = vrot.slane %v717, %v729
    %v731 = vlaneseq
    %v732 = vshrl.u32 %v731, 7
    %v733 = vsub.s32 3, %v732
    %v734 = vrot.slane %v717, %v733
    %v735 = vlaneseq
    %v736 = vshrl.u32 %v735, 7
    %v737 = vsub.s32 4, %v736
    %v738 = vrot.slane %v717, %v737
    %v739 = vlaneseq
    %v740 = vshrl.u32 %v739, 7
    %v741 = vsub.s32 5, %v740
    %v742 = vrot.slane %v717, %v741
    %v743 = vlaneseq
    %v744 = vshrl.u32 %v743, 7
    %v745 = vsub.s32 6, %v744
    %v746 = vrot.slane %v717, %v745
    %v747 = vlaneseq
    %v748 = vshrl.u32 %v747, 7
    %v749 = vsub.s32 7, %v748
    %v750 = vrot.slane %v717, %v749
    %v775 = vunpack.c.l.b16 %v701
    %v776 = vunpack.c.h.b16 %v701
    %v777 = vunpack.c.l.b16 %v702
    %v778 = vunpack.c.h.b16 %v702
    %v779 = vunpack.c.l.b16 %v703
    %v780 = vunpack.c.h.b16 %v703
    %v781 = vunpack.c.l.b16 %v704
    %v782 = vunpack.c.h.b16 %v704
    %v783 = vunpack.c.l.b16 %v705
    %v784 = vunpack.c.h.b16 %v705
    %v785 = vunpack.c.l.b16 %v706
    %v786 = vunpack.c.h.b16 %v706
    %v787 = vunpack.c.l.b16 %v707
    %v788 = vunpack.c.h.b16 %v707
    %v789 = vunpack.c.l.b16 %v708
    %v790 = vunpack.c.h.b16 %v708
    %v791 = vunpack.c.l.b16 %v709
    %v792 = vunpack.c.h.b16 %v709
    %v793 = vunpack.c.l.b16 %v710
    %v794 = vunpack.c.h.b16 %v710
    %v795 = vunpack.c.l.b16 %v711
    %v796 = vunpack.c.h.b16 %v711
    %v797 = vunpack.c.l.b16 %v712
    %v798 = vunpack.c.h.b16 %v712
    %v799 = vunpack.c.l.b16 %v713
    %v800 = vunpack.c.h.b16 %v713
    %v801 = vunpack.c.l.b16 %v714
    %v802 = vunpack.c.h.b16 %v714
    %v803 = vunpack.c.l.b16 %v715
    %v804 = vunpack.c.h.b16 %v715
    %v805 = vunpack.c.l.b16 %v716
    %v806 = vunpack.c.h.b16 %v716
    %v807 = vpack.c.b16 %v783, %v775
    %v808 = vpack.c.b16 %v784, %v776
    %v809 = vpack.c.b16 %v785, %v777
    %v810 = vpack.c.b16 %v786, %v778
    %v811 = vpack.c.b16 %v787, %v779
    %v812 = vpack.c.b16 %v788, %v780
    %v813 = vpack.c.b16 %v789, %v781
    %v814 = vpack.c.b16 %v790, %v782
    %v815 = vpack.c.b16 %v799, %v791
    %v816 = vpack.c.b16 %v800, %v792
    %v817 = vpack.c.b16 %v801, %v793
    %v818 = vpack.c.b16 %v802, %v794
    %v819 = vpack.c.b16 %v803, %v795
    %v820 = vpack.c.b16 %v804, %v796
    %v821 = vpack.c.b16 %v805, %v797
    %v822 = vpack.c.b16 %v806, %v798
    %v840 = vsel %vm174, %v700, 0
    %842 = vmatprep.subr.bf16.mxu0 0
    %843 = vmatpush1.bf16.msra.mxu0 0
    %844 = vmatprep.subr.bf16.mxu0 0
    %845 = vmatpush1.bf16.msra.mxu0 0
    %846 = vmatprep.subr.bf16.mxu0 0
    %847 = vmatpush1.bf16.msra.mxu0 0
    %848 = vmatprep.subr.bf16.mxu0 0
    %849 = vmatpush1.bf16.msra.mxu0 0
    %850 = vmatprep.subr.bf16.mxu0 0
    %851 = vmatpush1.bf16.msra.mxu0 0
    %852 = vmatprep.subr.bf16.mxu0 0
    %853 = vmatpush1.bf16.msra.mxu0 0
    %854 = vmatprep.subr.bf16.mxu0 %v816
    %855 = vmatpush1.bf16.msra.mxu0 %v815
    %856 = vmatprep.subr.bf16.mxu0 %v808
    %857 = vmatpush1.bf16.msra.mxu0 %v807
    %858 = vmatprep.subr.bf16.mxu0 0
    %859 = vmatpush2.bf16.msra.mxu0 0
    %860 = vmatprep.subr.bf16.mxu0 0
    %861 = vmatpush2.bf16.msra.mxu0 0
    %862 = vmatprep.subr.bf16.mxu0 0
    %863 = vmatpush2.bf16.msra.mxu0 0
    %864 = vmatprep.subr.bf16.mxu0 0
    %865 = vmatpush2.bf16.msra.mxu0 0
    %866 = vmatprep.subr.bf16.mxu0 0
    %867 = vmatpush2.bf16.msra.mxu0 0
    %868 = vmatprep.subr.bf16.mxu0 0
    %869 = vmatpush2.bf16.msra.mxu0 0
    %870 = vmatprep.subr.bf16.mxu0 0
    %871 = vmatpush2.bf16.msra.mxu0 0
    %872 = vmatprep.subr.bf16.mxu0 0
    %873 = vmatpush2.bf16.msra.mxu0 0
    %874 = vmatprep.mubr.bf16.mxu0 0
    %875 = vmatmul.mubr.bf16.gmra.mxu0 %v840
    %v876 = vpop.f32.mrf.mxu0
    %v877 = vadd.f32 %v722, %v876
    %v878 = vpop.f32.mrf.mxu0
    %v879 = vadd.f32 %v726, %v878
    %v880 = vpop.f32.mrf.mxu0
    %v881 = vadd.f32 %v722, %v880
    %v882 = vpop.f32.mrf.mxu0
    %v883 = vadd.f32 %v726, %v882
    %884 = vdwg.mxu0
    %885 = vmatprep.subr.bf16.mxu0 0
    %886 = vmatpush1.bf16.msra.mxu0 0
    %887 = vmatprep.subr.bf16.mxu0 0
    %888 = vmatpush1.bf16.msra.mxu0 0
    %889 = vmatprep.subr.bf16.mxu0 0
    %890 = vmatpush1.bf16.msra.mxu0 0
    %891 = vmatprep.subr.bf16.mxu0 0
    %892 = vmatpush1.bf16.msra.mxu0 0
    %893 = vmatprep.subr.bf16.mxu0 0
    %894 = vmatpush1.bf16.msra.mxu0 0
    %895 = vmatprep.subr.bf16.mxu0 0
    %896 = vmatpush1.bf16.msra.mxu0 0
    %897 = vmatprep.subr.bf16.mxu0 %v818
    %898 = vmatpush1.bf16.msra.mxu0 %v817
    %899 = vmatprep.subr.bf16.mxu0 %v810
    %900 = vmatpush1.bf16.msra.mxu0 %v809
    %901 = vmatprep.subr.bf16.mxu0 0
    %902 = vmatpush2.bf16.msra.mxu0 0
    %903 = vmatprep.subr.bf16.mxu0 0
    %904 = vmatpush2.bf16.msra.mxu0 0
    %905 = vmatprep.subr.bf16.mxu0 0
    %906 = vmatpush2.bf16.msra.mxu0 0
    %907 = vmatprep.subr.bf16.mxu0 0
    %908 = vmatpush2.bf16.msra.mxu0 0
    %909 = vmatprep.subr.bf16.mxu0 0
    %910 = vmatpush2.bf16.msra.mxu0 0
    %911 = vmatprep.subr.bf16.mxu0 0
    %912 = vmatpush2.bf16.msra.mxu0 0
    %913 = vmatprep.subr.bf16.mxu0 0
    %914 = vmatpush2.bf16.msra.mxu0 0
    %915 = vmatprep.subr.bf16.mxu0 0
    %916 = vmatpush2.bf16.msra.mxu0 0
    %917 = vmatprep.mubr.bf16.mxu0 0
    %918 = vmatmul.mubr.bf16.gmra.mxu0 %v840
    %v919 = vpop.f32.mrf.mxu0
    %v920 = vadd.f32 %v730, %v919
    %v921 = vpop.f32.mrf.mxu0
    %v922 = vadd.f32 %v734, %v921
    %v923 = vpop.f32.mrf.mxu0
    %v924 = vadd.f32 %v730, %v923
    %v925 = vpop.f32.mrf.mxu0
    %v926 = vadd.f32 %v734, %v925
    %927 = vdwg.mxu0
    %928 = vmatprep.subr.bf16.mxu0 0
    %929 = vmatpush1.bf16.msra.mxu0 0
    %930 = vmatprep.subr.bf16.mxu0 0
    %931 = vmatpush1.bf16.msra.mxu0 0
    %932 = vmatprep.subr.bf16.mxu0 0
    %933 = vmatpush1.bf16.msra.mxu0 0
    %934 = vmatprep.subr.bf16.mxu0 0
    %935 = vmatpush1.bf16.msra.mxu0 0
    %936 = vmatprep.subr.bf16.mxu0 0
    %937 = vmatpush1.bf16.msra.mxu0 0
    %938 = vmatprep.subr.bf16.mxu0 0
    %939 = vmatpush1.bf16.msra.mxu0 0
    %940 = vmatprep.subr.bf16.mxu0 %v820
    %941 = vmatpush1.bf16.msra.mxu0 %v819
    %942 = vmatprep.subr.bf16.mxu0 %v812
    %943 = vmatpush1.bf16.msra.mxu0 %v811
    %944 = vmatprep.subr.bf16.mxu0 0
    %945 = vmatpush2.bf16.msra.mxu0 0
    %946 = vmatprep.subr.bf16.mxu0 0
    %947 = vmatpush2.bf16.msra.mxu0 0
    %948 = vmatprep.subr.bf16.mxu0 0
    %949 = vmatpush2.bf16.msra.mxu0 0
    %950 = vmatprep.subr.bf16.mxu0 0
    %951 = vmatpush2.bf16.msra.mxu0 0
    %952 = vmatprep.subr.bf16.mxu0 0
    %953 = vmatpush2.bf16.msra.mxu0 0
    %954 = vmatprep.subr.bf16.mxu0 0
    %955 = vmatpush2.bf16.msra.mxu0 0
    %956 = vmatprep.subr.bf16.mxu0 0
    %957 = vmatpush2.bf16.msra.mxu0 0
    %958 = vmatprep.subr.bf16.mxu0 0
    %959 = vmatpush2.bf16.msra.mxu0 0
    %960 = vmatprep.mubr.bf16.mxu0 0
    %961 = vmatmul.mubr.bf16.gmra.mxu0 %v840
    %v962 = vpop.f32.mrf.mxu0
    %v963 = vadd.f32 %v738, %v962
    %v964 = vpop.f32.mrf.mxu0
    %v965 = vadd.f32 %v742, %v964
    %v966 = vpop.f32.mrf.mxu0
    %v967 = vadd.f32 %v738, %v966
    %v968 = vpop.f32.mrf.mxu0
    %v969 = vadd.f32 %v742, %v968
    %970 = vdwg.mxu0
    %971 = vmatprep.subr.bf16.mxu0 0
    %972 = vmatpush1.bf16.msra.mxu0 0
    %973 = vmatprep.subr.bf16.mxu0 0
    %974 = vmatpush1.bf16.msra.mxu0 0
    %975 = vmatprep.subr.bf16.mxu0 0
    %976 = vmatpush1.bf16.msra.mxu0 0
    %977 = vmatprep.subr.bf16.mxu0 0
    %978 = vmatpush1.bf16.msra.mxu0 0
    %979 = vmatprep.subr.bf16.mxu0 0
    %980 = vmatpush1.bf16.msra.mxu0 0
    %981 = vmatprep.subr.bf16.mxu0 0
    %982 = vmatpush1.bf16.msra.mxu0 0
    %983 = vmatprep.subr.bf16.mxu0 %v822
    %984 = vmatpush1.bf16.msra.mxu0 %v821
    %985 = vmatprep.subr.bf16.mxu0 %v814
    %986 = vmatpush1.bf16.msra.mxu0 %v813
    %987 = vmatprep.subr.bf16.mxu0 0
    %988 = vmatpush2.bf16.msra.mxu0 0
    %989 = vmatprep.subr.bf16.mxu0 0
    %990 = vmatpush2.bf16.msra.mxu0 0
    %991 = vmatprep.subr.bf16.mxu0 0
    %992 = vmatpush2.bf16.msra.mxu0 0
    %993 = vmatprep.subr.bf16.mxu0 0
    %994 = vmatpush2.bf16.msra.mxu0 0
    %995 = vmatprep.subr.bf16.mxu0 0
    %996 = vmatpush2.bf16.msra.mxu0 0
    %997 = vmatprep.subr.bf16.mxu0 0
    %998 = vmatpush2.bf16.msra.mxu0 0
    %999 = vmatprep.subr.bf16.mxu0 0
    %1000 = vmatpush2.bf16.msra.mxu0 0
    %1001 = vmatprep.subr.bf16.mxu0 0
    %1002 = vmatpush2.bf16.msra.mxu0 0
    %1003 = vmatprep.mubr.bf16.mxu0 0
    %1004 = vmatmul.mubr.bf16.gmra.mxu0 %v840
    %v1005 = vpop.f32.mrf.mxu0
    %v1006 = vadd.f32 %v746, %v1005
    %v1007 = vpop.f32.mrf.mxu0
    %v1008 = vadd.f32 %v750, %v1007
    %v1009 = vpop.f32.mrf.mxu0
    %v1010 = vadd.f32 %v746, %v1009
    %v1011 = vpop.f32.mrf.mxu0
    %v1012 = vadd.f32 %v750, %v1011
    %1013 = vdwg.mxu0
    %v1014 = vmax.f32 %v877, 0.0
    %v1015 = vmax.f32 %v879, 0.0
    %v1016 = vmax.f32 %v920, 0.0
    %v1017 = vmax.f32 %v922, 0.0
    %v1018 = vmax.f32 %v963, 0.0
    %v1019 = vmax.f32 %v965, 0.0
    %v1020 = vmax.f32 %v1006, 0.0
    %v1021 = vmax.f32 %v1008, 0.0
    %v1022 = vmax.f32 %v881, 0.0
    %v1023 = vmax.f32 %v883, 0.0
    %v1024 = vmax.f32 %v924, 0.0
    %v1025 = vmax.f32 %v926, 0.0
    %v1026 = vmax.f32 %v967, 0.0
    %v1027 = vmax.f32 %v969, 0.0
    %v1028 = vmax.f32 %v1010, 0.0
    %v1029 = vmax.f32 %v1012, 0.0
    %v1030 = vpack.c.bf16 %v1022, %v1014
    %v1031 = vpack.c.bf16 %v1023, %v1015
    %v1032 = vpack.c.bf16 %v1024, %v1016
    %v1033 = vpack.c.bf16 %v1025, %v1017
    %v1034 = vpack.c.bf16 %v1026, %v1018
    %v1035 = vpack.c.bf16 %v1027, %v1019
    %v1036 = vpack.c.bf16 %v1028, %v1020
    %v1037 = vpack.c.bf16 %v1029, %v1021
    %v1038 = vld [vmem:[%s12] sm:$0xf]
    %v1039 = vld [vmem:[%s12 + $0x4] sm:$0xf]
    %v1040 = vld [vmem:[%s12 + $0x8] sm:$0xf]
    %v1041 = vld [vmem:[%s12 + $0xc] sm:$0xf]
    %v1042 = vld [vmem:[%s12 + $0x10] sm:$0xf]
    %v1043 = vld [vmem:[%s12 + $0x14] sm:$0xf]
    %v1044 = vld [vmem:[%s12 + $0x18] sm:$0xf]
    %v1045 = vld [vmem:[%s12 + $0x1c] sm:$0xf]
    %v1046 = vld [vmem:[%s12 + $0x20] sm:$0xf]
    %v1047 = vld [vmem:[%s12 + $0x24] sm:$0xf]
    %v1048 = vld [vmem:[%s12 + $0x28] sm:$0xf]
    %v1049 = vld [vmem:[%s12 + $0x2c] sm:$0xf]
    %v1050 = vld [vmem:[%s12 + $0x30] sm:$0xf]
    %v1051 = vld [vmem:[%s12 + $0x34] sm:$0xf]
    %v1052 = vld [vmem:[%s12 + $0x38] sm:$0xf]
    %v1053 = vld [vmem:[%s12 + $0x3c] sm:$0xf]
    %v1054 = vld [vmem:[%s12 + $0x40] sm:$0xf]
    %v1055 = vld [vmem:[%s12 + $0x44] sm:$0xf]
    %v1056 = vld [vmem:[%s12 + $0x48] sm:$0xf]
    %v1057 = vld [vmem:[%s12 + $0x4c] sm:$0xf]
    %v1058 = vld [vmem:[%s12 + $0x50] sm:$0xf]
    %v1059 = vld [vmem:[%s12 + $0x54] sm:$0xf]
    %v1060 = vld [vmem:[%s12 + $0x58] sm:$0xf]
    %v1061 = vld [vmem:[%s12 + $0x5c] sm:$0xf]
    %v1062 = vld [vmem:[%s12 + $0x60] sm:$0xf]
    %v1063 = vld [vmem:[%s12 + $0x64] sm:$0xf]
    %v1064 = vld [vmem:[%s12 + $0x68] sm:$0xf]
    %v1065 = vld [vmem:[%s12 + $0x6c] sm:$0xf]
    %v1066 = vld [vmem:[%s12 + $0x70] sm:$0xf]
    %v1067 = vld [vmem:[%s12 + $0x74] sm:$0xf]
    %v1068 = vld [vmem:[%s12 + $0x78] sm:$0xf]
    %v1069 = vld [vmem:[%s12 + $0x7c] sm:$0xf]
    %v1070 = vld [vmem:[%s12 + $0x80] sm:$0xf]
    %v1071 = vld [vmem:[%s12 + $0x84] sm:$0xf]
    %v1072 = vld [vmem:[%s12 + $0x88] sm:$0xf]
    %v1073 = vld [vmem:[%s12 + $0x8c] sm:$0xf]
    %v1074 = vld [vmem:[%s12 + $0x90] sm:$0xf]
    %v1075 = vld [vmem:[%s12 + $0x94] sm:$0xf]
    %v1076 = vld [vmem:[%s12 + $0x98] sm:$0xf]
    %v1077 = vld [vmem:[%s12 + $0x9c] sm:$0xf]
    %v1078 = vld [vmem:[%s12 + $0xa0] sm:$0xf]
    %v1079 = vld [vmem:[%s12 + $0xa4] sm:$0xf]
    %v1080 = vld [vmem:[%s12 + $0xa8] sm:$0xf]
    %v1081 = vld [vmem:[%s12 + $0xac] sm:$0xf]
    %v1082 = vld [vmem:[%s12 + $0xb0] sm:$0xf]
    %v1083 = vld [vmem:[%s12 + $0xb4] sm:$0xf]
    %v1084 = vld [vmem:[%s12 + $0xb8] sm:$0xf]
    %v1085 = vld [vmem:[%s12 + $0xbc] sm:$0xf]
    %v1086 = vld [vmem:[%s12 + $0xc0] sm:$0xf]
    %v1087 = vld [vmem:[%s12 + $0xc4] sm:$0xf]
    %v1088 = vld [vmem:[%s12 + $0xc8] sm:$0xf]
    %v1089 = vld [vmem:[%s12 + $0xcc] sm:$0xf]
    %v1090 = vld [vmem:[%s12 + $0xd0] sm:$0xf]
    %v1091 = vld [vmem:[%s12 + $0xd4] sm:$0xf]
    %v1092 = vld [vmem:[%s12 + $0xd8] sm:$0xf]
    %v1093 = vld [vmem:[%s12 + $0xdc] sm:$0xf]
    %v1094 = vld [vmem:[%s12 + $0xe0] sm:$0xf]
    %v1095 = vld [vmem:[%s12 + $0xe4] sm:$0xf]
    %v1096 = vld [vmem:[%s12 + $0xe8] sm:$0xf]
    %v1097 = vld [vmem:[%s12 + $0xec] sm:$0xf]
    %v1098 = vld [vmem:[%s12 + $0xf0] sm:$0xf]
    %v1099 = vld [vmem:[%s12 + $0xf4] sm:$0xf]
    %v1100 = vld [vmem:[%s12 + $0xf8] sm:$0xf]
    %v1101 = vld [vmem:[%s12 + $0xfc] sm:$0xf]
    %v1102 = vld [vmem:[%s12 + $0x100] sm:$0xf]
    %v1103 = vld [vmem:[%s12 + $0x104] sm:$0xf]
    %v1104 = vld [vmem:[%s12 + $0x108] sm:$0xf]
    %v1105 = vld [vmem:[%s12 + $0x10c] sm:$0xf]
    %v1106 = vld [vmem:[%s12 + $0x110] sm:$0xf]
    %v1107 = vld [vmem:[%s12 + $0x114] sm:$0xf]
    %v1108 = vld [vmem:[%s12 + $0x118] sm:$0xf]
    %v1109 = vld [vmem:[%s12 + $0x11c] sm:$0xf]
    %v1110 = vld [vmem:[%s12 + $0x120] sm:$0xf]
    %v1111 = vld [vmem:[%s12 + $0x124] sm:$0xf]
    %v1112 = vld [vmem:[%s12 + $0x128] sm:$0xf]
    %v1113 = vld [vmem:[%s12 + $0x12c] sm:$0xf]
    %v1114 = vld [vmem:[%s12 + $0x130] sm:$0xf]
    %v1115 = vld [vmem:[%s12 + $0x134] sm:$0xf]
    %v1116 = vld [vmem:[%s12 + $0x138] sm:$0xf]
    %v1117 = vld [vmem:[%s12 + $0x13c] sm:$0xf]
    %v1118 = vld [vmem:[%s12 + $0x140] sm:$0xf]
    %v1119 = vld [vmem:[%s12 + $0x144] sm:$0xf]
    %v1120 = vld [vmem:[%s12 + $0x148] sm:$0xf]
    %v1121 = vld [vmem:[%s12 + $0x14c] sm:$0xf]
    %v1122 = vld [vmem:[%s12 + $0x150] sm:$0xf]
    %v1123 = vld [vmem:[%s12 + $0x154] sm:$0xf]
    %v1124 = vld [vmem:[%s12 + $0x158] sm:$0xf]
    %v1125 = vld [vmem:[%s12 + $0x15c] sm:$0xf]
    %v1126 = vld [vmem:[%s12 + $0x160] sm:$0xf]
    %v1127 = vld [vmem:[%s12 + $0x164] sm:$0xf]
    %v1128 = vld [vmem:[%s12 + $0x168] sm:$0xf]
    %v1129 = vld [vmem:[%s12 + $0x16c] sm:$0xf]
    %v1130 = vld [vmem:[%s12 + $0x170] sm:$0xf]
    %v1131 = vld [vmem:[%s12 + $0x174] sm:$0xf]
    %v1132 = vld [vmem:[%s12 + $0x178] sm:$0xf]
    %v1133 = vld [vmem:[%s12 + $0x17c] sm:$0xf]
    %v1134 = vld [vmem:[%s12 + $0x180] sm:$0xf]
    %v1135 = vld [vmem:[%s12 + $0x184] sm:$0xf]
    %v1136 = vld [vmem:[%s12 + $0x188] sm:$0xf]
    %v1137 = vld [vmem:[%s12 + $0x18c] sm:$0xf]
    %v1138 = vld [vmem:[%s12 + $0x190] sm:$0xf]
    %v1139 = vld [vmem:[%s12 + $0x194] sm:$0xf]
    %v1140 = vld [vmem:[%s12 + $0x198] sm:$0xf]
    %v1141 = vld [vmem:[%s12 + $0x19c] sm:$0xf]
    %v1142 = vld [vmem:[%s12 + $0x1a0] sm:$0xf]
    %v1143 = vld [vmem:[%s12 + $0x1a4] sm:$0xf]
    %v1144 = vld [vmem:[%s12 + $0x1a8] sm:$0xf]
    %v1145 = vld [vmem:[%s12 + $0x1ac] sm:$0xf]
    %v1146 = vld [vmem:[%s12 + $0x1b0] sm:$0xf]
    %v1147 = vld [vmem:[%s12 + $0x1b4] sm:$0xf]
    %v1148 = vld [vmem:[%s12 + $0x1b8] sm:$0xf]
    %v1149 = vld [vmem:[%s12 + $0x1bc] sm:$0xf]
    %v1150 = vld [vmem:[%s12 + $0x1c0] sm:$0xf]
    %v1151 = vld [vmem:[%s12 + $0x1c4] sm:$0xf]
    %v1152 = vld [vmem:[%s12 + $0x1c8] sm:$0xf]
    %v1153 = vld [vmem:[%s12 + $0x1cc] sm:$0xf]
    %v1154 = vld [vmem:[%s12 + $0x1d0] sm:$0xf]
    %v1155 = vld [vmem:[%s12 + $0x1d4] sm:$0xf]
    %v1156 = vld [vmem:[%s12 + $0x1d8] sm:$0xf]
    %v1157 = vld [vmem:[%s12 + $0x1dc] sm:$0xf]
    %v1158 = vld [vmem:[%s12 + $0x1e0] sm:$0xf]
    %v1159 = vld [vmem:[%s12 + $0x1e4] sm:$0xf]
    %v1160 = vld [vmem:[%s12 + $0x1e8] sm:$0xf]
    %v1161 = vld [vmem:[%s12 + $0x1ec] sm:$0xf]
    %v1162 = vld [vmem:[%s12 + $0x1f0] sm:$0xf]
    %v1163 = vld [vmem:[%s12 + $0x1f4] sm:$0xf]
    %v1164 = vld [vmem:[%s12 + $0x1f8] sm:$0xf]
    %v1165 = vld [vmem:[%s12 + $0x1fc] sm:$0xf]
    %v1166 = vld [vmem:[%s13] sm:$0x1]
    %v1168 = vlaneseq
    %v1169 = vshrl.u32 %v1168, 7
    %v1170 = vsub.s32 0, %v1169
    %v1171 = vrot.slane %v1166, %v1170
    %v1301 = vunpack.c.l.b16 %v1038
    %v1302 = vunpack.c.l.b16 %v1039
    %v1303 = vunpack.c.l.b16 %v1040
    %v1304 = vunpack.c.l.b16 %v1041
    %v1305 = vunpack.c.l.b16 %v1042
    %v1306 = vunpack.c.l.b16 %v1043
    %v1307 = vunpack.c.l.b16 %v1044
    %v1308 = vunpack.c.l.b16 %v1045
    %v1309 = vunpack.c.l.b16 %v1046
    %v1310 = vunpack.c.l.b16 %v1047
    %v1311 = vunpack.c.l.b16 %v1048
    %v1312 = vunpack.c.l.b16 %v1049
    %v1313 = vunpack.c.l.b16 %v1050
    %v1314 = vunpack.c.l.b16 %v1051
    %v1315 = vunpack.c.l.b16 %v1052
    %v1316 = vunpack.c.l.b16 %v1053
    %v1317 = vunpack.c.l.b16 %v1054
    %v1318 = vunpack.c.l.b16 %v1055
    %v1319 = vunpack.c.l.b16 %v1056
    %v1320 = vunpack.c.l.b16 %v1057
    %v1321 = vunpack.c.l.b16 %v1058
    %v1322 = vunpack.c.l.b16 %v1059
    %v1323 = vunpack.c.l.b16 %v1060
    %v1324 = vunpack.c.l.b16 %v1061
    %v1325 = vunpack.c.l.b16 %v1062
    %v1326 = vunpack.c.l.b16 %v1063
    %v1327 = vunpack.c.l.b16 %v1064
    %v1328 = vunpack.c.l.b16 %v1065
    %v1329 = vunpack.c.l.b16 %v1066
    %v1330 = vunpack.c.l.b16 %v1067
    %v1331 = vunpack.c.l.b16 %v1068
    %v1332 = vunpack.c.l.b16 %v1069
    %v1333 = vunpack.c.l.b16 %v1070
    %v1334 = vunpack.c.l.b16 %v1071
    %v1335 = vunpack.c.l.b16 %v1072
    %v1336 = vunpack.c.l.b16 %v1073
    %v1337 = vunpack.c.l.b16 %v1074
    %v1338 = vunpack.c.l.b16 %v1075
    %v1339 = vunpack.c.l.b16 %v1076
    %v1340 = vunpack.c.l.b16 %v1077
    %v1341 = vunpack.c.l.b16 %v1078
    %v1342 = vunpack.c.l.b16 %v1079
    %v1343 = vunpack.c.l.b16 %v1080
    %v1344 = vunpack.c.l.b16 %v1081
    %v1345 = vunpack.c.l.b16 %v1082
    %v1346 = vunpack.c.l.b16 %v1083
    %v1347 = vunpack.c.l.b16 %v1084
    %v1348 = vunpack.c.l.b16 %v1085
    %v1349 = vunpack.c.l.b16 %v1086
    %v1350 = vunpack.c.l.b16 %v1087
    %v1351 = vunpack.c.l.b16 %v1088
    %v1352 = vunpack.c.l.b16 %v1089
    %v1353 = vunpack.c.l.b16 %v1090
    %v1354 = vunpack.c.l.b16 %v1091
    %v1355 = vunpack.c.l.b16 %v1092
    %v1356 = vunpack.c.l.b16 %v1093
    %v1357 = vunpack.c.l.b16 %v1094
    %v1358 = vunpack.c.l.b16 %v1095
    %v1359 = vunpack.c.l.b16 %v1096
    %v1360 = vunpack.c.l.b16 %v1097
    %v1361 = vunpack.c.l.b16 %v1098
    %v1362 = vunpack.c.l.b16 %v1099
    %v1363 = vunpack.c.l.b16 %v1100
    %v1364 = vunpack.c.l.b16 %v1101
    %v1365 = vunpack.c.l.b16 %v1102
    %v1366 = vunpack.c.l.b16 %v1103
    %v1367 = vunpack.c.l.b16 %v1104
    %v1368 = vunpack.c.l.b16 %v1105
    %v1369 = vunpack.c.l.b16 %v1106
    %v1370 = vunpack.c.l.b16 %v1107
    %v1371 = vunpack.c.l.b16 %v1108
    %v1372 = vunpack.c.l.b16 %v1109
    %v1373 = vunpack.c.l.b16 %v1110
    %v1374 = vunpack.c.l.b16 %v1111
    %v1375 = vunpack.c.l.b16 %v1112
    %v1376 = vunpack.c.l.b16 %v1113
    %v1377 = vunpack.c.l.b16 %v1114
    %v1378 = vunpack.c.l.b16 %v1115
    %v1379 = vunpack.c.l.b16 %v1116
    %v1380 = vunpack.c.l.b16 %v1117
    %v1381 = vunpack.c.l.b16 %v1118
    %v1382 = vunpack.c.l.b16 %v1119
    %v1383 = vunpack.c.l.b16 %v1120
    %v1384 = vunpack.c.l.b16 %v1121
    %v1385 = vunpack.c.l.b16 %v1122
    %v1386 = vunpack.c.l.b16 %v1123
    %v1387 = vunpack.c.l.b16 %v1124
    %v1388 = vunpack.c.l.b16 %v1125
    %v1389 = vunpack.c.l.b16 %v1126
    %v1390 = vunpack.c.l.b16 %v1127
    %v1391 = vunpack.c.l.b16 %v1128
    %v1392 = vunpack.c.l.b16 %v1129
    %v1393 = vunpack.c.l.b16 %v1130
    %v1394 = vunpack.c.l.b16 %v1131
    %v1395 = vunpack.c.l.b16 %v1132
    %v1396 = vunpack.c.l.b16 %v1133
    %v1397 = vunpack.c.l.b16 %v1134
    %v1398 = vunpack.c.l.b16 %v1135
    %v1399 = vunpack.c.l.b16 %v1136
    %v1400 = vunpack.c.l.b16 %v1137
    %v1401 = vunpack.c.l.b16 %v1138
    %v1402 = vunpack.c.l.b16 %v1139
    %v1403 = vunpack.c.l.b16 %v1140
    %v1404 = vunpack.c.l.b16 %v1141
    %v1405 = vunpack.c.l.b16 %v1142
    %v1406 = vunpack.c.l.b16 %v1143
    %v1407 = vunpack.c.l.b16 %v1144
    %v1408 = vunpack.c.l.b16 %v1145
    %v1409 = vunpack.c.l.b16 %v1146
    %v1410 = vunpack.c.l.b16 %v1147
    %v1411 = vunpack.c.l.b16 %v1148
    %v1412 = vunpack.c.l.b16 %v1149
    %v1413 = vunpack.c.l.b16 %v1150
    %v1414 = vunpack.c.l.b16 %v1151
    %v1415 = vunpack.c.l.b16 %v1152
    %v1416 = vunpack.c.l.b16 %v1153
    %v1417 = vunpack.c.l.b16 %v1154
    %v1418 = vunpack.c.l.b16 %v1155
    %v1419 = vunpack.c.l.b16 %v1156
    %v1420 = vunpack.c.l.b16 %v1157
    %v1421 = vunpack.c.l.b16 %v1158
    %v1422 = vunpack.c.l.b16 %v1159
    %v1423 = vunpack.c.l.b16 %v1160
    %v1424 = vunpack.c.l.b16 %v1161
    %v1425 = vunpack.c.l.b16 %v1162
    %v1426 = vunpack.c.l.b16 %v1163
    %v1427 = vunpack.c.l.b16 %v1164
    %v1428 = vunpack.c.l.b16 %v1165
    %v1429 = vpack.c.b16 %v1302, %v1301
    %v1430 = vpack.c.b16 %v1304, %v1303
    %v1431 = vpack.c.b16 %v1306, %v1305
    %v1432 = vpack.c.b16 %v1308, %v1307
    %v1433 = vpack.c.b16 %v1310, %v1309
    %v1434 = vpack.c.b16 %v1312, %v1311
    %v1435 = vpack.c.b16 %v1314, %v1313
    %v1436 = vpack.c.b16 %v1316, %v1315
    %v1437 = vpack.c.b16 %v1318, %v1317
    %v1438 = vpack.c.b16 %v1320, %v1319
    %v1439 = vpack.c.b16 %v1322, %v1321
    %v1440 = vpack.c.b16 %v1324, %v1323
    %v1441 = vpack.c.b16 %v1326, %v1325
    %v1442 = vpack.c.b16 %v1328, %v1327
    %v1443 = vpack.c.b16 %v1330, %v1329
    %v1444 = vpack.c.b16 %v1332, %v1331
    %v1445 = vpack.c.b16 %v1334, %v1333
    %v1446 = vpack.c.b16 %v1336, %v1335
    %v1447 = vpack.c.b16 %v1338, %v1337
    %v1448 = vpack.c.b16 %v1340, %v1339
    %v1449 = vpack.c.b16 %v1342, %v1341
    %v1450 = vpack.c.b16 %v1344, %v1343
    %v1451 = vpack.c.b16 %v1346, %v1345
    %v1452 = vpack.c.b16 %v1348, %v1347
    %v1453 = vpack.c.b16 %v1350, %v1349
    %v1454 = vpack.c.b16 %v1352, %v1351
    %v1455 = vpack.c.b16 %v1354, %v1353
    %v1456 = vpack.c.b16 %v1356, %v1355
    %v1457 = vpack.c.b16 %v1358, %v1357
    %v1458 = vpack.c.b16 %v1360, %v1359
    %v1459 = vpack.c.b16 %v1362, %v1361
    %v1460 = vpack.c.b16 %v1364, %v1363
    %v1461 = vpack.c.b16 %v1366, %v1365
    %v1462 = vpack.c.b16 %v1368, %v1367
    %v1463 = vpack.c.b16 %v1370, %v1369
    %v1464 = vpack.c.b16 %v1372, %v1371
    %v1465 = vpack.c.b16 %v1374, %v1373
    %v1466 = vpack.c.b16 %v1376, %v1375
    %v1467 = vpack.c.b16 %v1378, %v1377
    %v1468 = vpack.c.b16 %v1380, %v1379
    %v1469 = vpack.c.b16 %v1382, %v1381
    %v1470 = vpack.c.b16 %v1384, %v1383
    %v1471 = vpack.c.b16 %v1386, %v1385
    %v1472 = vpack.c.b16 %v1388, %v1387
    %v1473 = vpack.c.b16 %v1390, %v1389
    %v1474 = vpack.c.b16 %v1392, %v1391
    %v1475 = vpack.c.b16 %v1394, %v1393
    %v1476 = vpack.c.b16 %v1396, %v1395
    %v1477 = vpack.c.b16 %v1398, %v1397
    %v1478 = vpack.c.b16 %v1400, %v1399
    %v1479 = vpack.c.b16 %v1402, %v1401
    %v1480 = vpack.c.b16 %v1404, %v1403
    %v1481 = vpack.c.b16 %v1406, %v1405
    %v1482 = vpack.c.b16 %v1408, %v1407
    %v1483 = vpack.c.b16 %v1410, %v1409
    %v1484 = vpack.c.b16 %v1412, %v1411
    %v1485 = vpack.c.b16 %v1414, %v1413
    %v1486 = vpack.c.b16 %v1416, %v1415
    %v1487 = vpack.c.b16 %v1418, %v1417
    %v1488 = vpack.c.b16 %v1420, %v1419
    %v1489 = vpack.c.b16 %v1422, %v1421
    %v1490 = vpack.c.b16 %v1424, %v1423
    %v1491 = vpack.c.b16 %v1426, %v1425
    %v1492 = vpack.c.b16 %v1428, %v1427
    %1557 = vmatprep.subr.bf16.mxu0 0
    %1558 = vmatpush1.bf16.msra.mxu0 %v1436
    %1559 = vmatprep.subr.bf16.mxu0 0
    %1560 = vmatpush1.bf16.msra.mxu0 %v1435
    %1561 = vmatprep.subr.bf16.mxu0 0
    %1562 = vmatpush1.bf16.msra.mxu0 %v1434
    %1563 = vmatprep.subr.bf16.mxu0 0
    %1564 = vmatpush1.bf16.msra.mxu0 %v1433
    %1565 = vmatprep.subr.bf16.mxu0 0
    %1566 = vmatpush1.bf16.msra.mxu0 %v1432
    %1567 = vmatprep.subr.bf16.mxu0 0
    %1568 = vmatpush1.bf16.msra.mxu0 %v1431
    %1569 = vmatprep.subr.bf16.mxu0 0
    %1570 = vmatpush1.bf16.msra.mxu0 %v1430
    %1571 = vmatprep.subr.bf16.mxu0 0
    %1572 = vmatpush1.bf16.msra.mxu0 %v1429
    %1573 = vmatprep.subr.bf16.mxu0 0
    %1574 = vmatpush2.bf16.msra.mxu0 %v1444
    %1575 = vmatprep.subr.bf16.mxu0 0
    %1576 = vmatpush2.bf16.msra.mxu0 %v1443
    %1577 = vmatprep.subr.bf16.mxu0 0
    %1578 = vmatpush2.bf16.msra.mxu0 %v1442
    %1579 = vmatprep.subr.bf16.mxu0 0
    %1580 = vmatpush2.bf16.msra.mxu0 %v1441
    %1581 = vmatprep.subr.bf16.mxu0 0
    %1582 = vmatpush2.bf16.msra.mxu0 %v1440
    %1583 = vmatprep.subr.bf16.mxu0 0
    %1584 = vmatpush2.bf16.msra.mxu0 %v1439
    %1585 = vmatprep.subr.bf16.mxu0 0
    %1586 = vmatpush2.bf16.msra.mxu0 %v1438
    %1587 = vmatprep.subr.bf16.mxu0 0
    %1588 = vmatpush2.bf16.msra.mxu0 %v1437
    %1589 = vmatprep.mubr.bf16.mxu0 %v1031
    %1590 = vmatmul.mubr.bf16.gmra.mxu0 %v1030
    %v1591 = vpop.f32.mrf.mxu0
    %v1592 = vadd.f32 %v1171, %v1591
    %v1593 = vpop.f32.mrf.mxu0
    %v1594 = vpop.f32.mrf.mxu0
    %v1595 = vadd.f32 %v1171, %v1594
    %v1596 = vpop.f32.mrf.mxu0
    %1597 = vdwg.mxu0
    %1598 = vmatprep.subr.bf16.mxu0 0
    %1599 = vmatpush1.bf16.msra.mxu0 %v1452
    %1600 = vmatprep.subr.bf16.mxu0 0
    %1601 = vmatpush1.bf16.msra.mxu0 %v1451
    %1602 = vmatprep.subr.bf16.mxu0 0
    %1603 = vmatpush1.bf16.msra.mxu0 %v1450
    %1604 = vmatprep.subr.bf16.mxu0 0
    %1605 = vmatpush1.bf16.msra.mxu0 %v1449
    %1606 = vmatprep.subr.bf16.mxu0 0
    %1607 = vmatpush1.bf16.msra.mxu0 %v1448
    %1608 = vmatprep.subr.bf16.mxu0 0
    %1609 = vmatpush1.bf16.msra.mxu0 %v1447
    %1610 = vmatprep.subr.bf16.mxu0 0
    %1611 = vmatpush1.bf16.msra.mxu0 %v1446
    %1612 = vmatprep.subr.bf16.mxu0 0
    %1613 = vmatpush1.bf16.msra.mxu0 %v1445
    %1614 = vmatprep.subr.bf16.mxu0 0
    %1615 = vmatpush2.bf16.msra.mxu0 %v1460
    %1616 = vmatprep.subr.bf16.mxu0 0
    %1617 = vmatpush2.bf16.msra.mxu0 %v1459
    %1618 = vmatprep.subr.bf16.mxu0 0
    %1619 = vmatpush2.bf16.msra.mxu0 %v1458
    %1620 = vmatprep.subr.bf16.mxu0 0
    %1621 = vmatpush2.bf16.msra.mxu0 %v1457
    %1622 = vmatprep.subr.bf16.mxu0 0
    %1623 = vmatpush2.bf16.msra.mxu0 %v1456
    %1624 = vmatprep.subr.bf16.mxu0 0
    %1625 = vmatpush2.bf16.msra.mxu0 %v1455
    %1626 = vmatprep.subr.bf16.mxu0 0
    %1627 = vmatpush2.bf16.msra.mxu0 %v1454
    %1628 = vmatprep.subr.bf16.mxu0 0
    %1629 = vmatpush2.bf16.msra.mxu0 %v1453
    %1630 = vmatprep.mubr.bf16.mxu0 %v1033
    %1631 = vmatmul.mubr.bf16.gmra.mxu0 %v1032
    %v1632 = vpop.f32.mrf.mxu0
    %v1633 = vadd.f32 %v1592, %v1632
    %v1634 = vpop.f32.mrf.mxu0
    %v1635 = vpop.f32.mrf.mxu0
    %v1636 = vadd.f32 %v1595, %v1635
    %v1637 = vpop.f32.mrf.mxu0
    %1638 = vdwg.mxu0
    %1639 = vmatprep.subr.bf16.mxu0 0
    %1640 = vmatpush1.bf16.msra.mxu0 %v1468
    %1641 = vmatprep.subr.bf16.mxu0 0
    %1642 = vmatpush1.bf16.msra.mxu0 %v1467
    %1643 = vmatprep.subr.bf16.mxu0 0
    %1644 = vmatpush1.bf16.msra.mxu0 %v1466
    %1645 = vmatprep.subr.bf16.mxu0 0
    %1646 = vmatpush1.bf16.msra.mxu0 %v1465
    %1647 = vmatprep.subr.bf16.mxu0 0
    %1648 = vmatpush1.bf16.msra.mxu0 %v1464
    %1649 = vmatprep.subr.bf16.mxu0 0
    %1650 = vmatpush1.bf16.msra.mxu0 %v1463
    %1651 = vmatprep.subr.bf16.mxu0 0
    %1652 = vmatpush1.bf16.msra.mxu0 %v1462
    %1653 = vmatprep.subr.bf16.mxu0 0
    %1654 = vmatpush1.bf16.msra.mxu0 %v1461
    %1655 = vmatprep.subr.bf16.mxu0 0
    %1656 = vmatpush2.bf16.msra.mxu0 %v1476
    %1657 = vmatprep.subr.bf16.mxu0 0
    %1658 = vmatpush2.bf16.msra.mxu0 %v1475
    %1659 = vmatprep.subr.bf16.mxu0 0
    %1660 = vmatpush2.bf16.msra.mxu0 %v1474
    %1661 = vmatprep.subr.bf16.mxu0 0
    %1662 = vmatpush2.bf16.msra.mxu0 %v1473
    %1663 = vmatprep.subr.bf16.mxu0 0
    %1664 = vmatpush2.bf16.msra.mxu0 %v1472
    %1665 = vmatprep.subr.bf16.mxu0 0
    %1666 = vmatpush2.bf16.msra.mxu0 %v1471
    %1667 = vmatprep.subr.bf16.mxu0 0
    %1668 = vmatpush2.bf16.msra.mxu0 %v1470
    %1669 = vmatprep.subr.bf16.mxu0 0
    %1670 = vmatpush2.bf16.msra.mxu0 %v1469
    %1671 = vmatprep.mubr.bf16.mxu0 %v1035
    %1672 = vmatmul.mubr.bf16.gmra.mxu0 %v1034
    %v1673 = vpop.f32.mrf.mxu0
    %v1674 = vadd.f32 %v1633, %v1673
    %v1675 = vpop.f32.mrf.mxu0
    %v1676 = vpop.f32.mrf.mxu0
    %v1677 = vadd.f32 %v1636, %v1676
    %v1678 = vpop.f32.mrf.mxu0
    %1679 = vdwg.mxu0
    %1680 = vmatprep.subr.bf16.mxu0 0
    %1681 = vmatpush1.bf16.msra.mxu0 %v1484
    %1682 = vmatprep.subr.bf16.mxu0 0
    %1683 = vmatpush1.bf16.msra.mxu0 %v1483
    %1684 = vmatprep.subr.bf16.mxu0 0
    %1685 = vmatpush1.bf16.msra.mxu0 %v1482
    %1686 = vmatprep.subr.bf16.mxu0 0
    %1687 = vmatpush1.bf16.msra.mxu0 %v1481
    %1688 = vmatprep.subr.bf16.mxu0 0
    %1689 = vmatpush1.bf16.msra.mxu0 %v1480
    %1690 = vmatprep.subr.bf16.mxu0 0
    %1691 = vmatpush1.bf16.msra.mxu0 %v1479
    %1692 = vmatprep.subr.bf16.mxu0 0
    %1693 = vmatpush1.bf16.msra.mxu0 %v1478
    %1694 = vmatprep.subr.bf16.mxu0 0
    %1695 = vmatpush1.bf16.msra.mxu0 %v1477
    %1696 = vmatprep.subr.bf16.mxu0 0
    %1697 = vmatpush2.bf16.msra.mxu0 %v1492
    %1698 = vmatprep.subr.bf16.mxu0 0
    %1699 = vmatpush2.bf16.msra.mxu0 %v1491
    %1700 = vmatprep.subr.bf16.mxu0 0
    %1701 = vmatpush2.bf16.msra.mxu0 %v1490
    %1702 = vmatprep.subr.bf16.mxu0 0
    %1703 = vmatpush2.bf16.msra.mxu0 %v1489
    %1704 = vmatprep.subr.bf16.mxu0 0
    %1705 = vmatpush2.bf16.msra.mxu0 %v1488
    %1706 = vmatprep.subr.bf16.mxu0 0
    %1707 = vmatpush2.bf16.msra.mxu0 %v1487
    %1708 = vmatprep.subr.bf16.mxu0 0
    %1709 = vmatpush2.bf16.msra.mxu0 %v1486
    %1710 = vmatprep.subr.bf16.mxu0 0
    %1711 = vmatpush2.bf16.msra.mxu0 %v1485
    %1712 = vmatprep.mubr.bf16.mxu0 %v1037
    %1713 = vmatmul.mubr.bf16.gmra.mxu0 %v1036
    %v1714 = vpop.f32.mrf.mxu0
    %v1715 = vadd.f32 %v1674, %v1714
    %v1716 = vpop.f32.mrf.mxu0
    %v1717 = vpop.f32.mrf.mxu0
    %v1718 = vadd.f32 %v1677, %v1717
    %v1719 = vpop.f32.mrf.mxu0
    %1720 = vdwg.mxu0
    %v1721 = vadd.f32 %v698, %v1715
    %v1722 = vadd.f32 %v699, %v1718
    %v1723 = vld [vmem:[%s16] sm:$0x1]
    %v1724 = vld [vmem:[%s17] sm:$0x1]
    %v1725 = vsel %vm174, %v1721, 0.0
    %1726 = vadd.xlane.f32.xlu0 %v1725
    %v1727 = vpop.xlane.xlu0 %1726
    %v1728 = vsel %vm174, %v1722, 0.0
    %1729 = vadd.xlane.f32.xlu0 %v1728
    %v1730 = vpop.xlane.xlu0 %1729
    %v1731 = vmul.f32 %v1727, %v663
    %v1732 = vmul.f32 %v1730, %v663
    %v1733 = vsub.f32 %v1721, %v1731
    %v1734 = vsub.f32 %v1722, %v1732
    %v1735 = vmul.f32 %v1733, %v1733
    %v1736 = vmul.f32 %v1734, %v1734
    %v1737 = vsel %vm174, %v1735, 0.0
    %1738 = vadd.xlane.f32.xlu0 %v1737
    %v1739 = vpop.xlane.xlu0 %1738
    %v1740 = vsel %vm174, %v1736, 0.0
    %1741 = vadd.xlane.f32.xlu0 %v1740
    %v1742 = vpop.xlane.xlu0 %1741
    %v1743 = vmul.f32 %v1739, %v663
    %v1744 = vmul.f32 %v1742, %v663
    %v1745 = vadd.f32 %v1743, 1e-05
    %v1746 = vadd.f32 %v1744, 1e-05
    %v1747 = vrsqrt.pop %v1745
    %v1748 = vrsqrt.pop %v1746
    %v1749 = vmul.f32 %v1733, %v1747
    %v1750 = vmul.f32 %v1734, %v1748
    %v1752 = vlaneseq
    %v1753 = vshrl.u32 %v1752, 7
    %v1754 = vsub.s32 0, %v1753
    %v1755 = vrot.slane %v1723, %v1754
    %v1757 = vmul.f32 %v1749, %v1755
    %v1758 = vmul.f32 %v1750, %v1755
    %v1760 = vlaneseq
    %v1761 = vshrl.u32 %v1760, 7
    %v1762 = vsub.s32 0, %v1761
    %v1763 = vrot.slane %v1724, %v1762
    %v1765 = vadd.f32 %v1757, %v1763
    %v1766 = vadd.f32 %v1758, %v1763
    %v1767 = vpack.c.bf16 %v1766, %v1765
    %s1768 = scalar_lea.vmem %s6, 16
    %v1769 = vld [vmem:[%s1768] sm:$0xf]
    %v1770 = vld [vmem:[%s1768 + $0x4] sm:$0xf]
    %v1771 = vld [vmem:[%s1768 + $0x8] sm:$0xf]
    %v1772 = vld [vmem:[%s1768 + $0xc] sm:$0xf]
    %s1773 = scalar_lea.vmem %s7, 1
    %v1774 = vld [vmem:[%s1773] sm:$0x1]
    %v1776 = vlaneseq
    %v1777 = vshrl.u32 %v1776, 7
    %v1778 = vsub.s32 0, %v1777
    %v1779 = vrot.slane %v1774, %v1778
    %v1785 = vunpack.c.l.b16 %v1769
    %v1786 = vunpack.c.l.b16 %v1770
    %v1787 = vunpack.c.l.b16 %v1771
    %v1788 = vunpack.c.l.b16 %v1772
    %v1789 = vpack.c.b16 %v1786, %v1785
    %v1790 = vpack.c.b16 %v1788, %v1787
    %v1794 = vsel %vm174, %v1767, 0
    %1796 = vmatprep.subr.bf16.mxu0 0
    %1797 = vmatpush1.bf16.msra.mxu0 0
    %1798 = vmatprep.subr.bf16.mxu0 0
    %1799 = vmatpush1.bf16.msra.mxu0 0
    %1800 = vmatprep.subr.bf16.mxu0 0
    %1801 = vmatpush1.bf16.msra.mxu0 0
    %1802 = vmatprep.subr.bf16.mxu0 0
    %1803 = vmatpush1.bf16.msra.mxu0 0
    %1804 = vmatprep.subr.bf16.mxu0 0
    %1805 = vmatpush1.bf16.msra.mxu0 0
    %1806 = vmatprep.subr.bf16.mxu0 0
    %1807 = vmatpush1.bf16.msra.mxu0 0
    %1808 = vmatprep.subr.bf16.mxu0 0
    %1809 = vmatpush1.bf16.msra.mxu0 %v1790
    %1810 = vmatprep.subr.bf16.mxu0 0
    %1811 = vmatpush1.bf16.msra.mxu0 %v1789
    %1812 = vmatprep.subr.bf16.mxu0 0
    %1813 = vmatpush2.bf16.msra.mxu0 0
    %1814 = vmatprep.subr.bf16.mxu0 0
    %1815 = vmatpush2.bf16.msra.mxu0 0
    %1816 = vmatprep.subr.bf16.mxu0 0
    %1817 = vmatpush2.bf16.msra.mxu0 0
    %1818 = vmatprep.subr.bf16.mxu0 0
    %1819 = vmatpush2.bf16.msra.mxu0 0
    %1820 = vmatprep.subr.bf16.mxu0 0
    %1821 = vmatpush2.bf16.msra.mxu0 0
    %1822 = vmatprep.subr.bf16.mxu0 0
    %1823 = vmatpush2.bf16.msra.mxu0 0
    %1824 = vmatprep.subr.bf16.mxu0 0
    %1825 = vmatpush2.bf16.msra.mxu0 0
    %1826 = vmatprep.subr.bf16.mxu0 0
    %1827 = vmatpush2.bf16.msra.mxu0 0
    %1828 = vmatprep.mubr.bf16.mxu0 0
    %1829 = vmatmul.mubr.bf16.gmra.mxu0 %v1794
    %v1830 = vpop.f32.mrf.mxu0
    %v1831 = vadd.f32 %v1779, %v1830
    %v1832 = vpop.f32.mrf.mxu0
    %v1833 = vpop.f32.mrf.mxu0
    %v1834 = vadd.f32 %v1779, %v1833
    %v1835 = vpop.f32.mrf.mxu0
    %1836 = vdwg.mxu0
    %1839 = vrot.lane.b32.xlu0 %v1831, 96
    %v1840 = vpop.permute.xlu0 %1839
    %1841 = vrot.lane.b32.xlu0 %v1834, 96
    %v1842 = vpop.permute.xlu0 %1841
    %v1845 = vmul.f32 %v272, %v1840
    %v1846 = vmul.f32 %v272, %v1842
    %v1847 = vmul.f32 %v276, %v1840
    %v1848 = vmul.f32 %v276, %v1842
    %v1849 = vmul.f32 %v280, %v1840
    %v1850 = vmul.f32 %v280, %v1842
    %v1851 = vmul.f32 %v284, %v1840
    %v1852 = vmul.f32 %v284, %v1842
    %v1853 = vmul.f32 %v288, %v1840
    %v1854 = vmul.f32 %v288, %v1842
    %v1855 = vmul.f32 %v292, %v1840
    %v1856 = vmul.f32 %v292, %v1842
    %v1857 = vmul.f32 %v296, %v1840
    %v1858 = vmul.f32 %v296, %v1842
    %v1859 = vmul.f32 %v300, %v1840
    %v1860 = vmul.f32 %v300, %v1842
    %v1861 = vpack.c.bf16 %v1846, %v1845
    %v1862 = vpack.c.bf16 %v1848, %v1847
    %v1863 = vpack.c.bf16 %v1850, %v1849
    %v1864 = vpack.c.bf16 %v1852, %v1851
    %v1865 = vpack.c.bf16 %v1854, %v1853
    %v1866 = vpack.c.bf16 %v1856, %v1855
    %v1867 = vpack.c.bf16 %v1858, %v1857
    %v1868 = vpack.c.bf16 %v1860, %v1859
    %1869 = vrot.lane.b32.xlu0 %v1831, 64
    %v1870 = vpop.permute.xlu0 %1869
    %1871 = vrot.lane.b32.xlu0 %v1834, 64
    %v1872 = vpop.permute.xlu0 %1871
    %v1875 = vmul.f32 %v272, %v1870
    %v1876 = vmul.f32 %v272, %v1872
    %v1877 = vmul.f32 %v276, %v1870
    %v1878 = vmul.f32 %v276, %v1872
    %v1879 = vmul.f32 %v280, %v1870
    %v1880 = vmul.f32 %v280, %v1872
    %v1881 = vmul.f32 %v284, %v1870
    %v1882 = vmul.f32 %v284, %v1872
    %v1883 = vmul.f32 %v288, %v1870
    %v1884 = vmul.f32 %v288, %v1872
    %v1885 = vmul.f32 %v292, %v1870
    %v1886 = vmul.f32 %v292, %v1872
    %v1887 = vmul.f32 %v296, %v1870
    %v1888 = vmul.f32 %v296, %v1872
    %v1889 = vmul.f32 %v300, %v1870
    %v1890 = vmul.f32 %v300, %v1872
    %v1891 = vpack.c.bf16 %v1876, %v1875
    %v1892 = vpack.c.bf16 %v1878, %v1877
    %v1893 = vpack.c.bf16 %v1880, %v1879
    %v1894 = vpack.c.bf16 %v1882, %v1881
    %v1895 = vpack.c.bf16 %v1884, %v1883
    %v1896 = vpack.c.bf16 %v1886, %v1885
    %v1897 = vpack.c.bf16 %v1888, %v1887
    %v1898 = vpack.c.bf16 %v1890, %v1889
    %v1899 = vpack.c.bf16 %v1834, %v1831
    %v1901 = vsel %vm174, %v1899, 0
    %v1904 = vsel %vm174, %v1861, 0
    %v1907 = vsel %vm174, %v1862, 0
    %v1910 = vsel %vm174, %v1863, 0
    %v1913 = vsel %vm174, %v1864, 0
    %v1916 = vsel %vm174, %v1865, 0
    %v1919 = vsel %vm174, %v1866, 0
    %v1922 = vsel %vm174, %v1867, 0
    %v1925 = vsel %vm174, %v1868, 0
    %1927 = vmatprep.subr.bf16.mxu0 0
    %1928 = vmatpush1.bf16.xpose.msra.mxu0 %v1925
    %1929 = vmatprep.subr.bf16.mxu0 0
    %1930 = vmatpush1.bf16.xpose.msra.mxu0 %v1922
    %1931 = vmatprep.subr.bf16.mxu0 0
    %1932 = vmatpush1.bf16.xpose.msra.mxu0 %v1919
    %1933 = vmatprep.subr.bf16.mxu0 0
    %1934 = vmatpush1.bf16.xpose.msra.mxu0 %v1916
    %1935 = vmatprep.subr.bf16.mxu0 0
    %1936 = vmatpush1.bf16.xpose.msra.mxu0 %v1913
    %1937 = vmatprep.subr.bf16.mxu0 0
    %1938 = vmatpush1.bf16.xpose.msra.mxu0 %v1910
    %1939 = vmatprep.subr.bf16.mxu0 0
    %1940 = vmatpush1.bf16.xpose.msra.mxu0 %v1907
    %1941 = vmatprep.subr.bf16.mxu0 0
    %1942 = vmatpush1.bf16.xpose.msra.mxu0 %v1904
    %1943 = vmatprep.subr.bf16.mxu0 0
    %1944 = vmatpush2.bf16.xpose.msra.mxu0 0
    %1945 = vmatprep.subr.bf16.mxu0 0
    %1946 = vmatpush2.bf16.xpose.msra.mxu0 0
    %1947 = vmatprep.subr.bf16.mxu0 0
    %1948 = vmatpush2.bf16.xpose.msra.mxu0 0
    %1949 = vmatprep.subr.bf16.mxu0 0
    %1950 = vmatpush2.bf16.xpose.msra.mxu0 0
    %1951 = vmatprep.subr.bf16.mxu0 0
    %1952 = vmatpush2.bf16.xpose.msra.mxu0 0
    %1953 = vmatprep.subr.bf16.mxu0 0
    %1954 = vmatpush2.bf16.xpose.msra.mxu0 0
    %1955 = vmatprep.subr.bf16.mxu0 0
    %1956 = vmatpush2.bf16.xpose.msra.mxu0 0
    %1957 = vmatprep.subr.bf16.mxu0 0
    %1958 = vmatpush2.bf16.xpose.msra.mxu0 0
    %1959 = vmatprep.mubr.bf16.mxu0 0
    %1960 = vmatmul.mubr.bf16.gmra.mxu0 %v1901
    %v1961 = vpop.f32.mrf.mxu0
    %v1962 = vadd.f32 %v132, %v1961
    %v1963 = vpop.f32.mrf.mxu0
    %v1964 = vpop.f32.mrf.mxu0
    %v1965 = vadd.f32 %v133, %v1964
    %v1966 = vpop.f32.mrf.mxu0
    %1967 = vdwg.mxu0
    %1968 = vmax.xlane.f32.xlu0 %v1962
    %v1969 = vpop.xlane.xlu0 %1968
    %1970 = vmax.xlane.f32.xlu0 %v1965
    %v1971 = vpop.xlane.xlu0 %1970
    %v1972 = vsub.f32 %v1962, %v1969
    %v1973 = vsub.f32 %v1965, %v1971
    %v1974 = vmul.f32 %v1972, 1.442695
    %v1975 = vpow.pop %v1974
    %v1976 = vmul.f32 %v1973, 1.442695
    %v1977 = vpow.pop %v1976
    %v1978 = vpack.c.bf16 %v1977, %v1975
    %1979 = vmatprep.subr.bf16.mxu0 0
    %1980 = vmatpush1.bf16.msra.mxu0 %v1898
    %1981 = vmatprep.subr.bf16.mxu0 0
    %1982 = vmatpush1.bf16.msra.mxu0 %v1897
    %1983 = vmatprep.subr.bf16.mxu0 0
    %1984 = vmatpush1.bf16.msra.mxu0 %v1896
    %1985 = vmatprep.subr.bf16.mxu0 0
    %1986 = vmatpush1.bf16.msra.mxu0 %v1895
    %1987 = vmatprep.subr.bf16.mxu0 0
    %1988 = vmatpush1.bf16.msra.mxu0 %v1894
    %1989 = vmatprep.subr.bf16.mxu0 0
    %1990 = vmatpush1.bf16.msra.mxu0 %v1893
    %1991 = vmatprep.subr.bf16.mxu0 0
    %1992 = vmatpush1.bf16.msra.mxu0 %v1892
    %1993 = vmatprep.subr.bf16.mxu0 0
    %1994 = vmatpush1.bf16.msra.mxu0 %v1891
    %1995 = vmatprep.subr.bf16.mxu0 0
    %1996 = vmatpush2.bf16.msra.mxu0 0
    %1997 = vmatprep.subr.bf16.mxu0 0
    %1998 = vmatpush2.bf16.msra.mxu0 0
    %1999 = vmatprep.subr.bf16.mxu0 0
    %2000 = vmatpush2.bf16.msra.mxu0 0
    %2001 = vmatprep.subr.bf16.mxu0 0
    %2002 = vmatpush2.bf16.msra.mxu0 0
    %2003 = vmatprep.subr.bf16.mxu0 0
    %2004 = vmatpush2.bf16.msra.mxu0 0
    %2005 = vmatprep.subr.bf16.mxu0 0
    %2006 = vmatpush2.bf16.msra.mxu0 0
    %2007 = vmatprep.subr.bf16.mxu0 0
    %2008 = vmatpush2.bf16.msra.mxu0 0
    %2009 = vmatprep.subr.bf16.mxu0 0
    %2010 = vmatpush2.bf16.msra.mxu0 0
    %2011 = vmatprep.mubr.bf16.mxu0 0
    %2012 = vmatmul.mubr.bf16.gmra.mxu0 %v1978
    %v2013 = vpop.f32.mrf.mxu0
    %v2014 = vadd.f32 0.0, %v2013
    %v2015 = vpop.f32.mrf.mxu0
    %v2016 = vpop.f32.mrf.mxu0
    %v2017 = vadd.f32 0.0, %v2016
    %v2018 = vpop.f32.mrf.mxu0
    %2019 = vdwg.mxu0
    %2020 = vmatprep.subr.bf16.mxu0 0
    %2021 = vmatpush1.bf16.msra.mxu0 %v531
    %2022 = vmatprep.subr.bf16.mxu0 0
    %2023 = vmatpush1.bf16.msra.mxu0 %v530
    %2024 = vmatprep.subr.bf16.mxu0 0
    %2025 = vmatpush1.bf16.msra.mxu0 %v529
    %2026 = vmatprep.subr.bf16.mxu0 0
    %2027 = vmatpush1.bf16.msra.mxu0 %v528
    %2028 = vmatprep.subr.bf16.mxu0 0
    %2029 = vmatpush1.bf16.msra.mxu0 %v527
    %2030 = vmatprep.subr.bf16.mxu0 0
    %2031 = vmatpush1.bf16.msra.mxu0 %v526
    %2032 = vmatprep.subr.bf16.mxu0 0
    %2033 = vmatpush1.bf16.msra.mxu0 %v525
    %2034 = vmatprep.subr.bf16.mxu0 0
    %2035 = vmatpush1.bf16.msra.mxu0 %v524
    %2036 = vmatprep.subr.bf16.mxu0 0
    %2037 = vmatpush2.bf16.msra.mxu0 0
    %2038 = vmatprep.subr.bf16.mxu0 0
    %2039 = vmatpush2.bf16.msra.mxu0 0
    %2040 = vmatprep.subr.bf16.mxu0 0
    %2041 = vmatpush2.bf16.msra.mxu0 0
    %2042 = vmatprep.subr.bf16.mxu0 0
    %2043 = vmatpush2.bf16.msra.mxu0 0
    %2044 = vmatprep.subr.bf16.mxu0 0
    %2045 = vmatpush2.bf16.msra.mxu0 0
    %2046 = vmatprep.subr.bf16.mxu0 0
    %2047 = vmatpush2.bf16.msra.mxu0 0
    %2048 = vmatprep.subr.bf16.mxu0 0
    %2049 = vmatpush2.bf16.msra.mxu0 0
    %2050 = vmatprep.subr.bf16.mxu0 0
    %2051 = vmatpush2.bf16.msra.mxu0 0
    %2052 = vmatprep.mubr.bf16.mxu0 0
    %2053 = vmatmul.mubr.bf16.gmra.mxu0 %v1978
    %v2054 = vpop.f32.mrf.mxu0
    %v2055 = vadd.f32 0.0, %v2054
    %v2056 = vpop.f32.mrf.mxu0
    %v2057 = vpop.f32.mrf.mxu0
    %v2058 = vadd.f32 0.0, %v2057
    %v2059 = vpop.f32.mrf.mxu0
    %2060 = vdwg.mxu0
    %v2061 = vrcp.pop %v2055
    %v2062 = vrcp.pop %v2058
    %v2063 = vmul.f32 %v2014, %v2061
    %v2064 = vmul.f32 %v2017, %v2062
    %v2065 = vpack.c.bf16 %v2064, %v2063
    %s2066 = scalar_lea.vmem %s8, 16
    %v2067 = vld [vmem:[%s2066] sm:$0xf]
    %v2068 = vld [vmem:[%s2066 + $0x4] sm:$0xf]
    %v2069 = vld [vmem:[%s2066 + $0x8] sm:$0xf]
    %v2070 = vld [vmem:[%s2066 + $0xc] sm:$0xf]
    %s2071 = scalar_lea.vmem %s9, 1
    %v2072 = vld [vmem:[%s2071] sm:$0x1]
    %v2074 = vlaneseq
    %v2075 = vshrl.u32 %v2074, 7
    %v2076 = vsub.s32 0, %v2075
    %v2077 = vrot.slane %v2072, %v2076
    %v2083 = vunpack.c.l.b16 %v2067
    %v2084 = vunpack.c.l.b16 %v2068
    %v2085 = vunpack.c.l.b16 %v2069
    %v2086 = vunpack.c.l.b16 %v2070
    %v2087 = vpack.c.b16 %v2084, %v2083
    %v2088 = vpack.c.b16 %v2086, %v2085
    %v2092 = vsel %vm174, %v2065, 0
    %2094 = vmatprep.subr.bf16.mxu0 0
    %2095 = vmatpush1.bf16.msra.mxu0 0
    %2096 = vmatprep.subr.bf16.mxu0 0
    %2097 = vmatpush1.bf16.msra.mxu0 0
    %2098 = vmatprep.subr.bf16.mxu0 0
    %2099 = vmatpush1.bf16.msra.mxu0 0
    %2100 = vmatprep.subr.bf16.mxu0 0
    %2101 = vmatpush1.bf16.msra.mxu0 0
    %2102 = vmatprep.subr.bf16.mxu0 0
    %2103 = vmatpush1.bf16.msra.mxu0 0
    %2104 = vmatprep.subr.bf16.mxu0 0
    %2105 = vmatpush1.bf16.msra.mxu0 0
    %2106 = vmatprep.subr.bf16.mxu0 0
    %2107 = vmatpush1.bf16.msra.mxu0 %v2088
    %2108 = vmatprep.subr.bf16.mxu0 0
    %2109 = vmatpush1.bf16.msra.mxu0 %v2087
    %2110 = vmatprep.subr.bf16.mxu0 0
    %2111 = vmatpush2.bf16.msra.mxu0 0
    %2112 = vmatprep.subr.bf16.mxu0 0
    %2113 = vmatpush2.bf16.msra.mxu0 0
    %2114 = vmatprep.subr.bf16.mxu0 0
    %2115 = vmatpush2.bf16.msra.mxu0 0
    %2116 = vmatprep.subr.bf16.mxu0 0
    %2117 = vmatpush2.bf16.msra.mxu0 0
    %2118 = vmatprep.subr.bf16.mxu0 0
    %2119 = vmatpush2.bf16.msra.mxu0 0
    %2120 = vmatprep.subr.bf16.mxu0 0
    %2121 = vmatpush2.bf16.msra.mxu0 0
    %2122 = vmatprep.subr.bf16.mxu0 0
    %2123 = vmatpush2.bf16.msra.mxu0 0
    %2124 = vmatprep.subr.bf16.mxu0 0
    %2125 = vmatpush2.bf16.msra.mxu0 0
    %2126 = vmatprep.mubr.bf16.mxu0 0
    %2127 = vmatmul.mubr.bf16.gmra.mxu0 %v2092
    %v2128 = vpop.f32.mrf.mxu0
    %v2129 = vadd.f32 %v2077, %v2128
    %v2130 = vpop.f32.mrf.mxu0
    %v2131 = vpop.f32.mrf.mxu0
    %v2132 = vadd.f32 %v2077, %v2131
    %v2133 = vpop.f32.mrf.mxu0
    %2134 = vdwg.mxu0
    %v2135 = vadd.f32 %v1765, %v2129
    %v2136 = vadd.f32 %v1766, %v2132
    %s2137 = scalar_lea.vmem %s14, 1
    %v2138 = vld [vmem:[%s2137] sm:$0x1]
    %s2139 = scalar_lea.vmem %s15, 1
    %v2140 = vld [vmem:[%s2139] sm:$0x1]
    %v2141 = vsel %vm174, %v2135, 0.0
    %2142 = vadd.xlane.f32.xlu0 %v2141
    %v2143 = vpop.xlane.xlu0 %2142
    %v2144 = vsel %vm174, %v2136, 0.0
    %2145 = vadd.xlane.f32.xlu0 %v2144
    %v2146 = vpop.xlane.xlu0 %2145
    %v2147 = vmul.f32 %v2143, %v663
    %v2148 = vmul.f32 %v2146, %v663
    %v2149 = vsub.f32 %v2135, %v2147
    %v2150 = vsub.f32 %v2136, %v2148
    %v2151 = vmul.f32 %v2149, %v2149
    %v2152 = vmul.f32 %v2150, %v2150
    %v2153 = vsel %vm174, %v2151, 0.0
    %2154 = vadd.xlane.f32.xlu0 %v2153
    %v2155 = vpop.xlane.xlu0 %2154
    %v2156 = vsel %vm174, %v2152, 0.0
    %2157 = vadd.xlane.f32.xlu0 %v2156
    %v2158 = vpop.xlane.xlu0 %2157
    %v2159 = vmul.f32 %v2155, %v663
    %v2160 = vmul.f32 %v2158, %v663
    %v2161 = vadd.f32 %v2159, 1e-05
    %v2162 = vadd.f32 %v2160, 1e-05
    %v2163 = vrsqrt.pop %v2161
    %v2164 = vrsqrt.pop %v2162
    %v2165 = vmul.f32 %v2149, %v2163
    %v2166 = vmul.f32 %v2150, %v2164
    %v2168 = vlaneseq
    %v2169 = vshrl.u32 %v2168, 7
    %v2170 = vsub.s32 0, %v2169
    %v2171 = vrot.slane %v2138, %v2170
    %v2173 = vmul.f32 %v2165, %v2171
    %v2174 = vmul.f32 %v2166, %v2171
    %v2176 = vlaneseq
    %v2177 = vshrl.u32 %v2176, 7
    %v2178 = vsub.s32 0, %v2177
    %v2179 = vrot.slane %v2140, %v2178
    %v2181 = vadd.f32 %v2173, %v2179
    %v2182 = vadd.f32 %v2174, %v2179
    %v2183 = vpack.c.bf16 %v2182, %v2181
    %s2184 = scalar_lea.vmem %s10, 128
    %v2185 = vld [vmem:[%s2184] sm:$0xff]
    %v2186 = vld [vmem:[%s2184 + $0x8] sm:$0xff]
    %v2187 = vld [vmem:[%s2184 + $0x10] sm:$0xff]
    %v2188 = vld [vmem:[%s2184 + $0x18] sm:$0xff]
    %v2189 = vld [vmem:[%s2184 + $0x20] sm:$0xff]
    %v2190 = vld [vmem:[%s2184 + $0x28] sm:$0xff]
    %v2191 = vld [vmem:[%s2184 + $0x30] sm:$0xff]
    %v2192 = vld [vmem:[%s2184 + $0x38] sm:$0xff]
    %v2193 = vld [vmem:[%s2184 + $0x40] sm:$0xff]
    %v2194 = vld [vmem:[%s2184 + $0x48] sm:$0xff]
    %v2195 = vld [vmem:[%s2184 + $0x50] sm:$0xff]
    %v2196 = vld [vmem:[%s2184 + $0x58] sm:$0xff]
    %v2197 = vld [vmem:[%s2184 + $0x60] sm:$0xff]
    %v2198 = vld [vmem:[%s2184 + $0x68] sm:$0xff]
    %v2199 = vld [vmem:[%s2184 + $0x70] sm:$0xff]
    %v2200 = vld [vmem:[%s2184 + $0x78] sm:$0xff]
    %s2201 = scalar_lea.vmem %s11, 8
    %v2202 = vld [vmem:[%s2201] sm:$0xff]
    %v2204 = vlaneseq
    %v2205 = vshrl.u32 %v2204, 7
    %v2206 = vsub.s32 0, %v2205
    %v2207 = vrot.slane %v2202, %v2206
    %v2208 = vlaneseq
    %v2209 = vshrl.u32 %v2208, 7
    %v2210 = vsub.s32 1, %v2209
    %v2211 = vrot.slane %v2202, %v2210
    %v2212 = vlaneseq
    %v2213 = vshrl.u32 %v2212, 7
    %v2214 = vsub.s32 2, %v2213
    %v2215 = vrot.slane %v2202, %v2214
    %v2216 = vlaneseq
    %v2217 = vshrl.u32 %v2216, 7
    %v2218 = vsub.s32 3, %v2217
    %v2219 = vrot.slane %v2202, %v2218
    %v2220 = vlaneseq
    %v2221 = vshrl.u32 %v2220, 7
    %v2222 = vsub.s32 4, %v2221
    %v2223 = vrot.slane %v2202, %v2222
    %v2224 = vlaneseq
    %v2225 = vshrl.u32 %v2224, 7
    %v2226 = vsub.s32 5, %v2225
    %v2227 = vrot.slane %v2202, %v2226
    %v2228 = vlaneseq
    %v2229 = vshrl.u32 %v2228, 7
    %v2230 = vsub.s32 6, %v2229
    %v2231 = vrot.slane %v2202, %v2230
    %v2232 = vlaneseq
    %v2233 = vshrl.u32 %v2232, 7
    %v2234 = vsub.s32 7, %v2233
    %v2235 = vrot.slane %v2202, %v2234
    %v2260 = vunpack.c.l.b16 %v2185
    %v2261 = vunpack.c.h.b16 %v2185
    %v2262 = vunpack.c.l.b16 %v2186
    %v2263 = vunpack.c.h.b16 %v2186
    %v2264 = vunpack.c.l.b16 %v2187
    %v2265 = vunpack.c.h.b16 %v2187
    %v2266 = vunpack.c.l.b16 %v2188
    %v2267 = vunpack.c.h.b16 %v2188
    %v2268 = vunpack.c.l.b16 %v2189
    %v2269 = vunpack.c.h.b16 %v2189
    %v2270 = vunpack.c.l.b16 %v2190
    %v2271 = vunpack.c.h.b16 %v2190
    %v2272 = vunpack.c.l.b16 %v2191
    %v2273 = vunpack.c.h.b16 %v2191
    %v2274 = vunpack.c.l.b16 %v2192
    %v2275 = vunpack.c.h.b16 %v2192
    %v2276 = vunpack.c.l.b16 %v2193
    %v2277 = vunpack.c.h.b16 %v2193
    %v2278 = vunpack.c.l.b16 %v2194
    %v2279 = vunpack.c.h.b16 %v2194
    %v2280 = vunpack.c.l.b16 %v2195
    %v2281 = vunpack.c.h.b16 %v2195
    %v2282 = vunpack.c.l.b16 %v2196
    %v2283 = vunpack.c.h.b16 %v2196
    %v2284 = vunpack.c.l.b16 %v2197
    %v2285 = vunpack.c.h.b16 %v2197
    %v2286 = vunpack.c.l.b16 %v2198
    %v2287 = vunpack.c.h.b16 %v2198
    %v2288 = vunpack.c.l.b16 %v2199
    %v2289 = vunpack.c.h.b16 %v2199
    %v2290 = vunpack.c.l.b16 %v2200
    %v2291 = vunpack.c.h.b16 %v2200
    %v2292 = vpack.c.b16 %v2268, %v2260
    %v2293 = vpack.c.b16 %v2269, %v2261
    %v2294 = vpack.c.b16 %v2270, %v2262
    %v2295 = vpack.c.b16 %v2271, %v2263
    %v2296 = vpack.c.b16 %v2272, %v2264
    %v2297 = vpack.c.b16 %v2273, %v2265
    %v2298 = vpack.c.b16 %v2274, %v2266
    %v2299 = vpack.c.b16 %v2275, %v2267
    %v2300 = vpack.c.b16 %v2284, %v2276
    %v2301 = vpack.c.b16 %v2285, %v2277
    %v2302 = vpack.c.b16 %v2286, %v2278
    %v2303 = vpack.c.b16 %v2287, %v2279
    %v2304 = vpack.c.b16 %v2288, %v2280
    %v2305 = vpack.c.b16 %v2289, %v2281
    %v2306 = vpack.c.b16 %v2290, %v2282
    %v2307 = vpack.c.b16 %v2291, %v2283
    %v2325 = vsel %vm174, %v2183, 0
    %2327 = vmatprep.subr.bf16.mxu0 0
    %2328 = vmatpush1.bf16.msra.mxu0 0
    %2329 = vmatprep.subr.bf16.mxu0 0
    %2330 = vmatpush1.bf16.msra.mxu0 0
    %2331 = vmatprep.subr.bf16.mxu0 0
    %2332 = vmatpush1.bf16.msra.mxu0 0
    %2333 = vmatprep.subr.bf16.mxu0 0
    %2334 = vmatpush1.bf16.msra.mxu0 0
    %2335 = vmatprep.subr.bf16.mxu0 0
    %2336 = vmatpush1.bf16.msra.mxu0 0
    %2337 = vmatprep.subr.bf16.mxu0 0
    %2338 = vmatpush1.bf16.msra.mxu0 0
    %2339 = vmatprep.subr.bf16.mxu0 %v2301
    %2340 = vmatpush1.bf16.msra.mxu0 %v2300
    %2341 = vmatprep.subr.bf16.mxu0 %v2293
    %2342 = vmatpush1.bf16.msra.mxu0 %v2292
    %2343 = vmatprep.subr.bf16.mxu0 0
    %2344 = vmatpush2.bf16.msra.mxu0 0
    %2345 = vmatprep.subr.bf16.mxu0 0
    %2346 = vmatpush2.bf16.msra.mxu0 0
    %2347 = vmatprep.subr.bf16.mxu0 0
    %2348 = vmatpush2.bf16.msra.mxu0 0
    %2349 = vmatprep.subr.bf16.mxu0 0
    %2350 = vmatpush2.bf16.msra.mxu0 0
    %2351 = vmatprep.subr.bf16.mxu0 0
    %2352 = vmatpush2.bf16.msra.mxu0 0
    %2353 = vmatprep.subr.bf16.mxu0 0
    %2354 = vmatpush2.bf16.msra.mxu0 0
    %2355 = vmatprep.subr.bf16.mxu0 0
    %2356 = vmatpush2.bf16.msra.mxu0 0
    %2357 = vmatprep.subr.bf16.mxu0 0
    %2358 = vmatpush2.bf16.msra.mxu0 0
    %2359 = vmatprep.mubr.bf16.mxu0 0
    %2360 = vmatmul.mubr.bf16.gmra.mxu0 %v2325
    %v2361 = vpop.f32.mrf.mxu0
    %v2362 = vadd.f32 %v2207, %v2361
    %v2363 = vpop.f32.mrf.mxu0
    %v2364 = vadd.f32 %v2211, %v2363
    %v2365 = vpop.f32.mrf.mxu0
    %v2366 = vadd.f32 %v2207, %v2365
    %v2367 = vpop.f32.mrf.mxu0
    %v2368 = vadd.f32 %v2211, %v2367
    %2369 = vdwg.mxu0
    %2370 = vmatprep.subr.bf16.mxu0 0
    %2371 = vmatpush1.bf16.msra.mxu0 0
    %2372 = vmatprep.subr.bf16.mxu0 0
    %2373 = vmatpush1.bf16.msra.mxu0 0
    %2374 = vmatprep.subr.bf16.mxu0 0
    %2375 = vmatpush1.bf16.msra.mxu0 0
    %2376 = vmatprep.subr.bf16.mxu0 0
    %2377 = vmatpush1.bf16.msra.mxu0 0
    %2378 = vmatprep.subr.bf16.mxu0 0
    %2379 = vmatpush1.bf16.msra.mxu0 0
    %2380 = vmatprep.subr.bf16.mxu0 0
    %2381 = vmatpush1.bf16.msra.mxu0 0
    %2382 = vmatprep.subr.bf16.mxu0 %v2303
    %2383 = vmatpush1.bf16.msra.mxu0 %v2302
    %2384 = vmatprep.subr.bf16.mxu0 %v2295
    %2385 = vmatpush1.bf16.msra.mxu0 %v2294
    %2386 = vmatprep.subr.bf16.mxu0 0
    %2387 = vmatpush2.bf16.msra.mxu0 0
    %2388 = vmatprep.subr.bf16.mxu0 0
    %2389 = vmatpush2.bf16.msra.mxu0 0
    %2390 = vmatprep.subr.bf16.mxu0 0
    %2391 = vmatpush2.bf16.msra.mxu0 0
    %2392 = vmatprep.subr.bf16.mxu0 0
    %2393 = vmatpush2.bf16.msra.mxu0 0
    %2394 = vmatprep.subr.bf16.mxu0 0
    %2395 = vmatpush2.bf16.msra.mxu0 0
    %2396 = vmatprep.subr.bf16.mxu0 0
    %2397 = vmatpush2.bf16.msra.mxu0 0
    %2398 = vmatprep.subr.bf16.mxu0 0
    %2399 = vmatpush2.bf16.msra.mxu0 0
    %2400 = vmatprep.subr.bf16.mxu0 0
    %2401 = vmatpush2.bf16.msra.mxu0 0
    %2402 = vmatprep.mubr.bf16.mxu0 0
    %2403 = vmatmul.mubr.bf16.gmra.mxu0 %v2325
    %v2404 = vpop.f32.mrf.mxu0
    %v2405 = vadd.f32 %v2215, %v2404
    %v2406 = vpop.f32.mrf.mxu0
    %v2407 = vadd.f32 %v2219, %v2406
    %v2408 = vpop.f32.mrf.mxu0
    %v2409 = vadd.f32 %v2215, %v2408
    %v2410 = vpop.f32.mrf.mxu0
    %v2411 = vadd.f32 %v2219, %v2410
    %2412 = vdwg.mxu0
    %2413 = vmatprep.subr.bf16.mxu0 0
    %2414 = vmatpush1.bf16.msra.mxu0 0
    %2415 = vmatprep.subr.bf16.mxu0 0
    %2416 = vmatpush1.bf16.msra.mxu0 0
    %2417 = vmatprep.subr.bf16.mxu0 0
    %2418 = vmatpush1.bf16.msra.mxu0 0
    %2419 = vmatprep.subr.bf16.mxu0 0
    %2420 = vmatpush1.bf16.msra.mxu0 0
    %2421 = vmatprep.subr.bf16.mxu0 0
    %2422 = vmatpush1.bf16.msra.mxu0 0
    %2423 = vmatprep.subr.bf16.mxu0 0
    %2424 = vmatpush1.bf16.msra.mxu0 0
    %2425 = vmatprep.subr.bf16.mxu0 %v2305
    %2426 = vmatpush1.bf16.msra.mxu0 %v2304
    %2427 = vmatprep.subr.bf16.mxu0 %v2297
    %2428 = vmatpush1.bf16.msra.mxu0 %v2296
    %2429 = vmatprep.subr.bf16.mxu0 0
    %2430 = vmatpush2.bf16.msra.mxu0 0
    %2431 = vmatprep.subr.bf16.mxu0 0
    %2432 = vmatpush2.bf16.msra.mxu0 0
    %2433 = vmatprep.subr.bf16.mxu0 0
    %2434 = vmatpush2.bf16.msra.mxu0 0
    %2435 = vmatprep.subr.bf16.mxu0 0
    %2436 = vmatpush2.bf16.msra.mxu0 0
    %2437 = vmatprep.subr.bf16.mxu0 0
    %2438 = vmatpush2.bf16.msra.mxu0 0
    %2439 = vmatprep.subr.bf16.mxu0 0
    %2440 = vmatpush2.bf16.msra.mxu0 0
    %2441 = vmatprep.subr.bf16.mxu0 0
    %2442 = vmatpush2.bf16.msra.mxu0 0
    %2443 = vmatprep.subr.bf16.mxu0 0
    %2444 = vmatpush2.bf16.msra.mxu0 0
    %2445 = vmatprep.mubr.bf16.mxu0 0
    %2446 = vmatmul.mubr.bf16.gmra.mxu0 %v2325
    %v2447 = vpop.f32.mrf.mxu0
    %v2448 = vadd.f32 %v2223, %v2447
    %v2449 = vpop.f32.mrf.mxu0
    %v2450 = vadd.f32 %v2227, %v2449
    %v2451 = vpop.f32.mrf.mxu0
    %v2452 = vadd.f32 %v2223, %v2451
    %v2453 = vpop.f32.mrf.mxu0
    %v2454 = vadd.f32 %v2227, %v2453
    %2455 = vdwg.mxu0
    %2456 = vmatprep.subr.bf16.mxu0 0
    %2457 = vmatpush1.bf16.msra.mxu0 0
    %2458 = vmatprep.subr.bf16.mxu0 0
    %2459 = vmatpush1.bf16.msra.mxu0 0
    %2460 = vmatprep.subr.bf16.mxu0 0
    %2461 = vmatpush1.bf16.msra.mxu0 0
    %2462 = vmatprep.subr.bf16.mxu0 0
    %2463 = vmatpush1.bf16.msra.mxu0 0
    %2464 = vmatprep.subr.bf16.mxu0 0
    %2465 = vmatpush1.bf16.msra.mxu0 0
    %2466 = vmatprep.subr.bf16.mxu0 0
    %2467 = vmatpush1.bf16.msra.mxu0 0
    %2468 = vmatprep.subr.bf16.mxu0 %v2307
    %2469 = vmatpush1.bf16.msra.mxu0 %v2306
    %2470 = vmatprep.subr.bf16.mxu0 %v2299
    %2471 = vmatpush1.bf16.msra.mxu0 %v2298
    %2472 = vmatprep.subr.bf16.mxu0 0
    %2473 = vmatpush2.bf16.msra.mxu0 0
    %2474 = vmatprep.subr.bf16.mxu0 0
    %2475 = vmatpush2.bf16.msra.mxu0 0
    %2476 = vmatprep.subr.bf16.mxu0 0
    %2477 = vmatpush2.bf16.msra.mxu0 0
    %2478 = vmatprep.subr.bf16.mxu0 0
    %2479 = vmatpush2.bf16.msra.mxu0 0
    %2480 = vmatprep.subr.bf16.mxu0 0
    %2481 = vmatpush2.bf16.msra.mxu0 0
    %2482 = vmatprep.subr.bf16.mxu0 0
    %2483 = vmatpush2.bf16.msra.mxu0 0
    %2484 = vmatprep.subr.bf16.mxu0 0
    %2485 = vmatpush2.bf16.msra.mxu0 0
    %2486 = vmatprep.subr.bf16.mxu0 0
    %2487 = vmatpush2.bf16.msra.mxu0 0
    %2488 = vmatprep.mubr.bf16.mxu0 0
    %2489 = vmatmul.mubr.bf16.gmra.mxu0 %v2325
    %v2490 = vpop.f32.mrf.mxu0
    %v2491 = vadd.f32 %v2231, %v2490
    %v2492 = vpop.f32.mrf.mxu0
    %v2493 = vadd.f32 %v2235, %v2492
    %v2494 = vpop.f32.mrf.mxu0
    %v2495 = vadd.f32 %v2231, %v2494
    %v2496 = vpop.f32.mrf.mxu0
    %v2497 = vadd.f32 %v2235, %v2496
    %2498 = vdwg.mxu0
    %v2499 = vmax.f32 %v2362, 0.0
    %v2500 = vmax.f32 %v2364, 0.0
    %v2501 = vmax.f32 %v2405, 0.0
    %v2502 = vmax.f32 %v2407, 0.0
    %v2503 = vmax.f32 %v2448, 0.0
    %v2504 = vmax.f32 %v2450, 0.0
    %v2505 = vmax.f32 %v2491, 0.0
    %v2506 = vmax.f32 %v2493, 0.0
    %v2507 = vmax.f32 %v2366, 0.0
    %v2508 = vmax.f32 %v2368, 0.0
    %v2509 = vmax.f32 %v2409, 0.0
    %v2510 = vmax.f32 %v2411, 0.0
    %v2511 = vmax.f32 %v2452, 0.0
    %v2512 = vmax.f32 %v2454, 0.0
    %v2513 = vmax.f32 %v2495, 0.0
    %v2514 = vmax.f32 %v2497, 0.0
    %v2515 = vpack.c.bf16 %v2507, %v2499
    %v2516 = vpack.c.bf16 %v2508, %v2500
    %v2517 = vpack.c.bf16 %v2509, %v2501
    %v2518 = vpack.c.bf16 %v2510, %v2502
    %v2519 = vpack.c.bf16 %v2511, %v2503
    %v2520 = vpack.c.bf16 %v2512, %v2504
    %v2521 = vpack.c.bf16 %v2513, %v2505
    %v2522 = vpack.c.bf16 %v2514, %v2506
    %s2523 = scalar_lea.vmem %s12, 512
    %v2524 = vld [vmem:[%s2523] sm:$0xf]
    %v2525 = vld [vmem:[%s2523 + $0x4] sm:$0xf]
    %v2526 = vld [vmem:[%s2523 + $0x8] sm:$0xf]
    %v2527 = vld [vmem:[%s2523 + $0xc] sm:$0xf]
    %v2528 = vld [vmem:[%s2523 + $0x10] sm:$0xf]
    %v2529 = vld [vmem:[%s2523 + $0x14] sm:$0xf]
    %v2530 = vld [vmem:[%s2523 + $0x18] sm:$0xf]
    %v2531 = vld [vmem:[%s2523 + $0x1c] sm:$0xf]
    %v2532 = vld [vmem:[%s2523 + $0x20] sm:$0xf]
    %v2533 = vld [vmem:[%s2523 + $0x24] sm:$0xf]
    %v2534 = vld [vmem:[%s2523 + $0x28] sm:$0xf]
    %v2535 = vld [vmem:[%s2523 + $0x2c] sm:$0xf]
    %v2536 = vld [vmem:[%s2523 + $0x30] sm:$0xf]
    %v2537 = vld [vmem:[%s2523 + $0x34] sm:$0xf]
    %v2538 = vld [vmem:[%s2523 + $0x38] sm:$0xf]
    %v2539 = vld [vmem:[%s2523 + $0x3c] sm:$0xf]
    %v2540 = vld [vmem:[%s2523 + $0x40] sm:$0xf]
    %v2541 = vld [vmem:[%s2523 + $0x44] sm:$0xf]
    %v2542 = vld [vmem:[%s2523 + $0x48] sm:$0xf]
    %v2543 = vld [vmem:[%s2523 + $0x4c] sm:$0xf]
    %v2544 = vld [vmem:[%s2523 + $0x50] sm:$0xf]
    %v2545 = vld [vmem:[%s2523 + $0x54] sm:$0xf]
    %v2546 = vld [vmem:[%s2523 + $0x58] sm:$0xf]
    %v2547 = vld [vmem:[%s2523 + $0x5c] sm:$0xf]
    %v2548 = vld [vmem:[%s2523 + $0x60] sm:$0xf]
    %v2549 = vld [vmem:[%s2523 + $0x64] sm:$0xf]
    %v2550 = vld [vmem:[%s2523 + $0x68] sm:$0xf]
    %v2551 = vld [vmem:[%s2523 + $0x6c] sm:$0xf]
    %v2552 = vld [vmem:[%s2523 + $0x70] sm:$0xf]
    %v2553 = vld [vmem:[%s2523 + $0x74] sm:$0xf]
    %v2554 = vld [vmem:[%s2523 + $0x78] sm:$0xf]
    %v2555 = vld [vmem:[%s2523 + $0x7c] sm:$0xf]
    %v2556 = vld [vmem:[%s2523 + $0x80] sm:$0xf]
    %v2557 = vld [vmem:[%s2523 + $0x84] sm:$0xf]
    %v2558 = vld [vmem:[%s2523 + $0x88] sm:$0xf]
    %v2559 = vld [vmem:[%s2523 + $0x8c] sm:$0xf]
    %v2560 = vld [vmem:[%s2523 + $0x90] sm:$0xf]
    %v2561 = vld [vmem:[%s2523 + $0x94] sm:$0xf]
    %v2562 = vld [vmem:[%s2523 + $0x98] sm:$0xf]
    %v2563 = vld [vmem:[%s2523 + $0x9c] sm:$0xf]
    %v2564 = vld [vmem:[%s2523 + $0xa0] sm:$0xf]
    %v2565 = vld [vmem:[%s2523 + $0xa4] sm:$0xf]
    %v2566 = vld [vmem:[%s2523 + $0xa8] sm:$0xf]
    %v2567 = vld [vmem:[%s2523 + $0xac] sm:$0xf]
    %v2568 = vld [vmem:[%s2523 + $0xb0] sm:$0xf]
    %v2569 = vld [vmem:[%s2523 + $0xb4] sm:$0xf]
    %v2570 = vld [vmem:[%s2523 + $0xb8] sm:$0xf]
    %v2571 = vld [vmem:[%s2523 + $0xbc] sm:$0xf]
    %v2572 = vld [vmem:[%s2523 + $0xc0] sm:$0xf]
    %v2573 = vld [vmem:[%s2523 + $0xc4] sm:$0xf]
    %v2574 = vld [vmem:[%s2523 + $0xc8] sm:$0xf]
    %v2575 = vld [vmem:[%s2523 + $0xcc] sm:$0xf]
    %v2576 = vld [vmem:[%s2523 + $0xd0] sm:$0xf]
    %v2577 = vld [vmem:[%s2523 + $0xd4] sm:$0xf]
    %v2578 = vld [vmem:[%s2523 + $0xd8] sm:$0xf]
    %v2579 = vld [vmem:[%s2523 + $0xdc] sm:$0xf]
    %v2580 = vld [vmem:[%s2523 + $0xe0] sm:$0xf]
    %v2581 = vld [vmem:[%s2523 + $0xe4] sm:$0xf]
    %v2582 = vld [vmem:[%s2523 + $0xe8] sm:$0xf]
    %v2583 = vld [vmem:[%s2523 + $0xec] sm:$0xf]
    %v2584 = vld [vmem:[%s2523 + $0xf0] sm:$0xf]
    %v2585 = vld [vmem:[%s2523 + $0xf4] sm:$0xf]
    %v2586 = vld [vmem:[%s2523 + $0xf8] sm:$0xf]
    %v2587 = vld [vmem:[%s2523 + $0xfc] sm:$0xf]
    %v2588 = vld [vmem:[%s2523 + $0x100] sm:$0xf]
    %v2589 = vld [vmem:[%s2523 + $0x104] sm:$0xf]
    %v2590 = vld [vmem:[%s2523 + $0x108] sm:$0xf]
    %v2591 = vld [vmem:[%s2523 + $0x10c] sm:$0xf]
    %v2592 = vld [vmem:[%s2523 + $0x110] sm:$0xf]
    %v2593 = vld [vmem:[%s2523 + $0x114] sm:$0xf]
    %v2594 = vld [vmem:[%s2523 + $0x118] sm:$0xf]
    %v2595 = vld [vmem:[%s2523 + $0x11c] sm:$0xf]
    %v2596 = vld [vmem:[%s2523 + $0x120] sm:$0xf]
    %v2597 = vld [vmem:[%s2523 + $0x124] sm:$0xf]
    %v2598 = vld [vmem:[%s2523 + $0x128] sm:$0xf]
    %v2599 = vld [vmem:[%s2523 + $0x12c] sm:$0xf]
    %v2600 = vld [vmem:[%s2523 + $0x130] sm:$0xf]
    %v2601 = vld [vmem:[%s2523 + $0x134] sm:$0xf]
    %v2602 = vld [vmem:[%s2523 + $0x138] sm:$0xf]
    %v2603 = vld [vmem:[%s2523 + $0x13c] sm:$0xf]
    %v2604 = vld [vmem:[%s2523 + $0x140] sm:$0xf]
    %v2605 = vld [vmem:[%s2523 + $0x144] sm:$0xf]
    %v2606 = vld [vmem:[%s2523 + $0x148] sm:$0xf]
    %v2607 = vld [vmem:[%s2523 + $0x14c] sm:$0xf]
    %v2608 = vld [vmem:[%s2523 + $0x150] sm:$0xf]
    %v2609 = vld [vmem:[%s2523 + $0x154] sm:$0xf]
    %v2610 = vld [vmem:[%s2523 + $0x158] sm:$0xf]
    %v2611 = vld [vmem:[%s2523 + $0x15c] sm:$0xf]
    %v2612 = vld [vmem:[%s2523 + $0x160] sm:$0xf]
    %v2613 = vld [vmem:[%s2523 + $0x164] sm:$0xf]
    %v2614 = vld [vmem:[%s2523 + $0x168] sm:$0xf]
    %v2615 = vld [vmem:[%s2523 + $0x16c] sm:$0xf]
    %v2616 = vld [vmem:[%s2523 + $0x170] sm:$0xf]
    %v2617 = vld [vmem:[%s2523 + $0x174] sm:$0xf]
    %v2618 = vld [vmem:[%s2523 + $0x178] sm:$0xf]
    %v2619 = vld [vmem:[%s2523 + $0x17c] sm:$0xf]
    %v2620 = vld [vmem:[%s2523 + $0x180] sm:$0xf]
    %v2621 = vld [vmem:[%s2523 + $0x184] sm:$0xf]
    %v2622 = vld [vmem:[%s2523 + $0x188] sm:$0xf]
    %v2623 = vld [vmem:[%s2523 + $0x18c] sm:$0xf]
    %v2624 = vld [vmem:[%s2523 + $0x190] sm:$0xf]
    %v2625 = vld [vmem:[%s2523 + $0x194] sm:$0xf]
    %v2626 = vld [vmem:[%s2523 + $0x198] sm:$0xf]
    %v2627 = vld [vmem:[%s2523 + $0x19c] sm:$0xf]
    %v2628 = vld [vmem:[%s2523 + $0x1a0] sm:$0xf]
    %v2629 = vld [vmem:[%s2523 + $0x1a4] sm:$0xf]
    %v2630 = vld [vmem:[%s2523 + $0x1a8] sm:$0xf]
    %v2631 = vld [vmem:[%s2523 + $0x1ac] sm:$0xf]
    %v2632 = vld [vmem:[%s2523 + $0x1b0] sm:$0xf]
    %v2633 = vld [vmem:[%s2523 + $0x1b4] sm:$0xf]
    %v2634 = vld [vmem:[%s2523 + $0x1b8] sm:$0xf]
    %v2635 = vld [vmem:[%s2523 + $0x1bc] sm:$0xf]
    %v2636 = vld [vmem:[%s2523 + $0x1c0] sm:$0xf]
    %v2637 = vld [vmem:[%s2523 + $0x1c4] sm:$0xf]
    %v2638 = vld [vmem:[%s2523 + $0x1c8] sm:$0xf]
    %v2639 = vld [vmem:[%s2523 + $0x1cc] sm:$0xf]
    %v2640 = vld [vmem:[%s2523 + $0x1d0] sm:$0xf]
    %v2641 = vld [vmem:[%s2523 + $0x1d4] sm:$0xf]
    %v2642 = vld [vmem:[%s2523 + $0x1d8] sm:$0xf]
    %v2643 = vld [vmem:[%s2523 + $0x1dc] sm:$0xf]
    %v2644 = vld [vmem:[%s2523 + $0x1e0] sm:$0xf]
    %v2645 = vld [vmem:[%s2523 + $0x1e4] sm:$0xf]
    %v2646 = vld [vmem:[%s2523 + $0x1e8] sm:$0xf]
    %v2647 = vld [vmem:[%s2523 + $0x1ec] sm:$0xf]
    %v2648 = vld [vmem:[%s2523 + $0x1f0] sm:$0xf]
    %v2649 = vld [vmem:[%s2523 + $0x1f4] sm:$0xf]
    %v2650 = vld [vmem:[%s2523 + $0x1f8] sm:$0xf]
    %v2651 = vld [vmem:[%s2523 + $0x1fc] sm:$0xf]
    %s2652 = scalar_lea.vmem %s13, 1
    %v2653 = vld [vmem:[%s2652] sm:$0x1]
    %v2655 = vlaneseq
    %v2656 = vshrl.u32 %v2655, 7
    %v2657 = vsub.s32 0, %v2656
    %v2658 = vrot.slane %v2653, %v2657
    %v2788 = vunpack.c.l.b16 %v2524
    %v2789 = vunpack.c.l.b16 %v2525
    %v2790 = vunpack.c.l.b16 %v2526
    %v2791 = vunpack.c.l.b16 %v2527
    %v2792 = vunpack.c.l.b16 %v2528
    %v2793 = vunpack.c.l.b16 %v2529
    %v2794 = vunpack.c.l.b16 %v2530
    %v2795 = vunpack.c.l.b16 %v2531
    %v2796 = vunpack.c.l.b16 %v2532
    %v2797 = vunpack.c.l.b16 %v2533
    %v2798 = vunpack.c.l.b16 %v2534
    %v2799 = vunpack.c.l.b16 %v2535
    %v2800 = vunpack.c.l.b16 %v2536
    %v2801 = vunpack.c.l.b16 %v2537
    %v2802 = vunpack.c.l.b16 %v2538
    %v2803 = vunpack.c.l.b16 %v2539
    %v2804 = vunpack.c.l.b16 %v2540
    %v2805 = vunpack.c.l.b16 %v2541
    %v2806 = vunpack.c.l.b16 %v2542
    %v2807 = vunpack.c.l.b16 %v2543
    %v2808 = vunpack.c.l.b16 %v2544
    %v2809 = vunpack.c.l.b16 %v2545
    %v2810 = vunpack.c.l.b16 %v2546
    %v2811 = vunpack.c.l.b16 %v2547
    %v2812 = vunpack.c.l.b16 %v2548
    %v2813 = vunpack.c.l.b16 %v2549
    %v2814 = vunpack.c.l.b16 %v2550
    %v2815 = vunpack.c.l.b16 %v2551
    %v2816 = vunpack.c.l.b16 %v2552
    %v2817 = vunpack.c.l.b16 %v2553
    %v2818 = vunpack.c.l.b16 %v2554
    %v2819 = vunpack.c.l.b16 %v2555
    %v2820 = vunpack.c.l.b16 %v2556
    %v2821 = vunpack.c.l.b16 %v2557
    %v2822 = vunpack.c.l.b16 %v2558
    %v2823 = vunpack.c.l.b16 %v2559
    %v2824 = vunpack.c.l.b16 %v2560
    %v2825 = vunpack.c.l.b16 %v2561
    %v2826 = vunpack.c.l.b16 %v2562
    %v2827 = vunpack.c.l.b16 %v2563
    %v2828 = vunpack.c.l.b16 %v2564
    %v2829 = vunpack.c.l.b16 %v2565
    %v2830 = vunpack.c.l.b16 %v2566
    %v2831 = vunpack.c.l.b16 %v2567
    %v2832 = vunpack.c.l.b16 %v2568
    %v2833 = vunpack.c.l.b16 %v2569
    %v2834 = vunpack.c.l.b16 %v2570
    %v2835 = vunpack.c.l.b16 %v2571
    %v2836 = vunpack.c.l.b16 %v2572
    %v2837 = vunpack.c.l.b16 %v2573
    %v2838 = vunpack.c.l.b16 %v2574
    %v2839 = vunpack.c.l.b16 %v2575
    %v2840 = vunpack.c.l.b16 %v2576
    %v2841 = vunpack.c.l.b16 %v2577
    %v2842 = vunpack.c.l.b16 %v2578
    %v2843 = vunpack.c.l.b16 %v2579
    %v2844 = vunpack.c.l.b16 %v2580
    %v2845 = vunpack.c.l.b16 %v2581
    %v2846 = vunpack.c.l.b16 %v2582
    %v2847 = vunpack.c.l.b16 %v2583
    %v2848 = vunpack.c.l.b16 %v2584
    %v2849 = vunpack.c.l.b16 %v2585
    %v2850 = vunpack.c.l.b16 %v2586
    %v2851 = vunpack.c.l.b16 %v2587
    %v2852 = vunpack.c.l.b16 %v2588
    %v2853 = vunpack.c.l.b16 %v2589
    %v2854 = vunpack.c.l.b16 %v2590
    %v2855 = vunpack.c.l.b16 %v2591
    %v2856 = vunpack.c.l.b16 %v2592
    %v2857 = vunpack.c.l.b16 %v2593
    %v2858 = vunpack.c.l.b16 %v2594
    %v2859 = vunpack.c.l.b16 %v2595
    %v2860 = vunpack.c.l.b16 %v2596
    %v2861 = vunpack.c.l.b16 %v2597
    %v2862 = vunpack.c.l.b16 %v2598
    %v2863 = vunpack.c.l.b16 %v2599
    %v2864 = vunpack.c.l.b16 %v2600
    %v2865 = vunpack.c.l.b16 %v2601
    %v2866 = vunpack.c.l.b16 %v2602
    %v2867 = vunpack.c.l.b16 %v2603
    %v2868 = vunpack.c.l.b16 %v2604
    %v2869 = vunpack.c.l.b16 %v2605
    %v2870 = vunpack.c.l.b16 %v2606
    %v2871 = vunpack.c.l.b16 %v2607
    %v2872 = vunpack.c.l.b16 %v2608
    %v2873 = vunpack.c.l.b16 %v2609
    %v2874 = vunpack.c.l.b16 %v2610
    %v2875 = vunpack.c.l.b16 %v2611
    %v2876 = vunpack.c.l.b16 %v2612
    %v2877 = vunpack.c.l.b16 %v2613
    %v2878 = vunpack.c.l.b16 %v2614
    %v2879 = vunpack.c.l.b16 %v2615
    %v2880 = vunpack.c.l.b16 %v2616
    %v2881 = vunpack.c.l.b16 %v2617
    %v2882 = vunpack.c.l.b16 %v2618
    %v2883 = vunpack.c.l.b16 %v2619
    %v2884 = vunpack.c.l.b16 %v2620
    %v2885 = vunpack.c.l.b16 %v2621
    %v2886 = vunpack.c.l.b16 %v2622
    %v2887 = vunpack.c.l.b16 %v2623
    %v2888 = vunpack.c.l.b16 %v2624
    %v2889 = vunpack.c.l.b16 %v2625
    %v2890 = vunpack.c.l.b16 %v2626
    %v2891 = vunpack.c.l.b16 %v2627
    %v2892 = vunpack.c.l.b16 %v2628
    %v2893 = vunpack.c.l.b16 %v2629
    %v2894 = vunpack.c.l.b16 %v2630
    %v2895 = vunpack.c.l.b16 %v2631
    %v2896 = vunpack.c.l.b16 %v2632
    %v2897 = vunpack.c.l.b16 %v2633
    %v2898 = vunpack.c.l.b16 %v2634
    %v2899 = vunpack.c.l.b16 %v2635
    %v2900 = vunpack.c.l.b16 %v2636
    %v2901 = vunpack.c.l.b16 %v2637
    %v2902 = vunpack.c.l.b16 %v2638
    %v2903 = vunpack.c.l.b16 %v2639
    %v2904 = vunpack.c.l.b16 %v2640
    %v2905 = vunpack.c.l.b16 %v2641
    %v2906 = vunpack.c.l.b16 %v2642
    %v2907 = vunpack.c.l.b16 %v2643
    %v2908 = vunpack.c.l.b16 %v2644
    %v2909 = vunpack.c.l.b16 %v2645
    %v2910 = vunpack.c.l.b16 %v2646
    %v2911 = vunpack.c.l.b16 %v2647
    %v2912 = vunpack.c.l.b16 %v2648
    %v2913 = vunpack.c.l.b16 %v2649
    %v2914 = vunpack.c.l.b16 %v2650
    %v2915 = vunpack.c.l.b16 %v2651
    %v2916 = vpack.c.b16 %v2789, %v2788
    %v2917 = vpack.c.b16 %v2791, %v2790
    %v2918 = vpack.c.b16 %v2793, %v2792
    %v2919 = vpack.c.b16 %v2795, %v2794
    %v2920 = vpack.c.b16 %v2797, %v2796
    %v2921 = vpack.c.b16 %v2799, %v2798
    %v2922 = vpack.c.b16 %v2801, %v2800
    %v2923 = vpack.c.b16 %v2803, %v2802
    %v2924 = vpack.c.b16 %v2805, %v2804
    %v2925 = vpack.c.b16 %v2807, %v2806
    %v2926 = vpack.c.b16 %v2809, %v2808
    %v2927 = vpack.c.b16 %v2811, %v2810
    %v2928 = vpack.c.b16 %v2813, %v2812
    %v2929 = vpack.c.b16 %v2815, %v2814
    %v2930 = vpack.c.b16 %v2817, %v2816
    %v2931 = vpack.c.b16 %v2819, %v2818
    %v2932 = vpack.c.b16 %v2821, %v2820
    %v2933 = vpack.c.b16 %v2823, %v2822
    %v2934 = vpack.c.b16 %v2825, %v2824
    %v2935 = vpack.c.b16 %v2827, %v2826
    %v2936 = vpack.c.b16 %v2829, %v2828
    %v2937 = vpack.c.b16 %v2831, %v2830
    %v2938 = vpack.c.b16 %v2833, %v2832
    %v2939 = vpack.c.b16 %v2835, %v2834
    %v2940 = vpack.c.b16 %v2837, %v2836
    %v2941 = vpack.c.b16 %v2839, %v2838
    %v2942 = vpack.c.b16 %v2841, %v2840
    %v2943 = vpack.c.b16 %v2843, %v2842
    %v2944 = vpack.c.b16 %v2845, %v2844
    %v2945 = vpack.c.b16 %v2847, %v2846
    %v2946 = vpack.c.b16 %v2849, %v2848
    %v2947 = vpack.c.b16 %v2851, %v2850
    %v2948 = vpack.c.b16 %v2853, %v2852
    %v2949 = vpack.c.b16 %v2855, %v2854
    %v2950 = vpack.c.b16 %v2857, %v2856
    %v2951 = vpack.c.b16 %v2859, %v2858
    %v2952 = vpack.c.b16 %v2861, %v2860
    %v2953 = vpack.c.b16 %v2863, %v2862
    %v2954 = vpack.c.b16 %v2865, %v2864
    %v2955 = vpack.c.b16 %v2867, %v2866
    %v2956 = vpack.c.b16 %v2869, %v2868
    %v2957 = vpack.c.b16 %v2871, %v2870
    %v2958 = vpack.c.b16 %v2873, %v2872
    %v2959 = vpack.c.b16 %v2875, %v2874
    %v2960 = vpack.c.b16 %v2877, %v2876
    %v2961 = vpack.c.b16 %v2879, %v2878
    %v2962 = vpack.c.b16 %v2881, %v2880
    %v2963 = vpack.c.b16 %v2883, %v2882
    %v2964 = vpack.c.b16 %v2885, %v2884
    %v2965 = vpack.c.b16 %v2887, %v2886
    %v2966 = vpack.c.b16 %v2889, %v2888
    %v2967 = vpack.c.b16 %v2891, %v2890
    %v2968 = vpack.c.b16 %v2893, %v2892
    %v2969 = vpack.c.b16 %v2895, %v2894
    %v2970 = vpack.c.b16 %v2897, %v2896
    %v2971 = vpack.c.b16 %v2899, %v2898
    %v2972 = vpack.c.b16 %v2901, %v2900
    %v2973 = vpack.c.b16 %v2903, %v2902
    %v2974 = vpack.c.b16 %v2905, %v2904
    %v2975 = vpack.c.b16 %v2907, %v2906
    %v2976 = vpack.c.b16 %v2909, %v2908
    %v2977 = vpack.c.b16 %v2911, %v2910
    %v2978 = vpack.c.b16 %v2913, %v2912
    %v2979 = vpack.c.b16 %v2915, %v2914
    %3044 = vmatprep.subr.bf16.mxu0 0
    %3045 = vmatpush1.bf16.msra.mxu0 %v2923
    %3046 = vmatprep.subr.bf16.mxu0 0
    %3047 = vmatpush1.bf16.msra.mxu0 %v2922
    %3048 = vmatprep.subr.bf16.mxu0 0
    %3049 = vmatpush1.bf16.msra.mxu0 %v2921
    %3050 = vmatprep.subr.bf16.mxu0 0
    %3051 = vmatpush1.bf16.msra.mxu0 %v2920
    %3052 = vmatprep.subr.bf16.mxu0 0
    %3053 = vmatpush1.bf16.msra.mxu0 %v2919
    %3054 = vmatprep.subr.bf16.mxu0 0
    %3055 = vmatpush1.bf16.msra.mxu0 %v2918
    %3056 = vmatprep.subr.bf16.mxu0 0
    %3057 = vmatpush1.bf16.msra.mxu0 %v2917
    %3058 = vmatprep.subr.bf16.mxu0 0
    %3059 = vmatpush1.bf16.msra.mxu0 %v2916
    %3060 = vmatprep.subr.bf16.mxu0 0
    %3061 = vmatpush2.bf16.msra.mxu0 %v2931
    %3062 = vmatprep.subr.bf16.mxu0 0
    %3063 = vmatpush2.bf16.msra.mxu0 %v2930
    %3064 = vmatprep.subr.bf16.mxu0 0
    %3065 = vmatpush2.bf16.msra.mxu0 %v2929
    %3066 = vmatprep.subr.bf16.mxu0 0
    %3067 = vmatpush2.bf16.msra.mxu0 %v2928
    %3068 = vmatprep.subr.bf16.mxu0 0
    %3069 = vmatpush2.bf16.msra.mxu0 %v2927
    %3070 = vmatprep.subr.bf16.mxu0 0
    %3071 = vmatpush2.bf16.msra.mxu0 %v2926
    %3072 = vmatprep.subr.bf16.mxu0 0
    %3073 = vmatpush2.bf16.msra.mxu0 %v2925
    %3074 = vmatprep.subr.bf16.mxu0 0
    %3075 = vmatpush2.bf16.msra.mxu0 %v2924
    %3076 = vmatprep.mubr.bf16.mxu0 %v2516
    %3077 = vmatmul.mubr.bf16.gmra.mxu0 %v2515
    %v3078 = vpop.f32.mrf.mxu0
    %v3079 = vadd.f32 %v2658, %v3078
    %v3080 = vpop.f32.mrf.mxu0
    %v3081 = vpop.f32.mrf.mxu0
    %v3082 = vadd.f32 %v2658, %v3081
    %v3083 = vpop.f32.mrf.mxu0
    %3084 = vdwg.mxu0
    %3085 = vmatprep.subr.bf16.mxu0 0
    %3086 = vmatpush1.bf16.msra.mxu0 %v2939
    %3087 = vmatprep.subr.bf16.mxu0 0
    %3088 = vmatpush1.bf16.msra.mxu0 %v2938
    %3089 = vmatprep.subr.bf16.mxu0 0
    %3090 = vmatpush1.bf16.msra.mxu0 %v2937
    %3091 = vmatprep.subr.bf16.mxu0 0
    %3092 = vmatpush1.bf16.msra.mxu0 %v2936
    %3093 = vmatprep.subr.bf16.mxu0 0
    %3094 = vmatpush1.bf16.msra.mxu0 %v2935
    %3095 = vmatprep.subr.bf16.mxu0 0
    %3096 = vmatpush1.bf16.msra.mxu0 %v2934
    %3097 = vmatprep.subr.bf16.mxu0 0
    %3098 = vmatpush1.bf16.msra.mxu0 %v2933
    %3099 = vmatprep.subr.bf16.mxu0 0
    %3100 = vmatpush1.bf16.msra.mxu0 %v2932
    %3101 = vmatprep.subr.bf16.mxu0 0
    %3102 = vmatpush2.bf16.msra.mxu0 %v2947
    %3103 = vmatprep.subr.bf16.mxu0 0
    %3104 = vmatpush2.bf16.msra.mxu0 %v2946
    %3105 = vmatprep.subr.bf16.mxu0 0
    %3106 = vmatpush2.bf16.msra.mxu0 %v2945
    %3107 = vmatprep.subr.bf16.mxu0 0
    %3108 = vmatpush2.bf16.msra.mxu0 %v2944
    %3109 = vmatprep.subr.bf16.mxu0 0
    %3110 = vmatpush2.bf16.msra.mxu0 %v2943
    %3111 = vmatprep.subr.bf16.mxu0 0
    %3112 = vmatpush2.bf16.msra.mxu0 %v2942
    %3113 = vmatprep.subr.bf16.mxu0 0
    %3114 = vmatpush2.bf16.msra.mxu0 %v2941
    %3115 = vmatprep.subr.bf16.mxu0 0
    %3116 = vmatpush2.bf16.msra.mxu0 %v2940
    %3117 = vmatprep.mubr.bf16.mxu0 %v2518
    %3118 = vmatmul.mubr.bf16.gmra.mxu0 %v2517
    %v3119 = vpop.f32.mrf.mxu0
    %v3120 = vadd.f32 %v3079, %v3119
    %v3121 = vpop.f32.mrf.mxu0
    %v3122 = vpop.f32.mrf.mxu0
    %v3123 = vadd.f32 %v3082, %v3122
    %v3124 = vpop.f32.mrf.mxu0
    %3125 = vdwg.mxu0
    %3126 = vmatprep.subr.bf16.mxu0 0
    %3127 = vmatpush1.bf16.msra.mxu0 %v2955
    %3128 = vmatprep.subr.bf16.mxu0 0
    %3129 = vmatpush1.bf16.msra.mxu0 %v2954
    %3130 = vmatprep.subr.bf16.mxu0 0
    %3131 = vmatpush1.bf16.msra.mxu0 %v2953
    %3132 = vmatprep.subr.bf16.mxu0 0
    %3133 = vmatpush1.bf16.msra.mxu0 %v2952
    %3134 = vmatprep.subr.bf16.mxu0 0
    %3135 = vmatpush1.bf16.msra.mxu0 %v2951
    %3136 = vmatprep.subr.bf16.mxu0 0
    %3137 = vmatpush1.bf16.msra.mxu0 %v2950
    %3138 = vmatprep.subr.bf16.mxu0 0
    %3139 = vmatpush1.bf16.msra.mxu0 %v2949
    %3140 = vmatprep.subr.bf16.mxu0 0
    %3141 = vmatpush1.bf16.msra.mxu0 %v2948
    %3142 = vmatprep.subr.bf16.mxu0 0
    %3143 = vmatpush2.bf16.msra.mxu0 %v2963
    %3144 = vmatprep.subr.bf16.mxu0 0
    %3145 = vmatpush2.bf16.msra.mxu0 %v2962
    %3146 = vmatprep.subr.bf16.mxu0 0
    %3147 = vmatpush2.bf16.msra.mxu0 %v2961
    %3148 = vmatprep.subr.bf16.mxu0 0
    %3149 = vmatpush2.bf16.msra.mxu0 %v2960
    %3150 = vmatprep.subr.bf16.mxu0 0
    %3151 = vmatpush2.bf16.msra.mxu0 %v2959
    %3152 = vmatprep.subr.bf16.mxu0 0
    %3153 = vmatpush2.bf16.msra.mxu0 %v2958
    %3154 = vmatprep.subr.bf16.mxu0 0
    %3155 = vmatpush2.bf16.msra.mxu0 %v2957
    %3156 = vmatprep.subr.bf16.mxu0 0
    %3157 = vmatpush2.bf16.msra.mxu0 %v2956
    %3158 = vmatprep.mubr.bf16.mxu0 %v2520
    %3159 = vmatmul.mubr.bf16.gmra.mxu0 %v2519
    %v3160 = vpop.f32.mrf.mxu0
    %v3161 = vadd.f32 %v3120, %v3160
    %v3162 = vpop.f32.mrf.mxu0
    %v3163 = vpop.f32.mrf.mxu0
    %v3164 = vadd.f32 %v3123, %v3163
    %v3165 = vpop.f32.mrf.mxu0
    %3166 = vdwg.mxu0
    %3167 = vmatprep.subr.bf16.mxu0 0
    %3168 = vmatpush1.bf16.msra.mxu0 %v2971
    %3169 = vmatprep.subr.bf16.mxu0 0
    %3170 = vmatpush1.bf16.msra.mxu0 %v2970
    %3171 = vmatprep.subr.bf16.mxu0 0
    %3172 = vmatpush1.bf16.msra.mxu0 %v2969
    %3173 = vmatprep.subr.bf16.mxu0 0
    %3174 = vmatpush1.bf16.msra.mxu0 %v2968
    %3175 = vmatprep.subr.bf16.mxu0 0
    %3176 = vmatpush1.bf16.msra.mxu0 %v2967
    %3177 = vmatprep.subr.bf16.mxu0 0
    %3178 = vmatpush1.bf16.msra.mxu0 %v2966
    %3179 = vmatprep.subr.bf16.mxu0 0
    %3180 = vmatpush1.bf16.msra.mxu0 %v2965
    %3181 = vmatprep.subr.bf16.mxu0 0
    %3182 = vmatpush1.bf16.msra.mxu0 %v2964
    %3183 = vmatprep.subr.bf16.mxu0 0
    %3184 = vmatpush2.bf16.msra.mxu0 %v2979
    %3185 = vmatprep.subr.bf16.mxu0 0
    %3186 = vmatpush2.bf16.msra.mxu0 %v2978
    %3187 = vmatprep.subr.bf16.mxu0 0
    %3188 = vmatpush2.bf16.msra.mxu0 %v2977
    %3189 = vmatprep.subr.bf16.mxu0 0
    %3190 = vmatpush2.bf16.msra.mxu0 %v2976
    %3191 = vmatprep.subr.bf16.mxu0 0
    %3192 = vmatpush2.bf16.msra.mxu0 %v2975
    %3193 = vmatprep.subr.bf16.mxu0 0
    %3194 = vmatpush2.bf16.msra.mxu0 %v2974
    %3195 = vmatprep.subr.bf16.mxu0 0
    %3196 = vmatpush2.bf16.msra.mxu0 %v2973
    %3197 = vmatprep.subr.bf16.mxu0 0
    %3198 = vmatpush2.bf16.msra.mxu0 %v2972
    %3199 = vmatprep.mubr.bf16.mxu0 %v2522
    %3200 = vmatmul.mubr.bf16.gmra.mxu0 %v2521
    %v3201 = vpop.f32.mrf.mxu0
    %v3202 = vadd.f32 %v3161, %v3201
    %v3203 = vpop.f32.mrf.mxu0
    %v3204 = vpop.f32.mrf.mxu0
    %v3205 = vadd.f32 %v3164, %v3204
    %v3206 = vpop.f32.mrf.mxu0
    %3207 = vdwg.mxu0
    %v3208 = vadd.f32 %v2181, %v3202
    %v3209 = vadd.f32 %v2182, %v3205
    %s3210 = scalar_lea.vmem %s16, 1
    %v3211 = vld [vmem:[%s3210] sm:$0x1]
    %s3212 = scalar_lea.vmem %s17, 1
    %v3213 = vld [vmem:[%s3212] sm:$0x1]
    %v3214 = vsel %vm174, %v3208, 0.0
    %3215 = vadd.xlane.f32.xlu0 %v3214
    %v3216 = vpop.xlane.xlu0 %3215
    %v3217 = vsel %vm174, %v3209, 0.0
    %3218 = vadd.xlane.f32.xlu0 %v3217
    %v3219 = vpop.xlane.xlu0 %3218
    %v3220 = vmul.f32 %v3216, %v663
    %v3221 = vmul.f32 %v3219, %v663
    %v3222 = vsub.f32 %v3208, %v3220
    %v3223 = vsub.f32 %v3209, %v3221
    %v3224 = vmul.f32 %v3222, %v3222
    %v3225 = vmul.f32 %v3223, %v3223
    %v3226 = vsel %vm174, %v3224, 0.0
    %3227 = vadd.xlane.f32.xlu0 %v3226
    %v3228 = vpop.xlane.xlu0 %3227
    %v3229 = vsel %vm174, %v3225, 0.0
    %3230 = vadd.xlane.f32.xlu0 %v3229
    %v3231 = vpop.xlane.xlu0 %3230
    %v3232 = vmul.f32 %v3228, %v663
    %v3233 = vmul.f32 %v3231, %v663
    %v3234 = vadd.f32 %v3232, 1e-05
    %v3235 = vadd.f32 %v3233, 1e-05
    %v3236 = vrsqrt.pop %v3234
    %v3237 = vrsqrt.pop %v3235
    %v3238 = vmul.f32 %v3222, %v3236
    %v3239 = vmul.f32 %v3223, %v3237
    %v3241 = vlaneseq
    %v3242 = vshrl.u32 %v3241, 7
    %v3243 = vsub.s32 0, %v3242
    %v3244 = vrot.slane %v3211, %v3243
    %v3246 = vmul.f32 %v3238, %v3244
    %v3247 = vmul.f32 %v3239, %v3244
    %v3249 = vlaneseq
    %v3250 = vshrl.u32 %v3249, 7
    %v3251 = vsub.s32 0, %v3250
    %v3252 = vrot.slane %v3213, %v3251
    %v3254 = vadd.f32 %v3246, %v3252
    %v3255 = vadd.f32 %v3247, %v3252
    %v3256 = vpack.c.bf16 %v3255, %v3254
    %v3257 = vld [vmem:[%s18] sm:$0xff]
    %v3258 = vld [vmem:[%s18 + $0x8] sm:$0xff]
    %v3259 = vld [vmem:[%s18 + $0x10] sm:$0xff]
    %v3260 = vld [vmem:[%s18 + $0x18] sm:$0xff]
    %v3265 = vunpack.c.l.b16 %v3257
    %v3266 = vunpack.c.h.b16 %v3257
    %v3267 = vunpack.c.l.b16 %v3258
    %v3268 = vunpack.c.h.b16 %v3258
    %v3269 = vunpack.c.l.b16 %v3259
    %v3270 = vunpack.c.h.b16 %v3259
    %v3271 = vunpack.c.l.b16 %v3260
    %v3272 = vunpack.c.h.b16 %v3260
    %v3273 = vpack.c.b16 %v3267, %v3265
    %v3274 = vpack.c.b16 %v3268, %v3266
    %v3275 = vpack.c.b16 %v3271, %v3269
    %v3276 = vpack.c.b16 %v3272, %v3270
    %v3282 = vsel %vm174, %v3256, 0
    %3284 = vmatprep.subr.bf16.mxu0 0
    %3285 = vmatpush1.bf16.msra.mxu0 0
    %3286 = vmatprep.subr.bf16.mxu0 0
    %3287 = vmatpush1.bf16.msra.mxu0 0
    %3288 = vmatprep.subr.bf16.mxu0 0
    %3289 = vmatpush1.bf16.msra.mxu0 0
    %3290 = vmatprep.subr.bf16.mxu0 0
    %3291 = vmatpush1.bf16.msra.mxu0 0
    %3292 = vmatprep.subr.bf16.mxu0 0
    %3293 = vmatpush1.bf16.msra.mxu0 0
    %3294 = vmatprep.subr.bf16.mxu0 0
    %3295 = vmatpush1.bf16.msra.mxu0 0
    %3296 = vmatprep.subr.bf16.mxu0 %v3276
    %3297 = vmatpush1.bf16.msra.mxu0 %v3275
    %3298 = vmatprep.subr.bf16.mxu0 %v3274
    %3299 = vmatpush1.bf16.msra.mxu0 %v3273
    %3300 = vmatprep.subr.bf16.mxu0 0
    %3301 = vmatpush2.bf16.msra.mxu0 0
    %3302 = vmatprep.subr.bf16.mxu0 0
    %3303 = vmatpush2.bf16.msra.mxu0 0
    %3304 = vmatprep.subr.bf16.mxu0 0
    %3305 = vmatpush2.bf16.msra.mxu0 0
    %3306 = vmatprep.subr.bf16.mxu0 0
    %3307 = vmatpush2.bf16.msra.mxu0 0
    %3308 = vmatprep.subr.bf16.mxu0 0
    %3309 = vmatpush2.bf16.msra.mxu0 0
    %3310 = vmatprep.subr.bf16.mxu0 0
    %3311 = vmatpush2.bf16.msra.mxu0 0
    %3312 = vmatprep.subr.bf16.mxu0 0
    %3313 = vmatpush2.bf16.msra.mxu0 0
    %3314 = vmatprep.subr.bf16.mxu0 0
    %3315 = vmatpush2.bf16.msra.mxu0 0
    %3316 = vmatprep.mubr.bf16.mxu0 0
    %3317 = vmatmul.mubr.bf16.gmra.mxu0 %v3282
    %v3318 = vpop.f32.mrf.mxu0
    %v3319 = vadd.f32 0.0, %v3318
    %v3320 = vpop.f32.mrf.mxu0
    %v3321 = vadd.f32 0.0, %v3320
    %v3322 = vpop.f32.mrf.mxu0
    %v3323 = vadd.f32 0.0, %v3322
    %v3324 = vpop.f32.mrf.mxu0
    %v3325 = vadd.f32 0.0, %v3324
    %3326 = vdwg.mxu0
    %v3327 = vld [vmem:[%s19] sm:$0xff]
    %v3328 = vld [vmem:[%s19 + $0x8] sm:$0xff]
    %v3329 = vld [vmem:[%s19 + $0x10] sm:$0xff]
    %v3330 = vld [vmem:[%s19 + $0x18] sm:$0xff]
    %v3331 = vmul.f32 %v3319, %v3327
    %v3332 = vmul.f32 %v3321, %v3328
    %v3333 = vmul.f32 %v3323, %v3329
    %v3334 = vmul.f32 %v3325, %v3330
    %v3335 = vrot.slane %v3331, 4
    %v3336 = vadd.f32 %v3331, %v3335
    %v3337 = vrot.slane %v3336, 2
    %v3338 = vadd.f32 %v3336, %v3337
    %v3339 = vrot.slane %v3338, 1
    %v3340 = vadd.f32 %v3338, %v3339
    %v3341 = vrot.slane %v3332, 4
    %v3342 = vadd.f32 %v3332, %v3341
    %v3343 = vrot.slane %v3342, 2
    %v3344 = vadd.f32 %v3342, %v3343
    %v3345 = vrot.slane %v3344, 1
    %v3346 = vadd.f32 %v3344, %v3345
    %v3347 = vrot.slane %v3333, 4
    %v3348 = vadd.f32 %v3333, %v3347
    %v3349 = vrot.slane %v3348, 2
    %v3350 = vadd.f32 %v3348, %v3349
    %v3351 = vrot.slane %v3350, 1
    %v3352 = vadd.f32 %v3350, %v3351
    %v3353 = vrot.slane %v3334, 4
    %v3354 = vadd.f32 %v3334, %v3353
    %v3355 = vrot.slane %v3354, 2
    %v3356 = vadd.f32 %v3354, %v3355
    %v3357 = vrot.slane %v3356, 1
    %v3358 = vadd.f32 %v3356, %v3357
    %v3359 = vld [vmem:[%s20] sm:$0xff]
    %v3360 = vld [vmem:[%s20 + $0x8] sm:$0xff]
    %v3361 = vld [vmem:[%s20 + $0x10] sm:$0xff]
    %v3362 = vld [vmem:[%s20 + $0x18] sm:$0xff]
    %v3363 = vld [vmem:[%s20 + $0x20] sm:$0xff]
    %v3364 = vld [vmem:[%s20 + $0x28] sm:$0xff]
    %v3365 = vld [vmem:[%s20 + $0x30] sm:$0xff]
    %v3366 = vld [vmem:[%s20 + $0x38] sm:$0xff]
    %v3367 = vld [vmem:[%s20 + $0x40] sm:$0xff]
    %v3368 = vld [vmem:[%s20 + $0x48] sm:$0xff]
    %v3369 = vld [vmem:[%s20 + $0x50] sm:$0xff]
    %v3370 = vld [vmem:[%s20 + $0x58] sm:$0xff]
    %v3371 = vld [vmem:[%s20 + $0x60] sm:$0xff]
    %v3372 = vld [vmem:[%s20 + $0x68] sm:$0xff]
    %v3373 = vld [vmem:[%s20 + $0x70] sm:$0xff]
    %v3374 = vld [vmem:[%s20 + $0x78] sm:$0xff]
    %v3375 = vld [vmem:[%s20 + $0x80] sm:$0xff]
    %v3376 = vld [vmem:[%s20 + $0x88] sm:$0xff]
    %v3377 = vld [vmem:[%s20 + $0x90] sm:$0xff]
    %v3378 = vld [vmem:[%s20 + $0x98] sm:$0xff]
    %v3379 = vld [vmem:[%s20 + $0xa0] sm:$0xff]
    %v3380 = vld [vmem:[%s20 + $0xa8] sm:$0xff]
    %v3381 = vld [vmem:[%s20 + $0xb0] sm:$0xff]
    %v3382 = vld [vmem:[%s20 + $0xb8] sm:$0xff]
    %v3383 = vld [vmem:[%s20 + $0xc0] sm:$0xff]
    %v3384 = vld [vmem:[%s20 + $0xc8] sm:$0xff]
    %v3385 = vld [vmem:[%s20 + $0xd0] sm:$0xff]
    %v3386 = vld [vmem:[%s20 + $0xd8] sm:$0xff]
    %v3387 = vld [vmem:[%s20 + $0xe0] sm:$0xff]
    %v3388 = vld [vmem:[%s20 + $0xe8] sm:$0xff]
    %v3389 = vld [vmem:[%s20 + $0xf0] sm:$0xff]
    %v3390 = vld [vmem:[%s20 + $0xf8] sm:$0xff]
    %v3391 = vld [vmem:[%s21] sm:$0x1]
    %v3393 = vlaneseq
    %v3394 = vshrl.u32 %v3393, 7
    %v3395 = vsub.s32 0, %v3394
    %v3396 = vrot.slane %v3391, %v3395
    %vm3402 = vcmask 1041409
    %v3403 = vsel %vm3402, %v3352, %v3340
    %v3404 = vsel %vm3402, %v3358, %v3346
    %3407 = vmatprep.subr.mxu0 0.0
    %3408 = vmatpush1.msra.mxu0 %v3374
    %3409 = vmatprep.subr.mxu0 0.0
    %3410 = vmatpush1.msra.mxu0 %v3373
    %3411 = vmatprep.subr.mxu0 0.0
    %3412 = vmatpush1.msra.mxu0 %v3372
    %3413 = vmatprep.subr.mxu0 0.0
    %3414 = vmatpush1.msra.mxu0 %v3371
    %3415 = vmatprep.subr.mxu0 0.0
    %3416 = vmatpush1.msra.mxu0 %v3370
    %3417 = vmatprep.subr.mxu0 0.0
    %3418 = vmatpush1.msra.mxu0 %v3369
    %3419 = vmatprep.subr.mxu0 0.0
    %3420 = vmatpush1.msra.mxu0 %v3368
    %3421 = vmatprep.subr.mxu0 0.0
    %3422 = vmatpush1.msra.mxu0 %v3367
    %3423 = vmatprep.subr.mxu0 0.0
    %3424 = vmatpush1.msra.mxu0 %v3366
    %3425 = vmatprep.subr.mxu0 0.0
    %3426 = vmatpush1.msra.mxu0 %v3365
    %3427 = vmatprep.subr.mxu0 0.0
    %3428 = vmatpush1.msra.mxu0 %v3364
    %3429 = vmatprep.subr.mxu0 0.0
    %3430 = vmatpush1.msra.mxu0 %v3363
    %3431 = vmatprep.subr.mxu0 0.0
    %3432 = vmatpush1.msra.mxu0 %v3362
    %3433 = vmatprep.subr.mxu0 0.0
    %3434 = vmatpush1.msra.mxu0 %v3361
    %3435 = vmatprep.subr.mxu0 0.0
    %3436 = vmatpush1.msra.mxu0 %v3360
    %3437 = vmatprep.subr.mxu0 0.0
    %3438 = vmatpush1.msra.mxu0 %v3359
    %3439 = vmatprep.subr.mxu0 0.0
    %3440 = vmatpush2.msra.mxu0 %v3390
    %3441 = vmatprep.subr.mxu0 0.0
    %3442 = vmatpush2.msra.mxu0 %v3389
    %3443 = vmatprep.subr.mxu0 0.0
    %3444 = vmatpush2.msra.mxu0 %v3388
    %3445 = vmatprep.subr.mxu0 0.0
    %3446 = vmatpush2.msra.mxu0 %v3387
    %3447 = vmatprep.subr.mxu0 0.0
    %3448 = vmatpush2.msra.mxu0 %v3386
    %3449 = vmatprep.subr.mxu0 0.0
    %3450 = vmatpush2.msra.mxu0 %v3385
    %3451 = vmatprep.subr.mxu0 0.0
    %3452 = vmatpush2.msra.mxu0 %v3384
    %3453 = vmatprep.subr.mxu0 0.0
    %3454 = vmatpush2.msra.mxu0 %v3383
    %3455 = vmatprep.subr.mxu0 0.0
    %3456 = vmatpush2.msra.mxu0 %v3382
    %3457 = vmatprep.subr.mxu0 0.0
    %3458 = vmatpush2.msra.mxu0 %v3381
    %3459 = vmatprep.subr.mxu0 0.0
    %3460 = vmatpush2.msra.mxu0 %v3380
    %3461 = vmatprep.subr.mxu0 0.0
    %3462 = vmatpush2.msra.mxu0 %v3379
    %3463 = vmatprep.subr.mxu0 0.0
    %3464 = vmatpush2.msra.mxu0 %v3378
    %3465 = vmatprep.subr.mxu0 0.0
    %3466 = vmatpush2.msra.mxu0 %v3377
    %3467 = vmatprep.subr.mxu0 0.0
    %3468 = vmatpush2.msra.mxu0 %v3376
    %3469 = vmatprep.subr.mxu0 0.0
    %3470 = vmatpush2.msra.mxu0 %v3375
    %3471 = vmatprep.mubr.f32.mxu0 %v3404
    %3472 = vmatmul.mubr.f32.gmra.mxu0 %v3403
    %v3473 = vpop.f32.mrf.mxu0
    %v3474 = vadd.f32 %v3396, %v3473
    %v3475 = vpop.f32.mrf.mxu0
    %3476 = vdwg.mxu0
    %vm3477 = vcmask 254976
    %3478 = vst.msk [vmem:[#allocation2] sm:$0x3] %vm3477, %v3474
    // Predicated region
    $region90: #{forward.1} parent=1 // pred_check
      _
    $region91: #{forward.1} parent=1 // pred_check_branch
      %3480 = sbr.rel (0) target = $region93
    $region92: #{forward.1} parent=1 // pred_region
      %s3482 = ssub.s32 32, 32
      %3483 = vsyncadd [#allocation3], %s3482
      %s3485 = sshll.u32 [#allocation2], 4
      %s3486 = int_to_ptr.vmem [resolvable:$true] %s3485
      %3488 = dma.vmem_to_hbm [thread:$0]  %s3486, 32, %s22, [#allocation3]
    $region93: #{forward.1} parent=1 // pred_fallthru
      _
    // Predicated region
    $region94: #{forward.1} parent=1 // pred_check
      _
    $region95: #{forward.1} parent=1 // pred_check_branch
      %3490 = sbr.rel (0) target = $region97
    $region96: #{forward.1} parent=1 // pred_region
      %3491 = dma.done [#allocation3], 32
    $region97: #{forward.1} parent=1 // pred_fallthru
      _
    %3492 = vsyncpa [#allocation3], 1

</llo_original>
